<compile_context>
chip_gen: v7x
topology: tpu7x:2x2x1
jax: 0.10.0
libtpu: 0.0.40
codegen_flags: <defaults>
</compile_context>

<pallas_src>
import math

import jax
import jax.numpy as jnp
from jax import lax
from jax.experimental import pallas as pl
from jax.experimental.pallas import tpu as pltpu


def _chip_config():
    """Best-effort (usable_vmem_bytes, wide_mxu) for the current TPU generation."""
    kind = ""
    try:
        kind = jax.devices()[0].device_kind.lower()
    except Exception:
        pass
    vmem_cap = None
    try:
        vmem_cap = int(pltpu.get_tpu_info().vmem_capacity_bytes)
    except Exception:
        vmem_cap = None
    if vmem_cap is None:
        # v7x has 64 MiB / TensorCore; v4/v5/v6 parts have 128 MiB.
        vmem_cap = (64 << 20) if ("v7" in kind or not kind) else (128 << 20)
    # 256-wide MXU on v6e / v7x; 128-wide on v5e and earlier.
    wide_mxu = ("v6" in kind) or ("v7" in kind)
    if vmem_cap <= (64 << 20):
        usable = min(vmem_cap - (12 << 20), 52 << 20)   # leave Mosaic-scratch headroom
    else:
        usable = min(vmem_cap - (24 << 20), 104 << 20)
    return max(usable, 32 << 20), wide_mxu


def _make_kernel(D_out, D_in, KK, C_pad, C_out, TP):
    def kernel(coord_ref, x_ref, w_ref, b_ref, out_ref, s_ref):
        # iotas along each image axis; lanes = output pixels
        io = lax.broadcasted_iota(jnp.int32, (D_out, TP), 0).astype(jnp.float32)
        ii = lax.broadcasted_iota(jnp.int32, (D_in, TP), 0).astype(jnp.float32)

        x_bf = x_ref[0]                                   # (C_pad*D_out, D_in) bf16

        # hoisted modulation sigmoid for all KK taps (single EUP pass)
        ml = coord_ref[2 * KK:3 * KK, :]                  # (KK, TP)
        mk_all = pl.reciprocal(1.0 + jnp.exp(-ml), approx=True)

        # fully unrolled tap loop (KK is static) so the scheduler can overlap
        # tap k+1's MXU contraction with tap k's VPU reduce + staging store.
        for kk in range(KK):
            po = coord_ref[kk:kk + 1, :]                  # (1, TP) outer-axis coord
            pi = coord_ref[KK + kk:KK + kk + 1, :]        # (1, TP) inner-axis coord
            mk = mk_all[kk:kk + 1, :]                     # (1, TP) modulation

            # separable bilinear weights (implicit zero padding outside input);
            # modulation folded into the (small) outer-axis weight.
            wo = jnp.maximum(0.0, 1.0 - jnp.abs(po - io)) * mk   # (D_out, TP)
            wi = jnp.maximum(0.0, 1.0 - jnp.abs(pi - ii))        # (D_in, TP)

            # contract the larger spatial axis on the MXU:
            #   t[c*D_out + o, p] = sum_i x[c, o, i] * wi[i, p]
            t = jnp.dot(x_bf, wi.astype(jnp.bfloat16),
                        preferred_element_type=jnp.float32)      # (C_pad*D_out, TP)

            # outer-axis reduction on the VPU (reshape only splits the sublane axis)
            s = jnp.sum(t.reshape(C_pad, D_out, TP) * wo[None, :, :], axis=1)

            row = kk * C_pad                               # multiple of 16 -> aligned
            s_ref[row:row + C_pad, :] = s.astype(jnp.bfloat16)   # stage tap samples

        # main convolution: single (C_out, KK*C_pad) @ (KK*C_pad, TP) matmul
        acc = jnp.dot(w_ref[...], s_ref[...],
                      preferred_element_type=jnp.float32)        # (C_out, TP)
        out_ref[0] = acc + b_ref[...]

    return kernel


def deformable_conv2d(x, params, *, kernel_size=3, stride=1, padding=1,
                      dilation=1, tile_p=None):
    """Forward pass of the CenterNet DeformableConv2d module (groups=1)."""
    B, C_in, H, W = x.shape
    K = kernel_size
    KK = K * K
    weight = params["weight"]          # (C_out, C_in, K, K)
    bias = params["bias"]              # (C_out,)
    off_w = params["offset_w"]         # (2*KK, C_in, K, K)
    off_b = params["offset_b"]         # (2*KK,)
    msk_w = params["mask_w"]           # (KK, C_in, K, K)
    msk_b = params["mask_b"]           # (KK,)
    C_out = weight.shape[0]

    H_out = (H + 2 * padding - (dilation * (K - 1) + 1)) // stride + 1
    W_out = (W + 2 * padding - (dilation * (K - 1) + 1)) // stride + 1
    P = H_out * W_out

    # channels padded to a multiple of 16 so bf16 tap-staging stores are tile-aligned
    C_pad = ((C_in + 15) // 16) * 16

    # contract the larger spatial axis on the MXU, reduce the other on the VPU
    swap = H > W
    D_out, D_in = (W, H) if swap else (H, W)
    CH = C_pad * D_out

    usable_vmem, wide_mxu = _chip_config()

    def vmem_estimate(tp):
        d_in_lanes = ((D_in + 127) // 128) * 128
        x_blk = CH * d_in_lanes * 2
        coord_blk = ((3 * KK + 7) // 8 * 8) * tp * 4
        w_blk = ((C_out + 15) // 16 * 16) * (KK * C_pad) * 2
        b_blk = ((C_out + 7) // 8 * 8) * 128 * 4
        o_blk = ((C_out + 7) // 8 * 8) * tp * 4
        scratch = (KK * C_pad) * tp * 2
        interm = 3 * (2 * CH * tp * 4) + (D_out + D_in + 4 * KK) * tp * 4
        return 2 * (x_blk + coord_blk + w_blk + b_blk + o_blk) + scratch + interm

    if tile_p is not None:
        TP = max(128, (int(tile_p) // 128) * 128)
    else:
        TP = 128
        if wide_mxu:
            # TP=256 fills the 256-wide MXU N axis on v6e/v7x, if it fits VMEM
            # and still leaves >= 2 grid steps (both v7x TensorCores get work).
            n_steps_256 = B * ((P + 255) // 256)
            if n_steps_256 >= 2 and vmem_estimate(256) <= usable_vmem:
                TP = 256

    P_pad = ((P + TP - 1) // TP) * TP
    nP = P_pad // TP
    vmem_limit = int(min(usable_vmem,
                         max(32 << 20, int(1.3 * vmem_estimate(TP)) + (4 << 20))))

    # ---- offset & mask convolutions (regular convs, dilation=1 like nn.Conv2d) ----
    dn = ("NCHW", "OIHW", "NCHW")
    pad2 = ((padding, padding), (padding, padding))
    off = lax.conv_general_dilated(x, off_w, (stride, stride), pad2,
                                   dimension_numbers=dn)
    off = off + off_b[None, :, None, None]                       # (B, 2*KK, Ho, Wo)
    mlog = lax.conv_general_dilated(x, msk_w, (stride, stride), pad2,
                                    dimension_numbers=dn)
    mlog = mlog + msk_b[None, :, None, None]                     # (B, KK, Ho, Wo)
    if off.shape[-2:] != (H_out, W_out):
        raise ValueError("offset/mask conv output grid does not match the "
                         "deformable output grid")

    # torchvision channel order: channel 2k = dy_k, channel 2k+1 = dx_k
    off_y = off[:, 0::2].reshape(B, KK, P).astype(jnp.float32)
    off_x = off[:, 1::2].reshape(B, KK, P).astype(jnp.float32)
    mlog = mlog.reshape(B, KK, P).astype(jnp.float32)

    # ---- absolute sampling coordinates = base grid + learned offsets ----
    h_idx = jnp.arange(H_out, dtype=jnp.float32) * stride - padding
    w_idx = jnp.arange(W_out, dtype=jnp.float32) * stride - padding
    k_idx = jnp.arange(K, dtype=jnp.float32) * dilation
    base_y = jnp.repeat(k_idx, K)[:, None] + jnp.repeat(h_idx, W_out)[None, :]  # (KK, P)
    base_x = jnp.tile(k_idx, K)[:, None] + jnp.tile(w_idx, H_out)[None, :]      # (KK, P)
    py = off_y + base_y[None]
    px = off_x + base_x[None]

    # outer axis = the VPU-reduced axis, inner axis = the MXU-contracted axis
    po_full, pi_full = (px, py) if swap else (py, px)

    # pack [outer coords ; inner coords ; mask logits] into one input block
    coords = jnp.concatenate([po_full, pi_full, mlog], axis=1)   # (B, 3*KK, P)
    if P_pad != P:
        coords = jnp.pad(coords, ((0, 0), (0, 0), (0, P_pad - P)))
    coords_t = jnp.transpose(coords, (1, 0, 2)).reshape(3 * KK, B * P_pad)

    # ---- input, channel-padded, (optionally) transposed, bf16 for the MXU ----
    x_p = x
    if C_pad != C_in:
        x_p = jnp.pad(x_p, ((0, 0), (0, C_pad - C_in), (0, 0), (0, 0)))
    if swap:
        x_p = jnp.transpose(x_p, (0, 1, 3, 2))                   # (B, C_pad, W, H)
    x_mat = x_p.reshape(B, CH, D_in).astype(jnp.bfloat16)        # rows = c*D_out + o

    # main weight as (C_out, KK*C_pad), tap-major / channel-minor (matches scratch)
    w2 = weight.transpose(0, 2, 3, 1)                            # (C_out, K, K, C_in)
    if C_pad != C_in:
        w2 = jnp.pad(w2, ((0, 0), (0, 0), (0, 0), (0, C_pad - C_in)))
    w2 = w2.reshape(C_out, KK * C_pad).astype(jnp.bfloat16)
    b2 = bias.reshape(C_out, 1).astype(jnp.float32)

    # ---- cost estimate (scheduling hint for XLA) ----
    flops = 2 * B * P_pad * (KK * CH * D_in + KK * CH + C_out * KK * C_pad)
    transcendentals = B * KK * P_pad
    bytes_accessed = (3 * KK * B * P_pad * 4 + B * CH * D_in * 2
                      + C_out * KK * C_pad * 2 + C_out * 4 + B * C_out * P_pad * 4)

    kernel = _make_kernel(D_out, D_in, KK, C_pad, C_out, TP)
    coord_spec = pl.BlockSpec((3 * KK, TP), lambda b, p: (0, b * nP + p))
    const = lambda b, p: (0, 0)

    out = pl.pallas_call(
        kernel,
        out_shape=jax.ShapeDtypeStruct((B, C_out, P_pad), jnp.float32),
        grid=(B, nP),
        in_specs=[
            coord_spec,                                           # packed coords/mask
            pl.BlockSpec((1, CH, D_in), lambda b, p: (b, 0, 0)),  # x (bf16)
            pl.BlockSpec((C_out, KK * C_pad), const),             # main weight
            pl.BlockSpec((C_out, 1), const),                      # bias
        ],
        out_specs=pl.BlockSpec((1, C_out, TP), lambda b, p: (b, 0, p)),
        scratch_shapes=[pltpu.VMEM((KK * C_pad, TP), jnp.bfloat16)],
        compiler_params=pltpu.CompilerParams(
            dimension_semantics=("parallel", "parallel"),
            vmem_limit_bytes=vmem_limit),
        cost_estimate=pl.CostEstimate(
            flops=flops, transcendentals=transcendentals,
            bytes_accessed=bytes_accessed),
    )(coords_t, x_mat, w2, b2)

    # output is already channels-first: drop the pixel padding and reshape
    return out[:, :, :P].reshape(B, C_out, H_out, W_out)


def init_params(key, inplanes, planes, kernel_size=3, groups=1, bias=True):
    K = kernel_size
    KK = K * K
    n = inplanes * K * K
    stdv = 1.0 / math.sqrt(n)
    weight = jax.random.uniform(key, (planes, inplanes // groups, K, K),
                                minval=-stdv, maxval=stdv, dtype=jnp.float32)
    return {
        "weight": weight,
        "bias": jnp.zeros((planes,), jnp.float32),
        # offset / mask convs are constant-zero initialized, matching the module
        "offset_w": jnp.zeros((2 * groups * KK, inplanes, K, K), jnp.float32),
        "offset_b": jnp.zeros((2 * groups * KK,), jnp.float32),
        "mask_w": jnp.zeros((groups * KK, inplanes, K, K), jnp.float32),
        "mask_b": jnp.zeros((groups * KK,), jnp.float32),
    }


if __name__ == "__main__":
    key = jax.random.PRNGKey(0)
    k_x, k_w = jax.random.split(key)

    B, C_in, H, W = 2, 4, 16, 16
    planes = 8
    x = jax.random.normal(k_x, (B, C_in, H, W), dtype=jnp.float32)
    params = init_params(k_w, C_in, planes)

    out = deformable_conv2d(x, params)
    out = jax.block_until_ready(out)
    assert out.shape == (B, planes, H, W)

    # sanity: with zero-init offset/mask convs, offsets are 0 and mask == 0.5,
    # so the result equals 0.5 * standard conv(x, weight) + bias.
    # (tolerance reflects bf16 MXU operands + approx reciprocal in the sigmoid)
    ref = lax.conv_general_dilated(
        x, params["weight"], window_strides=(1, 1), padding=((1, 1), (1, 1)),
        dimension_numbers=("NCHW", "OIHW", "NCHW"))
    ref = 0.5 * ref + params["bias"][None, :, None, None]
    max_err = float(jnp.max(jnp.abs(out - ref)))
    assert jnp.allclose(out, ref, rtol=5e-2, atol=5e-2), max_err

    print("KERNEL_OK")
</pallas_src>

<mosaic_0001>
module attributes {stable_mosaic.version = 11 : i64} {
  func.func @kernel(%arg0: i32, %arg1: i32, %arg2: memref<27x128xf32, #tpu.memory_space<vmem>>, %arg3: memref<1x256x16xbf16, #tpu.memory_space<vmem>>, %arg4: memref<8x144xbf16, #tpu.memory_space<vmem>>, %arg5: memref<8x1xf32, #tpu.memory_space<vmem>>, %arg6: memref<1x8x128xf32, #tpu.memory_space<vmem>>, %arg7: memref<144x128xbf16, #tpu.memory_space<vmem>>) attributes {dimension_semantics = [#tpu.dimension_semantics<parallel>, #tpu.dimension_semantics<parallel>], iteration_bounds = array<i64: 2, 2>, scalar_prefetch = 0 : i64, scratch_operands = 1 : i64, tpu.core_type = #tpu.core_type<tc>, window_params = [{transform_indices = @transform_0, window_bounds = array<i64: 27, 128>}, {transform_indices = @transform_1, window_bounds = array<i64: 1, 256, 16>}, {pipeline_mode = #tpu.pipeline_mode<synchronous>, transform_indices = @transform_2, window_bounds = array<i64: 8, 144>}, {pipeline_mode = #tpu.pipeline_mode<synchronous>, transform_indices = @transform_3, window_bounds = array<i64: 8, 1>}, {transform_indices = @transform_4, window_bounds = array<i64: 1, 8, 128>}]} {
    %0 = tpu.iota {dimensions = array<i32: 0>} : vector<16x128xi32>
    %1 = arith.sitofp %0 : vector<16x128xi32> to vector<16x128xf32>
    %2 = tpu.iota {dimensions = array<i32: 0>} : vector<16x128xi32>
    %3 = arith.sitofp %2 : vector<16x128xi32> to vector<16x128xf32>
    %c0 = arith.constant 0 : index
    %c0_0 = arith.constant 0 : index
    %c0_1 = arith.constant 0 : index
    %4 = vector.load %arg3[%c0, %c0_0, %c0_1] : memref<1x256x16xbf16, #tpu.memory_space<vmem>>, vector<1x256x16xbf16>
    %5 = vector.shape_cast %4 : vector<1x256x16xbf16> to vector<256x16xbf16>
    %c18 = arith.constant 18 : index
    %c0_2 = arith.constant 0 : index
    %6 = vector.load %arg2[%c18, %c0_2] : memref<27x128xf32, #tpu.memory_space<vmem>>, vector<9x128xf32>
    %cst = arith.constant 0.000000e+00 : f32
    %7 = vector.broadcast %cst : f32 to vector<9x128xf32>
    %8 = arith.subf %7, %6 : vector<9x128xf32>
    %9 = math.exp %8 : vector<9x128xf32>
    %cst_3 = arith.constant 1.000000e+00 : f32
    %10 = vector.broadcast %cst_3 : f32 to vector<9x128xf32>
    %11 = arith.addf %10, %9 : vector<9x128xf32>
    %12 = tpu.reciprocal %11 {approx = true} : vector<9x128xf32> -> vector<9x128xf32>
    %c0_4 = arith.constant 0 : index
    %c0_5 = arith.constant 0 : index
    %13 = vector.load %arg2[%c0_4, %c0_5] : memref<27x128xf32, #tpu.memory_space<vmem>>, vector<1x128xf32>
    %c9 = arith.constant 9 : index
    %c0_6 = arith.constant 0 : index
    %14 = vector.load %arg2[%c9, %c0_6] : memref<27x128xf32, #tpu.memory_space<vmem>>, vector<1x128xf32>
    %15 = vector.extract_strided_slice %12 {offsets = [0, 0], sizes = [1, 128], strides = [1, 1]} : vector<9x128xf32> to vector<1x128xf32>
    %16 = vector.broadcast %13 : vector<1x128xf32> to vector<16x128xf32>
    %17 = arith.subf %16, %1 : vector<16x128xf32>
    %18 = math.absf %17 : vector<16x128xf32>
    %cst_7 = arith.constant 1.000000e+00 : f32
    %19 = vector.broadcast %cst_7 : f32 to vector<16x128xf32>
    %20 = arith.subf %19, %18 : vector<16x128xf32>
    %cst_8 = arith.constant 0.000000e+00 : f32
    %21 = vector.broadcast %cst_8 : f32 to vector<16x128xf32>
    %22 = arith.maximumf %21, %20 : vector<16x128xf32>
    %23 = vector.broadcast %15 : vector<1x128xf32> to vector<16x128xf32>
    %24 = arith.mulf %22, %23 : vector<16x128xf32>
    %25 = vector.broadcast %14 : vector<1x128xf32> to vector<16x128xf32>
    %26 = arith.subf %25, %3 : vector<16x128xf32>
    %27 = math.absf %26 : vector<16x128xf32>
    %cst_9 = arith.constant 1.000000e+00 : f32
    %28 = vector.broadcast %cst_9 : f32 to vector<16x128xf32>
    %29 = arith.subf %28, %27 : vector<16x128xf32>
    %cst_10 = arith.constant 0.000000e+00 : f32
    %30 = vector.broadcast %cst_10 : f32 to vector<16x128xf32>
    %31 = arith.maximumf %30, %29 : vector<16x128xf32>
    %32 = arith.truncf %31 : vector<16x128xf32> to vector<16x128xbf16>
    %cst_11 = arith.constant dense<0.000000e+00> : vector<256x128xf32>
    %33 = tpu.matmul %5, %32, %cst_11 {dimension_numbers = #tpu.dot_dimension_numbers<[1], [0], [0], [1], [0, 0, 1, 1], [], []>} : vector<256x16xbf16>, vector<16x128xbf16>, vector<256x128xf32> -> vector<256x128xf32>
    %34 = vector.shape_cast %33 : vector<256x128xf32> to vector<16x16x128xf32>
    %35 = vector.shape_cast %24 : vector<16x128xf32> to vector<1x16x128xf32>
    %36 = vector.broadcast %35 : vector<1x16x128xf32> to vector<16x16x128xf32>
    %37 = arith.mulf %34, %36 : vector<16x16x128xf32>
    %cst_12 = arith.constant dense<0.000000e+00> : vector<16x128xf32>
    %38 = vector.multi_reduction <add>, %37, %cst_12 [1] : vector<16x16x128xf32> to vector<16x128xf32>
    %39 = arith.truncf %38 : vector<16x128xf32> to vector<16x128xbf16>
    %c0_13 = arith.constant 0 : index
    %c0_14 = arith.constant 0 : index
    %40 = vector.load %arg7[%c0_13, %c0_14] : memref<144x128xbf16, #tpu.memory_space<vmem>>, vector<16x128xbf16>
    tpu.vector_store %arg7[%c0_13, %c0_14], %39 {strides = array<i32>} : memref<144x128xbf16, #tpu.memory_space<vmem>>, vector<16x128xbf16>,
    %c1 = arith.constant 1 : index
    %c0_15 = arith.constant 0 : index
    %41 = vector.load %arg2[%c1, %c0_15] : memref<27x128xf32, #tpu.memory_space<vmem>>, vector<1x128xf32>
    %c10 = arith.constant 10 : index
    %c0_16 = arith.constant 0 : index
    %42 = vector.load %arg2[%c10, %c0_16] : memref<27x128xf32, #tpu.memory_space<vmem>>, vector<1x128xf32>
    %43 = vector.extract_strided_slice %12 {offsets = [1, 0], sizes = [1, 128], strides = [1, 1]} : vector<9x128xf32> to vector<1x128xf32>
    %44 = vector.broadcast %41 : vector<1x128xf32> to vector<16x128xf32>
    %45 = arith.subf %44, %1 : vector<16x128xf32>
    %46 = math.absf %45 : vector<16x128xf32>
    %cst_17 = arith.constant 1.000000e+00 : f32
    %47 = vector.broadcast %cst_17 : f32 to vector<16x128xf32>
    %48 = arith.subf %47, %46 : vector<16x128xf32>
    %cst_18 = arith.constant 0.000000e+00 : f32
    %49 = vector.broadcast %cst_18 : f32 to vector<16x128xf32>
    %50 = arith.maximumf %49, %48 : vector<16x128xf32>
    %51 = vector.broadcast %43 : vector<1x128xf32> to vector<16x128xf32>
    %52 = arith.mulf %50, %51 : vector<16x128xf32>
    %53 = vector.broadcast %42 : vector<1x128xf32> to vector<16x128xf32>
    %54 = arith.subf %53, %3 : vector<16x128xf32>
    %55 = math.absf %54 : vector<16x128xf32>
    %cst_19 = arith.constant 1.000000e+00 : f32
    %56 = vector.broadcast %cst_19 : f32 to vector<16x128xf32>
    %57 = arith.subf %56, %55 : vector<16x128xf32>
    %cst_20 = arith.constant 0.000000e+00 : f32
    %58 = vector.broadcast %cst_20 : f32 to vector<16x128xf32>
    %59 = arith.maximumf %58, %57 : vector<16x128xf32>
    %60 = arith.truncf %59 : vector<16x128xf32> to vector<16x128xbf16>
    %cst_21 = arith.constant dense<0.000000e+00> : vector<256x128xf32>
    %61 = tpu.matmul %5, %60, %cst_21 {dimension_numbers = #tpu.dot_dimension_numbers<[1], [0], [0], [1], [0, 0, 1, 1], [], []>} : vector<256x16xbf16>, vector<16x128xbf16>, vector<256x128xf32> -> vector<256x128xf32>
    %62 = vector.shape_cast %61 : vector<256x128xf32> to vector<16x16x128xf32>
    %63 = vector.shape_cast %52 : vector<16x128xf32> to vector<1x16x128xf32>
    %64 = vector.broadcast %63 : vector<1x16x128xf32> to vector<16x16x128xf32>
    %65 = arith.mulf %62, %64 : vector<16x16x128xf32>
    %cst_22 = arith.constant dense<0.000000e+00> : vector<16x128xf32>
    %66 = vector.multi_reduction <add>, %65, %cst_22 [1] : vector<16x16x128xf32> to vector<16x128xf32>
    %67 = arith.truncf %66 : vector<16x128xf32> to vector<16x128xbf16>
    %c16 = arith.constant 16 : index
    %c0_23 = arith.constant 0 : index
    %68 = vector.load %arg7[%c16, %c0_23] : memref<144x128xbf16, #tpu.memory_space<vmem>>, vector<16x128xbf16>
    tpu.vector_store %arg7[%c16, %c0_23], %67 {strides = array<i32>} : memref<144x128xbf16, #tpu.memory_space<vmem>>, vector<16x128xbf16>,
    %c2 = arith.constant 2 : index
    %c0_24 = arith.constant 0 : index
    %69 = vector.load %arg2[%c2, %c0_24] : memref<27x128xf32, #tpu.memory_space<vmem>>, vector<1x128xf32>
    %c11 = arith.constant 11 : index
    %c0_25 = arith.constant 0 : index
    %70 = vector.load %arg2[%c11, %c0_25] : memref<27x128xf32, #tpu.memory_space<vmem>>, vector<1x128xf32>
    %71 = vector.extract_strided_slice %12 {offsets = [2, 0], sizes = [1, 128], strides = [1, 1]} : vector<9x128xf32> to vector<1x128xf32>
    %72 = vector.broadcast %69 : vector<1x128xf32> to vector<16x128xf32>
    %73 = arith.subf %72, %1 : vector<16x128xf32>
    %74 = math.absf %73 : vector<16x128xf32>
    %cst_26 = arith.constant 1.000000e+00 : f32
    %75 = vector.broadcast %cst_26 : f32 to vector<16x128xf32>
    %76 = arith.subf %75, %74 : vector<16x128xf32>
    %cst_27 = arith.constant 0.000000e+00 : f32
    %77 = vector.broadcast %cst_27 : f32 to vector<16x128xf32>
    %78 = arith.maximumf %77, %76 : vector<16x128xf32>
    %79 = vector.broadcast %71 : vector<1x128xf32> to vector<16x128xf32>
    %80 = arith.mulf %78, %79 : vector<16x128xf32>
    %81 = vector.broadcast %70 : vector<1x128xf32> to vector<16x128xf32>
    %82 = arith.subf %81, %3 : vector<16x128xf32>
    %83 = math.absf %82 : vector<16x128xf32>
    %cst_28 = arith.constant 1.000000e+00 : f32
    %84 = vector.broadcast %cst_28 : f32 to vector<16x128xf32>
    %85 = arith.subf %84, %83 : vector<16x128xf32>
    %cst_29 = arith.constant 0.000000e+00 : f32
    %86 = vector.broadcast %cst_29 : f32 to vector<16x128xf32>
    %87 = arith.maximumf %86, %85 : vector<16x128xf32>
    %88 = arith.truncf %87 : vector<16x128xf32> to vector<16x128xbf16>
    %cst_30 = arith.constant dense<0.000000e+00> : vector<256x128xf32>
    %89 = tpu.matmul %5, %88, %cst_30 {dimension_numbers = #tpu.dot_dimension_numbers<[1], [0], [0], [1], [0, 0, 1, 1], [], []>} : vector<256x16xbf16>, vector<16x128xbf16>, vector<256x128xf32> -> vector<256x128xf32>
    %90 = vector.shape_cast %89 : vector<256x128xf32> to vector<16x16x128xf32>
    %91 = vector.shape_cast %80 : vector<16x128xf32> to vector<1x16x128xf32>
    %92 = vector.broadcast %91 : vector<1x16x128xf32> to vector<16x16x128xf32>
    %93 = arith.mulf %90, %92 : vector<16x16x128xf32>
    %cst_31 = arith.constant dense<0.000000e+00> : vector<16x128xf32>
    %94 = vector.multi_reduction <add>, %93, %cst_31 [1] : vector<16x16x128xf32> to vector<16x128xf32>
    %95 = arith.truncf %94 : vector<16x128xf32> to vector<16x128xbf16>
    %c32 = arith.constant 32 : index
    %c0_32 = arith.constant 0 : index
    %96 = vector.load %arg7[%c32, %c0_32] : memref<144x128xbf16, #tpu.memory_space<vmem>>, vector<16x128xbf16>
    tpu.vector_store %arg7[%c32, %c0_32], %95 {strides = array<i32>} : memref<144x128xbf16, #tpu.memory_space<vmem>>, vector<16x128xbf16>,
    %c3 = arith.constant 3 : index
    %c0_33 = arith.constant 0 : index
    %97 = vector.load %arg2[%c3, %c0_33] : memref<27x128xf32, #tpu.memory_space<vmem>>, vector<1x128xf32>
    %c12 = arith.constant 12 : index
    %c0_34 = arith.constant 0 : index
    %98 = vector.load %arg2[%c12, %c0_34] : memref<27x128xf32, #tpu.memory_space<vmem>>, vector<1x128xf32>
    %99 = vector.extract_strided_slice %12 {offsets = [3, 0], sizes = [1, 128], strides = [1, 1]} : vector<9x128xf32> to vector<1x128xf32>
    %100 = vector.broadcast %97 : vector<1x128xf32> to vector<16x128xf32>
    %101 = arith.subf %100, %1 : vector<16x128xf32>
    %102 = math.absf %101 : vector<16x128xf32>
    %cst_35 = arith.constant 1.000000e+00 : f32
    %103 = vector.broadcast %cst_35 : f32 to vector<16x128xf32>
    %104 = arith.subf %103, %102 : vector<16x128xf32>
    %cst_36 = arith.constant 0.000000e+00 : f32
    %105 = vector.broadcast %cst_36 : f32 to vector<16x128xf32>
    %106 = arith.maximumf %105, %104 : vector<16x128xf32>
    %107 = vector.broadcast %99 : vector<1x128xf32> to vector<16x128xf32>
    %108 = arith.mulf %106, %107 : vector<16x128xf32>
    %109 = vector.broadcast %98 : vector<1x128xf32> to vector<16x128xf32>
    %110 = arith.subf %109, %3 : vector<16x128xf32>
    %111 = math.absf %110 : vector<16x128xf32>
    %cst_37 = arith.constant 1.000000e+00 : f32
    %112 = vector.broadcast %cst_37 : f32 to vector<16x128xf32>
    %113 = arith.subf %112, %111 : vector<16x128xf32>
    %cst_38 = arith.constant 0.000000e+00 : f32
    %114 = vector.broadcast %cst_38 : f32 to vector<16x128xf32>
    %115 = arith.maximumf %114, %113 : vector<16x128xf32>
    %116 = arith.truncf %115 : vector<16x128xf32> to vector<16x128xbf16>
    %cst_39 = arith.constant dense<0.000000e+00> : vector<256x128xf32>
    %117 = tpu.matmul %5, %116, %cst_39 {dimension_numbers = #tpu.dot_dimension_numbers<[1], [0], [0], [1], [0, 0, 1, 1], [], []>} : vector<256x16xbf16>, vector<16x128xbf16>, vector<256x128xf32> -> vector<256x128xf32>
    %118 = vector.shape_cast %117 : vector<256x128xf32> to vector<16x16x128xf32>
    %119 = vector.shape_cast %108 : vector<16x128xf32> to vector<1x16x128xf32>
    %120 = vector.broadcast %119 : vector<1x16x128xf32> to vector<16x16x128xf32>
    %121 = arith.mulf %118, %120 : vector<16x16x128xf32>
    %cst_40 = arith.constant dense<0.000000e+00> : vector<16x128xf32>
    %122 = vector.multi_reduction <add>, %121, %cst_40 [1] : vector<16x16x128xf32> to vector<16x128xf32>
    %123 = arith.truncf %122 : vector<16x128xf32> to vector<16x128xbf16>
    %c48 = arith.constant 48 : index
    %c0_41 = arith.constant 0 : index
    %124 = vector.load %arg7[%c48, %c0_41] : memref<144x128xbf16, #tpu.memory_space<vmem>>, vector<16x128xbf16>
    tpu.vector_store %arg7[%c48, %c0_41], %123 {strides = array<i32>} : memref<144x128xbf16, #tpu.memory_space<vmem>>, vector<16x128xbf16>,
    %c4 = arith.constant 4 : index
    %c0_42 = arith.constant 0 : index
    %125 = vector.load %arg2[%c4, %c0_42] : memref<27x128xf32, #tpu.memory_space<vmem>>, vector<1x128xf32>
    %c13 = arith.constant 13 : index
    %c0_43 = arith.constant 0 : index
    %126 = vector.load %arg2[%c13, %c0_43] : memref<27x128xf32, #tpu.memory_space<vmem>>, vector<1x128xf32>
    %127 = vector.extract_strided_slice %12 {offsets = [4, 0], sizes = [1, 128], strides = [1, 1]} : vector<9x128xf32> to vector<1x128xf32>
    %128 = vector.broadcast %125 : vector<1x128xf32> to vector<16x128xf32>
    %129 = arith.subf %128, %1 : vector<16x128xf32>
    %130 = math.absf %129 : vector<16x128xf32>
    %cst_44 = arith.constant 1.000000e+00 : f32
    %131 = vector.broadcast %cst_44 : f32 to vector<16x128xf32>
    %132 = arith.subf %131, %130 : vector<16x128xf32>
    %cst_45 = arith.constant 0.000000e+00 : f32
    %133 = vector.broadcast %cst_45 : f32 to vector<16x128xf32>
    %134 = arith.maximumf %133, %132 : vector<16x128xf32>
    %135 = vector.broadcast %127 : vector<1x128xf32> to vector<16x128xf32>
    %136 = arith.mulf %134, %135 : vector<16x128xf32>
    %137 = vector.broadcast %126 : vector<1x128xf32> to vector<16x128xf32>
    %138 = arith.subf %137, %3 : vector<16x128xf32>
    %139 = math.absf %138 : vector<16x128xf32>
    %cst_46 = arith.constant 1.000000e+00 : f32
    %140 = vector.broadcast %cst_46 : f32 to vector<16x128xf32>
    %141 = arith.subf %140, %139 : vector<16x128xf32>
    %cst_47 = arith.constant 0.000000e+00 : f32
    %142 = vector.broadcast %cst_47 : f32 to vector<16x128xf32>
    %143 = arith.maximumf %142, %141 : vector<16x128xf32>
    %144 = arith.truncf %143 : vector<16x128xf32> to vector<16x128xbf16>
    %cst_48 = arith.constant dense<0.000000e+00> : vector<256x128xf32>
    %145 = tpu.matmul %5, %144, %cst_48 {dimension_numbers = #tpu.dot_dimension_numbers<[1], [0], [0], [1], [0, 0, 1, 1], [], []>} : vector<256x16xbf16>, vector<16x128xbf16>, vector<256x128xf32> -> vector<256x128xf32>
    %146 = vector.shape_cast %145 : vector<256x128xf32> to vector<16x16x128xf32>
    %147 = vector.shape_cast %136 : vector<16x128xf32> to vector<1x16x128xf32>
    %148 = vector.broadcast %147 : vector<1x16x128xf32> to vector<16x16x128xf32>
    %149 = arith.mulf %146, %148 : vector<16x16x128xf32>
    %cst_49 = arith.constant dense<0.000000e+00> : vector<16x128xf32>
    %150 = vector.multi_reduction <add>, %149, %cst_49 [1] : vector<16x16x128xf32> to vector<16x128xf32>
    %151 = arith.truncf %150 : vector<16x128xf32> to vector<16x128xbf16>
    %c64 = arith.constant 64 : index
    %c0_50 = arith.constant 0 : index
    %152 = vector.load %arg7[%c64, %c0_50] : memref<144x128xbf16, #tpu.memory_space<vmem>>, vector<16x128xbf16>
    tpu.vector_store %arg7[%c64, %c0_50], %151 {strides = array<i32>} : memref<144x128xbf16, #tpu.memory_space<vmem>>, vector<16x128xbf16>,
    %c5 = arith.constant 5 : index
    %c0_51 = arith.constant 0 : index
    %153 = vector.load %arg2[%c5, %c0_51] : memref<27x128xf32, #tpu.memory_space<vmem>>, vector<1x128xf32>
    %c14 = arith.constant 14 : index
    %c0_52 = arith.constant 0 : index
    %154 = vector.load %arg2[%c14, %c0_52] : memref<27x128xf32, #tpu.memory_space<vmem>>, vector<1x128xf32>
    %155 = vector.extract_strided_slice %12 {offsets = [5, 0], sizes = [1, 128], strides = [1, 1]} : vector<9x128xf32> to vector<1x128xf32>
    %156 = vector.broadcast %153 : vector<1x128xf32> to vector<16x128xf32>
    %157 = arith.subf %156, %1 : vector<16x128xf32>
    %158 = math.absf %157 : vector<16x128xf32>
    %cst_53 = arith.constant 1.000000e+00 : f32
    %159 = vector.broadcast %cst_53 : f32 to vector<16x128xf32>
    %160 = arith.subf %159, %158 : vector<16x128xf32>
    %cst_54 = arith.constant 0.000000e+00 : f32
    %161 = vector.broadcast %cst_54 : f32 to vector<16x128xf32>
    %162 = arith.maximumf %161, %160 : vector<16x128xf32>
    %163 = vector.broadcast %155 : vector<1x128xf32> to vector<16x128xf32>
    %164 = arith.mulf %162, %163 : vector<16x128xf32>
    %165 = vector.broadcast %154 : vector<1x128xf32> to vector<16x128xf32>
    %166 = arith.subf %165, %3 : vector<16x128xf32>
    %167 = math.absf %166 : vector<16x128xf32>
    %cst_55 = arith.constant 1.000000e+00 : f32
    %168 = vector.broadcast %cst_55 : f32 to vector<16x128xf32>
    %169 = arith.subf %168, %167 : vector<16x128xf32>
    %cst_56 = arith.constant 0.000000e+00 : f32
    %170 = vector.broadcast %cst_56 : f32 to vector<16x128xf32>
    %171 = arith.maximumf %170, %169 : vector<16x128xf32>
    %172 = arith.truncf %171 : vector<16x128xf32> to vector<16x128xbf16>
    %cst_57 = arith.constant dense<0.000000e+00> : vector<256x128xf32>
    %173 = tpu.matmul %5, %172, %cst_57 {dimension_numbers = #tpu.dot_dimension_numbers<[1], [0], [0], [1], [0, 0, 1, 1], [], []>} : vector<256x16xbf16>, vector<16x128xbf16>, vector<256x128xf32> -> vector<256x128xf32>
    %174 = vector.shape_cast %173 : vector<256x128xf32> to vector<16x16x128xf32>
    %175 = vector.shape_cast %164 : vector<16x128xf32> to vector<1x16x128xf32>
    %176 = vector.broadcast %175 : vector<1x16x128xf32> to vector<16x16x128xf32>
    %177 = arith.mulf %174, %176 : vector<16x16x128xf32>
    %cst_58 = arith.constant dense<0.000000e+00> : vector<16x128xf32>
    %178 = vector.multi_reduction <add>, %177, %cst_58 [1] : vector<16x16x128xf32> to vector<16x128xf32>
    %179 = arith.truncf %178 : vector<16x128xf32> to vector<16x128xbf16>
    %c80 = arith.constant 80 : index
    %c0_59 = arith.constant 0 : index
    %180 = vector.load %arg7[%c80, %c0_59] : memref<144x128xbf16, #tpu.memory_space<vmem>>, vector<16x128xbf16>
    tpu.vector_store %arg7[%c80, %c0_59], %179 {strides = array<i32>} : memref<144x128xbf16, #tpu.memory_space<vmem>>, vector<16x128xbf16>,
    %c6 = arith.constant 6 : index
    %c0_60 = arith.constant 0 : index
    %181 = vector.load %arg2[%c6, %c0_60] : memref<27x128xf32, #tpu.memory_space<vmem>>, vector<1x128xf32>
    %c15 = arith.constant 15 : index
    %c0_61 = arith.constant 0 : index
    %182 = vector.load %arg2[%c15, %c0_61] : memref<27x128xf32, #tpu.memory_space<vmem>>, vector<1x128xf32>
    %183 = vector.extract_strided_slice %12 {offsets = [6, 0], sizes = [1, 128], strides = [1, 1]} : vector<9x128xf32> to vector<1x128xf32>
    %184 = vector.broadcast %181 : vector<1x128xf32> to vector<16x128xf32>
    %185 = arith.subf %184, %1 : vector<16x128xf32>
    %186 = math.absf %185 : vector<16x128xf32>
    %cst_62 = arith.constant 1.000000e+00 : f32
    %187 = vector.broadcast %cst_62 : f32 to vector<16x128xf32>
    %188 = arith.subf %187, %186 : vector<16x128xf32>
    %cst_63 = arith.constant 0.000000e+00 : f32
    %189 = vector.broadcast %cst_63 : f32 to vector<16x128xf32>
    %190 = arith.maximumf %189, %188 : vector<16x128xf32>
    %191 = vector.broadcast %183 : vector<1x128xf32> to vector<16x128xf32>
    %192 = arith.mulf %190, %191 : vector<16x128xf32>
    %193 = vector.broadcast %182 : vector<1x128xf32> to vector<16x128xf32>
    %194 = arith.subf %193, %3 : vector<16x128xf32>
    %195 = math.absf %194 : vector<16x128xf32>
    %cst_64 = arith.constant 1.000000e+00 : f32
    %196 = vector.broadcast %cst_64 : f32 to vector<16x128xf32>
    %197 = arith.subf %196, %195 : vector<16x128xf32>
    %cst_65 = arith.constant 0.000000e+00 : f32
    %198 = vector.broadcast %cst_65 : f32 to vector<16x128xf32>
    %199 = arith.maximumf %198, %197 : vector<16x128xf32>
    %200 = arith.truncf %199 : vector<16x128xf32> to vector<16x128xbf16>
    %cst_66 = arith.constant dense<0.000000e+00> : vector<256x128xf32>
    %201 = tpu.matmul %5, %200, %cst_66 {dimension_numbers = #tpu.dot_dimension_numbers<[1], [0], [0], [1], [0, 0, 1, 1], [], []>} : vector<256x16xbf16>, vector<16x128xbf16>, vector<256x128xf32> -> vector<256x128xf32>
    %202 = vector.shape_cast %201 : vector<256x128xf32> to vector<16x16x128xf32>
    %203 = vector.shape_cast %192 : vector<16x128xf32> to vector<1x16x128xf32>
    %204 = vector.broadcast %203 : vector<1x16x128xf32> to vector<16x16x128xf32>
    %205 = arith.mulf %202, %204 : vector<16x16x128xf32>
    %cst_67 = arith.constant dense<0.000000e+00> : vector<16x128xf32>
    %206 = vector.multi_reduction <add>, %205, %cst_67 [1] : vector<16x16x128xf32> to vector<16x128xf32>
    %207 = arith.truncf %206 : vector<16x128xf32> to vector<16x128xbf16>
    %c96 = arith.constant 96 : index
    %c0_68 = arith.constant 0 : index
    %208 = vector.load %arg7[%c96, %c0_68] : memref<144x128xbf16, #tpu.memory_space<vmem>>, vector<16x128xbf16>
    tpu.vector_store %arg7[%c96, %c0_68], %207 {strides = array<i32>} : memref<144x128xbf16, #tpu.memory_space<vmem>>, vector<16x128xbf16>,
    %c7 = arith.constant 7 : index
    %c0_69 = arith.constant 0 : index
    %209 = vector.load %arg2[%c7, %c0_69] : memref<27x128xf32, #tpu.memory_space<vmem>>, vector<1x128xf32>
    %c16_70 = arith.constant 16 : index
    %c0_71 = arith.constant 0 : index
    %210 = vector.load %arg2[%c16_70, %c0_71] : memref<27x128xf32, #tpu.memory_space<vmem>>, vector<1x128xf32>
    %211 = vector.extract_strided_slice %12 {offsets = [7, 0], sizes = [1, 128], strides = [1, 1]} : vector<9x128xf32> to vector<1x128xf32>
    %212 = vector.broadcast %209 : vector<1x128xf32> to vector<16x128xf32>
    %213 = arith.subf %212, %1 : vector<16x128xf32>
    %214 = math.absf %213 : vector<16x128xf32>
    %cst_72 = arith.constant 1.000000e+00 : f32
    %215 = vector.broadcast %cst_72 : f32 to vector<16x128xf32>
    %216 = arith.subf %215, %214 : vector<16x128xf32>
    %cst_73 = arith.constant 0.000000e+00 : f32
    %217 = vector.broadcast %cst_73 : f32 to vector<16x128xf32>
    %218 = arith.maximumf %217, %216 : vector<16x128xf32>
    %219 = vector.broadcast %211 : vector<1x128xf32> to vector<16x128xf32>
    %220 = arith.mulf %218, %219 : vector<16x128xf32>
    %221 = vector.broadcast %210 : vector<1x128xf32> to vector<16x128xf32>
    %222 = arith.subf %221, %3 : vector<16x128xf32>
    %223 = math.absf %222 : vector<16x128xf32>
    %cst_74 = arith.constant 1.000000e+00 : f32
    %224 = vector.broadcast %cst_74 : f32 to vector<16x128xf32>
    %225 = arith.subf %224, %223 : vector<16x128xf32>
    %cst_75 = arith.constant 0.000000e+00 : f32
    %226 = vector.broadcast %cst_75 : f32 to vector<16x128xf32>
    %227 = arith.maximumf %226, %225 : vector<16x128xf32>
    %228 = arith.truncf %227 : vector<16x128xf32> to vector<16x128xbf16>
    %cst_76 = arith.constant dense<0.000000e+00> : vector<256x128xf32>
    %229 = tpu.matmul %5, %228, %cst_76 {dimension_numbers = #tpu.dot_dimension_numbers<[1], [0], [0], [1], [0, 0, 1, 1], [], []>} : vector<256x16xbf16>, vector<16x128xbf16>, vector<256x128xf32> -> vector<256x128xf32>
    %230 = vector.shape_cast %229 : vector<256x128xf32> to vector<16x16x128xf32>
    %231 = vector.shape_cast %220 : vector<16x128xf32> to vector<1x16x128xf32>
    %232 = vector.broadcast %231 : vector<1x16x128xf32> to vector<16x16x128xf32>
    %233 = arith.mulf %230, %232 : vector<16x16x128xf32>
    %cst_77 = arith.constant dense<0.000000e+00> : vector<16x128xf32>
    %234 = vector.multi_reduction <add>, %233, %cst_77 [1] : vector<16x16x128xf32> to vector<16x128xf32>
    %235 = arith.truncf %234 : vector<16x128xf32> to vector<16x128xbf16>
    %c112 = arith.constant 112 : index
    %c0_78 = arith.constant 0 : index
    %236 = vector.load %arg7[%c112, %c0_78] : memref<144x128xbf16, #tpu.memory_space<vmem>>, vector<16x128xbf16>
    tpu.vector_store %arg7[%c112, %c0_78], %235 {strides = array<i32>} : memref<144x128xbf16, #tpu.memory_space<vmem>>, vector<16x128xbf16>,
    %c8 = arith.constant 8 : index
    %c0_79 = arith.constant 0 : index
    %237 = vector.load %arg2[%c8, %c0_79] : memref<27x128xf32, #tpu.memory_space<vmem>>, vector<1x128xf32>
    %c17 = arith.constant 17 : index
    %c0_80 = arith.constant 0 : index
    %238 = vector.load %arg2[%c17, %c0_80] : memref<27x128xf32, #tpu.memory_space<vmem>>, vector<1x128xf32>
    %239 = vector.extract_strided_slice %12 {offsets = [8, 0], sizes = [1, 128], strides = [1, 1]} : vector<9x128xf32> to vector<1x128xf32>
    %240 = vector.broadcast %237 : vector<1x128xf32> to vector<16x128xf32>
    %241 = arith.subf %240, %1 : vector<16x128xf32>
    %242 = math.absf %241 : vector<16x128xf32>
    %cst_81 = arith.constant 1.000000e+00 : f32
    %243 = vector.broadcast %cst_81 : f32 to vector<16x128xf32>
    %244 = arith.subf %243, %242 : vector<16x128xf32>
    %cst_82 = arith.constant 0.000000e+00 : f32
    %245 = vector.broadcast %cst_82 : f32 to vector<16x128xf32>
    %246 = arith.maximumf %245, %244 : vector<16x128xf32>
    %247 = vector.broadcast %239 : vector<1x128xf32> to vector<16x128xf32>
    %248 = arith.mulf %246, %247 : vector<16x128xf32>
    %249 = vector.broadcast %238 : vector<1x128xf32> to vector<16x128xf32>
    %250 = arith.subf %249, %3 : vector<16x128xf32>
    %251 = math.absf %250 : vector<16x128xf32>
    %cst_83 = arith.constant 1.000000e+00 : f32
    %252 = vector.broadcast %cst_83 : f32 to vector<16x128xf32>
    %253 = arith.subf %252, %251 : vector<16x128xf32>
    %cst_84 = arith.constant 0.000000e+00 : f32
    %254 = vector.broadcast %cst_84 : f32 to vector<16x128xf32>
    %255 = arith.maximumf %254, %253 : vector<16x128xf32>
    %256 = arith.truncf %255 : vector<16x128xf32> to vector<16x128xbf16>
    %cst_85 = arith.constant dense<0.000000e+00> : vector<256x128xf32>
    %257 = tpu.matmul %5, %256, %cst_85 {dimension_numbers = #tpu.dot_dimension_numbers<[1], [0], [0], [1], [0, 0, 1, 1], [], []>} : vector<256x16xbf16>, vector<16x128xbf16>, vector<256x128xf32> -> vector<256x128xf32>
    %258 = vector.shape_cast %257 : vector<256x128xf32> to vector<16x16x128xf32>
    %259 = vector.shape_cast %248 : vector<16x128xf32> to vector<1x16x128xf32>
    %260 = vector.broadcast %259 : vector<1x16x128xf32> to vector<16x16x128xf32>
    %261 = arith.mulf %258, %260 : vector<16x16x128xf32>
    %cst_86 = arith.constant dense<0.000000e+00> : vector<16x128xf32>
    %262 = vector.multi_reduction <add>, %261, %cst_86 [1] : vector<16x16x128xf32> to vector<16x128xf32>
    %263 = arith.truncf %262 : vector<16x128xf32> to vector<16x128xbf16>
    %c128 = arith.constant 128 : index
    %c0_87 = arith.constant 0 : index
    %264 = vector.load %arg7[%c128, %c0_87] : memref<144x128xbf16, #tpu.memory_space<vmem>>, vector<16x128xbf16>
    tpu.vector_store %arg7[%c128, %c0_87], %263 {strides = array<i32>} : memref<144x128xbf16, #tpu.memory_space<vmem>>, vector<16x128xbf16>,
    %c0_88 = arith.constant 0 : index
    %c0_89 = arith.constant 0 : index
    %265 = vector.load %arg4[%c0_88, %c0_89] : memref<8x144xbf16, #tpu.memory_space<vmem>>, vector<8x144xbf16>
    %c0_90 = arith.constant 0 : index
    %c0_91 = arith.constant 0 : index
    %266 = vector.load %arg7[%c0_90, %c0_91] : memref<144x128xbf16, #tpu.memory_space<vmem>>, vector<144x128xbf16>
    %cst_92 = arith.constant dense<0.000000e+00> : vector<8x128xf32>
    %267 = tpu.matmul %265, %266, %cst_92 {dimension_numbers = #tpu.dot_dimension_numbers<[1], [0], [0], [1], [0, 0, 1, 1], [], []>} : vector<8x144xbf16>, vector<144x128xbf16>, vector<8x128xf32> -> vector<8x128xf32>
    %c0_93 = arith.constant 0 : index
    %c0_94 = arith.constant 0 : index
    %268 = vector.load %arg5[%c0_93, %c0_94] : memref<8x1xf32, #tpu.memory_space<vmem>>, vector<8x1xf32>
    %269 = vector.broadcast %268 : vector<8x1xf32> to vector<8x128xf32>
    %270 = arith.addf %267, %269 : vector<8x128xf32>
    %c0_95 = arith.constant 0 : index
    %c0_96 = arith.constant 0 : index
    %c0_97 = arith.constant 0 : index
    %271 = vector.load %arg6[%c0_95, %c0_96, %c0_97] : memref<1x8x128xf32, #tpu.memory_space<vmem>>, vector<1x8x128xf32>
    %272 = vector.shape_cast %271 : vector<1x8x128xf32> to vector<8x128xf32>
    %273 = vector.shape_cast %270 : vector<8x128xf32> to vector<1x8x128xf32>
    tpu.vector_store %arg6[%c0_95, %c0_96, %c0_97], %273 {strides = array<i32>} : memref<1x8x128xf32, #tpu.memory_space<vmem>>, vector<1x8x128xf32>,
    return
  }
  func.func @transform_0(%arg0: i32, %arg1: i32) -> (i32, i32) {
    %c2_i32 = arith.constant 2 : i32
    %0 = arith.muli %arg0, %c2_i32 : i32
    %1 = arith.addi %0, %arg1 : i32
    %c0_i32 = arith.constant 0 : i32
    %c0_i32_0 = arith.constant 0 : i32
    return %c0_i32, %1 : i32, i32
  }
  func.func @transform_1(%arg0: i32, %arg1: i32) -> (i32, i32, i32) {
    %c0_i32 = arith.constant 0 : i32
    %c0_i32_0 = arith.constant 0 : i32
    %c0_i32_1 = arith.constant 0 : i32
    return %arg0, %c0_i32, %c0_i32_0 : i32, i32, i32
  }
  func.func @transform_2(%arg0: i32, %arg1: i32) -> (i32, i32) {
    %c0_i32 = arith.constant 0 : i32
    %c0_i32_0 = arith.constant 0 : i32
    %c0_i32_1 = arith.constant 0 : i32
    return %c0_i32, %c0_i32_0 : i32, i32
  }
  func.func @transform_3(%arg0: i32, %arg1: i32) -> (i32, i32) {
    %c0_i32 = arith.constant 0 : i32
    %c0_i32_0 = arith.constant 0 : i32
    %c0_i32_1 = arith.constant 0 : i32
    return %c0_i32, %c0_i32_0 : i32, i32
  }
  func.func @transform_4(%arg0: i32, %arg1: i32) -> (i32, i32, i32) {
    %c0_i32 = arith.constant 0 : i32
    %c0_i32_0 = arith.constant 0 : i32
    return %arg0, %c0_i32, %arg1 : i32, i32, i32
  }
}

</mosaic_0001>

<llo_original>
// kernel: tpu_custom_call.1
$region0: #{tpu_custom_call.1}
  #allocation0 [shape = 'u32[]', space=smem, size = 0x4, offset = 0x4, fixed_abs, tag = 'smem constant byte address 0x4 - core index']
  #allocation1 [shape = 'u32[144,128]{1,0:T(1,128)}', space=vmem, size = 0x12000, scoped, tag = 'internal scratch']
  #allocation2 [shape = 'bf16[144,128]{1,0:T(16,128)(2,1)}', space=vmem, size = 0x9000, scoped, tag = 'scratch operand']
  %s0 = inlined_call_operand.vmem [shape: f32[27,512], index: 0, kind: input, shape index: {}]
  %s1 = inlined_call_operand.vmem [shape: bf16[2,256,16], index: 1, kind: input, shape index: {}]
  %s2 = inlined_call_operand.vmem [shape: bf16[8,144], index: 2, kind: input, shape index: {}]
  %s3 = inlined_call_operand.vmem [shape: f32[8,1], index: 3, kind: input, shape index: {}]
  %s4 = inlined_call_operand.hbm [shape: f32[2,8,256], index: 4, kind: output, shape index: {}]
  %s5 = sld [smem:[#allocation0]]
  $region87: #{tpu_custom_call.1} parent=0
    _
  %s7 = ssub.s32 1, %s5
  %s8 = scalar_select 0, %s7, %s5
  $region1: #{tpu_custom_call.1} parent=0
    #allocation3 [shape = 'u8[32768]{0}', space=vmem, size = 0x8000, scoped, tag = 'input window, operand 0']
    #allocation4 [shape = 'u8[8192]{0}', space=vmem, size = 0x2000, scoped, tag = 'output window, operand 0']
    #allocation5 [shape = 's32[2]{0}', space=sflag, size = 0x8, scoped, tag = 'scoped memory for tpu_custom_call.1']
    %9 = vsyncpa [#allocation5], 0
    %s10 = scalar_lea.sflag [#allocation5], 1
    %11 = vsyncpa %s10, 0
    loop: start=0, step=1, limit=6
    $region2: #{tpu_custom_call.1} parent=1 // loop_pre_header
      _
    $region3: #{tpu_custom_call.1} parent=1 // loop_header
      %s13 = sphi 0, %s17
      %p14 = scmp.ge.s32.totalorder %s13, 6
      %s20 = sphi 0, %s32
      %s21 = sphi 0, %s28
      %s22 = sphi 0, %s20
      %s23 = sphi 0, %s21
      %s24 = sphi 0, %s22
      %s25 = sphi 0, %s23
      %s39 = sphi 0, %s41
      %s42 = sphi 0, %s39
      %s43 = sphi 0, %s42
      %s59 = sphi 0, %s43
      %s65 = sphi 0, %s67
      %s68 = sphi 0, %s65
      %s69 = sphi 0, %s68
      %s85 = sphi 0, %s69
      %s89 = sphi 0, %s89
      %s91 = sphi 0, %s89
      %s92 = sphi 0, %s91
      %s106 = sphi 0, %s92
      %s110 = sphi 0, %s110
      %s112 = sphi 0, %s110
      %s113 = sphi 0, %s112
      %s127 = sphi 0, %s113
      %s135 = sphi 0, %s137
      %s138 = sphi 0, %s135
      %s139 = sphi 0, %s138
      %s155 = sphi 0, %s139
    $region4: #{tpu_custom_call.1} parent=1 // loop_header_branch
      %16 = sbr.rel (%p14) target = $region8
    $region5: #{tpu_custom_call.1} parent=1 // loop_body
      %s18 = ssub.s32 %s13, 1
      %s19 = ssub.s32 %s13, 2
      %s26 = sadd.s32 1, %s21
      %p27 = scmp.ge.s32.totalorder %s26, 2
      %s28 = scalar_select %p27, 0, %s26
      %s29 = sadd.s32 1, %s20
      %s30 = scalar_select %p27, %s29, %s20
      %p31 = scmp.ge.s32.totalorder %s30, 2
      %s32 = scalar_select %p31, 0, %s30
      %s33 = smul.u32 %s20, 2
      %s34 = sadd.s32 %s33, %s21
      %s35 = smul.u32 %s32, 2
      %s36 = sadd.s32 %s35, %s28
      %s37 = ssub.s32 %s34, %s36
      %p38 = scmp.eq.s32.totalorder %s37, 0
      %s40 = sadd.s32 %s39, 1
      %s41 = scalar_select %p38, %s39, %s40
      %p44 = pneg %p38
      %p45 = scmp.eq.s32.totalorder %s13, 3
      %p46 = por %p44, %p45
      %p47 = scmp.ne.s32.totalorder %s39, %s42
      %p48 = scmp.eq.s32.totalorder %s13, 0
      %p49 = por %p47, %p48
      %p50 = scmp.ne.s32.totalorder %s39, %s42
      %p51 = scmp.eq.s32.totalorder %s18, 3
      %p52 = por %p50, %p51
      %p53 = scmp.ne.s32.totalorder %s42, %s43
      %p54 = scmp.eq.s32.totalorder %s18, 0
      %p55 = por %p53, %p54
      %p56 = scmp.ne.s32.totalorder %s42, %s43
      %p57 = scmp.eq.s32.totalorder %s19, 3
      %p58 = por %p56, %p57
      %p60 = scmp.ne.s32.totalorder %s43, %s59
      %p61 = scmp.eq.s32.totalorder %s19, 0
      %p62 = por %p60, %p61
      %s63 = ssub.s32 %s20, %s32
      %p64 = scmp.eq.s32.totalorder %s63, 0
      %s66 = sadd.s32 %s65, 1
      %s67 = scalar_select %p64, %s65, %s66
      %p70 = pneg %p64
      %p71 = scmp.eq.s32.totalorder %s13, 3
      %p72 = por %p70, %p71
      %p73 = scmp.ne.s32.totalorder %s65, %s68
      %p74 = scmp.eq.s32.totalorder %s13, 0
      %p75 = por %p73, %p74
      %p76 = scmp.ne.s32.totalorder %s65, %s68
      %p77 = scmp.eq.s32.totalorder %s18, 3
      %p78 = por %p76, %p77
      %p79 = scmp.ne.s32.totalorder %s68, %s69
      %p80 = scmp.eq.s32.totalorder %s18, 0
      %p81 = por %p79, %p80
      %p82 = scmp.ne.s32.totalorder %s68, %s69
      %p83 = scmp.eq.s32.totalorder %s19, 3
      %p84 = por %p82, %p83
      %p86 = scmp.ne.s32.totalorder %s69, %s85
      %p87 = scmp.eq.s32.totalorder %s19, 0
      %p88 = por %p86, %p87
      %s90 = sadd.s32 %s89, 1
      %p93 = scmp.eq.s32.totalorder %s13, 3
      %p94 = scmp.ne.s32.totalorder %s89, %s91
      %p95 = scmp.eq.s32.totalorder %s13, 0
      %p96 = por %p94, %p95
      %p97 = scmp.ne.s32.totalorder %s89, %s91
      %p98 = scmp.eq.s32.totalorder %s18, 3
      %p99 = por %p97, %p98
      %p100 = scmp.ne.s32.totalorder %s91, %s92
      %p101 = scmp.eq.s32.totalorder %s18, 0
      %p102 = por %p100, %p101
      %p103 = scmp.ne.s32.totalorder %s91, %s92
      %p104 = scmp.eq.s32.totalorder %s19, 3
      %p105 = por %p103, %p104
      %p107 = scmp.ne.s32.totalorder %s92, %s106
      %p108 = scmp.eq.s32.totalorder %s19, 0
      %p109 = por %p107, %p108
      %s111 = sadd.s32 %s110, 1
      %p114 = scmp.eq.s32.totalorder %s13, 3
      %p115 = scmp.ne.s32.totalorder %s110, %s112
      %p116 = scmp.eq.s32.totalorder %s13, 0
      %p117 = por %p115, %p116
      %p118 = scmp.ne.s32.totalorder %s110, %s112
      %p119 = scmp.eq.s32.totalorder %s18, 3
      %p120 = por %p118, %p119
      %p121 = scmp.ne.s32.totalorder %s112, %s113
      %p122 = scmp.eq.s32.totalorder %s18, 0
      %p123 = por %p121, %p122
      %p124 = scmp.ne.s32.totalorder %s112, %s113
      %p125 = scmp.eq.s32.totalorder %s19, 3
      %p126 = por %p124, %p125
      %p128 = scmp.ne.s32.totalorder %s113, %s127
      %p129 = scmp.eq.s32.totalorder %s19, 0
      %p130 = por %p128, %p129
      %s131 = ssub.s32 %s20, %s32
      %s132 = ssub.s32 %s21, %s28
      %s133 = sor.u32 %s131, %s132
      %p134 = scmp.eq.s32.totalorder %s133, 0
      %s136 = sadd.s32 %s135, 1
      %s137 = scalar_select %p134, %s135, %s136
      %p140 = pneg %p134
      %p141 = scmp.eq.s32.totalorder %s13, 3
      %p142 = por %p140, %p141
      %p143 = scmp.ne.s32.totalorder %s135, %s138
      %p144 = scmp.eq.s32.totalorder %s13, 0
      %p145 = por %p143, %p144
      %p146 = scmp.ne.s32.totalorder %s135, %s138
      %p147 = scmp.eq.s32.totalorder %s18, 3
      %p148 = por %p146, %p147
      %p149 = scmp.ne.s32.totalorder %s138, %s139
      %p150 = scmp.eq.s32.totalorder %s18, 0
      %p151 = por %p149, %p150
      %p152 = scmp.ne.s32.totalorder %s138, %s139
      %p153 = scmp.eq.s32.totalorder %s19, 3
      %p154 = por %p152, %p153
      %p156 = scmp.ne.s32.totalorder %s139, %s155
      %p157 = scmp.eq.s32.totalorder %s19, 0
      %p158 = por %p156, %p157
      %p159 = scmp.le.s32.totalorder 1, %s13
      %p160 = scmp.lt.s32.totalorder %s13, 5
      %p161 = pnand %p159, %p160
      %p162 = pneg %p161
      // Predicated region
      $region9: #{tpu_custom_call.1} parent=5 // pred_check
        _
      $region10: #{tpu_custom_call.1} parent=5 // pred_check_branch
        %164 = sbr.rel (%p161) target = $region12
      $region11: #{tpu_custom_call.1} parent=5 // pred_region
        %s165 = ssub.s32 %s13, 1
        // Predicated region
        $region13: #{tpu_custom_call.1} parent=11 // pred_check
          %p166 = pneg %p102
        $region14: #{tpu_custom_call.1} parent=11 // pred_check_branch
          %168 = sbr.rel (%p166) target = $region16
        $region15: #{tpu_custom_call.1} parent=11 // pred_region
          _
        $region16: #{tpu_custom_call.1} parent=11 // pred_fallthru
          _
        // Predicated region
        $region17: #{tpu_custom_call.1} parent=11 // pred_check
          %p169 = pneg %p123
        $region18: #{tpu_custom_call.1} parent=11 // pred_check_branch
          %171 = sbr.rel (%p169) target = $region20
        $region19: #{tpu_custom_call.1} parent=11 // pred_region
          _
        $region20: #{tpu_custom_call.1} parent=11 // pred_fallthru
          _
      $region12: #{tpu_custom_call.1} parent=5 // pred_fallthru
        _
      %p172 = scmp.lt.s32.totalorder %s13, 4
      // Predicated region
      $region21: #{tpu_custom_call.1} parent=5 // pred_check
        %p173 = pneg %p172
      $region22: #{tpu_custom_call.1} parent=5 // pred_check_branch
        %175 = sbr.rel (%p173) target = $region24
      $region23: #{tpu_custom_call.1} parent=5 // pred_region
        // Predicated region
        $region25: #{tpu_custom_call.1} parent=23 // pred_check
          %p176 = pneg %p49
        $region26: #{tpu_custom_call.1} parent=23 // pred_check_branch
          %178 = sbr.rel (%p176) target = $region28
        $region27: #{tpu_custom_call.1} parent=23 // pred_region
          %s179 = sand.u32 %s39, 1
          %s180 = sand.u32 %s39, 1
          %s181 = smul.addr %s180, 32
          %s182 = scalar_lea.vmem [#allocation3], %s181
          %s183 = smul.u32 %s20, 2
          %s184 = sadd.s32 %s183, %s21
          %s185 = smul.addr %s184, 8
          %s186 = scalar_lea.vmem %s0, %s185
          // Predicated region
          $region29: #{tpu_custom_call.1} parent=27 // pred_check
            _
          $region30: #{tpu_custom_call.1} parent=27 // pred_check_branch
            %188 = sbr.rel (0) target = $region32
          $region31: #{tpu_custom_call.1} parent=27 // pred_region
            // Predicated region
            $region33: #{tpu_custom_call.1} parent=31 // pred_check
              _
            $region34: #{tpu_custom_call.1} parent=31 // pred_check_branch
              %190 = sbr.rel (0) target = $region36
            $region35: #{tpu_custom_call.1} parent=31 // pred_region
              // Predicated region
              $region48: #{tpu_custom_call.1} parent=35 // pred_check
                _
              $region49: #{tpu_custom_call.1} parent=35 // pred_check_branch
                %211 = sbr.rel (0) target = $region51
              $region50: #{tpu_custom_call.1} parent=35 // pred_region
                loop: start=0, step=1, limit=1
                $region52: #{tpu_custom_call.1} parent=50 // loop_pre_header
                  _
                $region53: #{tpu_custom_call.1} parent=50 // loop_header
                  %s213 = sphi 0, %s217
                  %p214 = scmp.ge.s32.totalorder %s213, 1
                  %s218 = sphi %s186, %s186
                  %s219 = sphi %s182, %s182
                $region54: #{tpu_custom_call.1} parent=50 // loop_header_branch
                  %216 = sbr.rel (%p214) target = $region58
                $region55: #{tpu_custom_call.1} parent=50 // loop_body
                  %v220 = vld [vmem:[%s218] sm:$0xff]
                  %221 = vst [vmem:[%s219] sm:$0xff] %v220
                  %v222 = vld [vmem:[%s218 + $0x20] sm:$0xff]
                  %223 = vst [vmem:[%s219 + $0x8] sm:$0xff] %v222
                  %v224 = vld [vmem:[%s218 + $0x40] sm:$0xff]
                  %225 = vst [vmem:[%s219 + $0x10] sm:$0xff] %v224
                  %v226 = vld [vmem:[%s218 + $0x60] sm:$0xff]
                  %227 = vst [vmem:[%s219 + $0x18] sm:$0xff] %v226
                $region56: #{tpu_custom_call.1} parent=50 // loop_footer
                  %s217 = sadd.s32 1, %s213
                $region57: #{tpu_custom_call.1} parent=50 // loop_footer_branch
                  %212 = sbr.rel target = $region53
                $region58: #{tpu_custom_call.1} parent=50 // loop_exit
                  _
              $region51: #{tpu_custom_call.1} parent=35 // pred_fallthru
                _
              // Predicated region
              $region59: #{tpu_custom_call.1} parent=35 // pred_check
                _
              $region60: #{tpu_custom_call.1} parent=35 // pred_check_branch
                %229 = sbr.rel target = $region62
              $region61: #{tpu_custom_call.1} parent=35 // pred_region
                _
              $region62: #{tpu_custom_call.1} parent=35 // pred_fallthru
                _
            $region36: #{tpu_custom_call.1} parent=31 // pred_fallthru
              _
            // Predicated region
            $region37: #{tpu_custom_call.1} parent=31 // pred_check
              _
            $region38: #{tpu_custom_call.1} parent=31 // pred_check_branch
              %192 = sbr.rel target = $region40
            $region39: #{tpu_custom_call.1} parent=31 // pred_region
              loop: start=0, step=1, limit=1
              $region41: #{tpu_custom_call.1} parent=39 // loop_pre_header
                _
              $region42: #{tpu_custom_call.1} parent=39 // loop_header
                %s195 = sphi 0, %s199
                %p196 = scmp.ge.s32.totalorder %s195, 1
                %s200 = sphi %s186, %s186
                %s201 = sphi %s182, %s182
              $region43: #{tpu_custom_call.1} parent=39 // loop_header_branch
                %198 = sbr.rel (%p196) target = $region47
              $region44: #{tpu_custom_call.1} parent=39 // loop_body
                %v202 = vld [vmem:[%s200] sm:$0xff]
                %203 = vst [vmem:[%s201] sm:$0xff] %v202
                %v204 = vld [vmem:[%s200 + $0x20] sm:$0xff]
                %205 = vst [vmem:[%s201 + $0x8] sm:$0xff] %v204
                %v206 = vld [vmem:[%s200 + $0x40] sm:$0xff]
                %207 = vst [vmem:[%s201 + $0x10] sm:$0xff] %v206
                %v208 = vld [vmem:[%s200 + $0x60] sm:$0xff]
                %209 = vst [vmem:[%s201 + $0x18] sm:$0xff] %v208
              $region45: #{tpu_custom_call.1} parent=39 // loop_footer
                %s199 = sadd.s32 1, %s195
              $region46: #{tpu_custom_call.1} parent=39 // loop_footer_branch
                %194 = sbr.rel target = $region42
              $region47: #{tpu_custom_call.1} parent=39 // loop_exit
                _
            $region40: #{tpu_custom_call.1} parent=31 // pred_fallthru
              _
          $region32: #{tpu_custom_call.1} parent=27 // pred_fallthru
            _
          %230 = vnop
        $region28: #{tpu_custom_call.1} parent=23 // pred_fallthru
          _
        // Predicated region
        $region63: #{tpu_custom_call.1} parent=23 // pred_check
          %p231 = pneg %p75
        $region64: #{tpu_custom_call.1} parent=23 // pred_check_branch
          %233 = sbr.rel (%p231) target = $region66
        $region65: #{tpu_custom_call.1} parent=23 // pred_region
          %p234 = scmp.lt.s32.totalorder %s20, 1
          %s235 = scalar_select %p234, %s20, 1
          %s236 = smul.addr %s235, 32
          %s237 = smul.addr %s236, 4
          %s238 = scalar_lea.vmem %s1, %s237
        $region66: #{tpu_custom_call.1} parent=23 // pred_fallthru
          _
      $region24: #{tpu_custom_call.1} parent=5 // pred_fallthru
        _
      %p239 = scmp.le.s32.totalorder 1, %s13
      %p240 = scmp.lt.s32.totalorder %s13, 5
      %p241 = pnand %p239, %p240
      %p242 = pneg %p241
      // Predicated region
      $region67: #{tpu_custom_call.1} parent=5 // pred_check
        _
      $region68: #{tpu_custom_call.1} parent=5 // pred_check_branch
        %244 = sbr.rel (%p241) target = $region70
      $region69: #{tpu_custom_call.1} parent=5 // pred_region
        %s245 = ssub.s32 %s13, 1
        %s246 = sand.u32 %s42, 1
        %s247 = sand.u32 %s42, 1
        %s248 = smul.addr %s247, 32
        %s249 = scalar_lea.vmem [#allocation3], %s248
        // Predicated region
        $region71: #{tpu_custom_call.1} parent=69 // pred_check
          %p250 = pneg %p55
        $region72: #{tpu_custom_call.1} parent=69 // pred_check_branch
          %252 = sbr.rel (%p250) target = $region74
        $region73: #{tpu_custom_call.1} parent=69 // pred_region
          _
        $region74: #{tpu_custom_call.1} parent=69 // pred_fallthru
          _
        %s253 = sand.u32 %s42, 1
        %s254 = sand.u32 %s42, 1
        %s255 = smul.addr %s254, 32
        %s256 = scalar_lea.vmem [#allocation3], %s255
        %p257 = pneg %p55
        %p258 = pneg %p52
        %p259 = scmp.lt.s32.totalorder %s22, 1
        %s260 = scalar_select %p259, %s22, 1
        %s261 = smul.addr %s260, 32
        %s262 = smul.addr %s261, 4
        %s263 = scalar_lea.vmem %s1, %s262
        %p264 = pneg %p81
        %p265 = pneg %p78
        %p266 = pneg %p102
        %p267 = pneg %p99
        %p268 = pneg %p123
        %p269 = pneg %p120
        %p270 = pneg %p151
        %p271 = pneg %p148
        %s272 = sand.u32 %s138, 1
        %s273 = scalar_lea.sflag [#allocation5], %s272
        %s274 = sand.u32 %s138, 1
        %s275 = smul.addr %s274, 8
        %s276 = scalar_lea.vmem [#allocation4], %s275
        %s277 = smul.u32 %s22, 2
        %s278 = sadd.s32 %s277, %s23
        %p279 = scmp.lt.s32.totalorder %s22, 1
        %s280 = scalar_select %p279, %s22, 1
        %s281 = smul.addr %s280, 32
        %s282 = smul.addr %s281, 4
        %s283 = scalar_lea.vmem %s1, %s282
        %v285 = vlaneseq
        %v286 = vshrl.u32 %v285, 7
        %v287 = vadd.s32 %v286, 8
        %v288 = vcvt.s32.f32 %v286
        %v289 = vcvt.s32.f32 %v287
        %v290 = vld [vmem:[%s283] sm:$0xf]
        %v291 = vld [vmem:[%s283 + $0x4] sm:$0xf]
        %v292 = vld [vmem:[%s283 + $0x8] sm:$0xf]
        %v293 = vld [vmem:[%s283 + $0xc] sm:$0xf]
        %v294 = vld [vmem:[%s283 + $0x10] sm:$0xf]
        %v295 = vld [vmem:[%s283 + $0x14] sm:$0xf]
        %v296 = vld [vmem:[%s283 + $0x18] sm:$0xf]
        %v297 = vld [vmem:[%s283 + $0x1c] sm:$0xf]
        %v298 = vld [vmem:[%s283 + $0x20] sm:$0xf]
        %v299 = vld [vmem:[%s283 + $0x24] sm:$0xf]
        %v300 = vld [vmem:[%s283 + $0x28] sm:$0xf]
        %v301 = vld [vmem:[%s283 + $0x2c] sm:$0xf]
        %v302 = vld [vmem:[%s283 + $0x30] sm:$0xf]
        %v303 = vld [vmem:[%s283 + $0x34] sm:$0xf]
        %v304 = vld [vmem:[%s283 + $0x38] sm:$0xf]
        %v305 = vld [vmem:[%s283 + $0x3c] sm:$0xf]
        %v306 = vld [vmem:[%s283 + $0x40] sm:$0xf]
        %v307 = vld [vmem:[%s283 + $0x44] sm:$0xf]
        %v308 = vld [vmem:[%s283 + $0x48] sm:$0xf]
        %v309 = vld [vmem:[%s283 + $0x4c] sm:$0xf]
        %v310 = vld [vmem:[%s283 + $0x50] sm:$0xf]
        %v311 = vld [vmem:[%s283 + $0x54] sm:$0xf]
        %v312 = vld [vmem:[%s283 + $0x58] sm:$0xf]
        %v313 = vld [vmem:[%s283 + $0x5c] sm:$0xf]
        %v314 = vld [vmem:[%s283 + $0x60] sm:$0xf]
        %v315 = vld [vmem:[%s283 + $0x64] sm:$0xf]
        %v316 = vld [vmem:[%s283 + $0x68] sm:$0xf]
        %v317 = vld [vmem:[%s283 + $0x6c] sm:$0xf]
        %v318 = vld [vmem:[%s283 + $0x70] sm:$0xf]
        %v319 = vld [vmem:[%s283 + $0x74] sm:$0xf]
        %v320 = vld [vmem:[%s283 + $0x78] sm:$0xf]
        %v321 = vld [vmem:[%s283 + $0x7c] sm:$0xf]
        %v322 = vld [vmem:[%s249 + $0x12] sm:$0xff]
        %v323 = vld [vmem:[%s249 + $0x1a] sm:$0x1]
        %v324 = vsub.f32 0.0, %v322
        %v325 = vsub.f32 0.0, %v323
        %v326 = vmul.f32 %v324, 1.442695
        %v327 = vpow.pop %v326
        %v328 = vmul.f32 %v325, 1.442695
        %v329 = vpow.pop %v328
        %v330 = vadd.f32 %v327, 1.0
        %v331 = vadd.f32 %v329, 1.0
        %v332 = vrcp.pop %v330
        %v333 = vrcp.pop %v331
        %v334 = vld [vmem:[%s249] sm:$0x1]
        %v335 = vld [vmem:[%s249 + $0x9] sm:$0x1]
        %v336 = vlaneseq
        %v337 = vshrl.u32 %v336, 7
        %v338 = vsub.s32 0, %v337
        %v339 = vrot.slane %v334, %v338
        %v340 = vsub.f32 %v339, %v288
        %v341 = vsub.f32 %v339, %v289
        %v342 = vand.u32 2147483647, %v340
        %v343 = vand.u32 2147483647, %v341
        %v344 = vsub.f32 1.0, %v342
        %v345 = vsub.f32 1.0, %v343
        %v346 = vmax.f32 %v344, 0.0
        %v347 = vmax.f32 %v345, 0.0
        %v348 = vlaneseq
        %v349 = vshrl.u32 %v348, 7
        %v350 = vsub.s32 0, %v349
        %v351 = vrot.slane %v332, %v350
        %v352 = vmul.f32 %v346, %v351
        %v353 = vmul.f32 %v347, %v351
        %v354 = vlaneseq
        %v355 = vshrl.u32 %v354, 7
        %v356 = vsub.s32 0, %v355
        %v357 = vrot.slane %v335, %v356
        %v358 = vsub.f32 %v357, %v288
        %v359 = vsub.f32 %v357, %v289
        %v360 = vand.u32 2147483647, %v358
        %v361 = vand.u32 2147483647, %v359
        %v362 = vsub.f32 1.0, %v360
        %v363 = vsub.f32 1.0, %v361
        %v364 = vmax.f32 %v362, 0.0
        %v365 = vmax.f32 %v363, 0.0
        %v366 = vpack.c.bf16 %v365, %v364
        %v399 = vunpack.c.l.b16 %v290
        %v400 = vunpack.c.l.b16 %v291
        %v401 = vunpack.c.l.b16 %v292
        %v402 = vunpack.c.l.b16 %v293
        %v403 = vunpack.c.l.b16 %v294
        %v404 = vunpack.c.l.b16 %v295
        %v405 = vunpack.c.l.b16 %v296
        %v406 = vunpack.c.l.b16 %v297
        %v407 = vunpack.c.l.b16 %v298
        %v408 = vunpack.c.l.b16 %v299
        %v409 = vunpack.c.l.b16 %v300
        %v410 = vunpack.c.l.b16 %v301
        %v411 = vunpack.c.l.b16 %v302
        %v412 = vunpack.c.l.b16 %v303
        %v413 = vunpack.c.l.b16 %v304
        %v414 = vunpack.c.l.b16 %v305
        %v415 = vunpack.c.l.b16 %v306
        %v416 = vunpack.c.l.b16 %v307
        %v417 = vunpack.c.l.b16 %v308
        %v418 = vunpack.c.l.b16 %v309
        %v419 = vunpack.c.l.b16 %v310
        %v420 = vunpack.c.l.b16 %v311
        %v421 = vunpack.c.l.b16 %v312
        %v422 = vunpack.c.l.b16 %v313
        %v423 = vunpack.c.l.b16 %v314
        %v424 = vunpack.c.l.b16 %v315
        %v425 = vunpack.c.l.b16 %v316
        %v426 = vunpack.c.l.b16 %v317
        %v427 = vunpack.c.l.b16 %v318
        %v428 = vunpack.c.l.b16 %v319
        %v429 = vunpack.c.l.b16 %v320
        %v430 = vunpack.c.l.b16 %v321
        %v431 = vpack.c.b16 %v400, %v399
        %v432 = vpack.c.b16 %v402, %v401
        %v433 = vpack.c.b16 %v404, %v403
        %v434 = vpack.c.b16 %v406, %v405
        %v435 = vpack.c.b16 %v408, %v407
        %v436 = vpack.c.b16 %v410, %v409
        %v437 = vpack.c.b16 %v412, %v411
        %v438 = vpack.c.b16 %v414, %v413
        %v439 = vpack.c.b16 %v416, %v415
        %v440 = vpack.c.b16 %v418, %v417
        %v441 = vpack.c.b16 %v420, %v419
        %v442 = vpack.c.b16 %v422, %v421
        %v443 = vpack.c.b16 %v424, %v423
        %v444 = vpack.c.b16 %v426, %v425
        %v445 = vpack.c.b16 %v428, %v427
        %v446 = vpack.c.b16 %v430, %v429
        %vm447 = vcmask 130048
        %v449 = vsel %vm447, %v431, 0
        %v452 = vsel %vm447, %v432, 0
        %v455 = vsel %vm447, %v433, 0
        %v458 = vsel %vm447, %v434, 0
        %v461 = vsel %vm447, %v435, 0
        %v464 = vsel %vm447, %v436, 0
        %v467 = vsel %vm447, %v437, 0
        %v470 = vsel %vm447, %v438, 0
        %v473 = vsel %vm447, %v439, 0
        %v476 = vsel %vm447, %v440, 0
        %v479 = vsel %vm447, %v441, 0
        %v482 = vsel %vm447, %v442, 0
        %v485 = vsel %vm447, %v443, 0
        %v488 = vsel %vm447, %v444, 0
        %v491 = vsel %vm447, %v445, 0
        %v494 = vsel %vm447, %v446, 0
        %496 = vmatprep.subr.bf16.mxu0 0
        %497 = vmatpush1.bf16.msra.mxu0 %v366
        %498 = vmatprep.subr.bf16.mxu0 0
        %499 = vmatpush1.bf16.msra.mxu0 0
        %500 = vmatprep.subr.bf16.mxu0 0
        %501 = vmatpush1.bf16.msra.mxu0 0
        %502 = vmatprep.subr.bf16.mxu0 0
        %503 = vmatpush1.bf16.msra.mxu0 0
        %504 = vmatprep.subr.bf16.mxu0 0
        %505 = vmatpush1.bf16.msra.mxu0 0
        %506 = vmatprep.subr.bf16.mxu0 0
        %507 = vmatpush1.bf16.msra.mxu0 0
        %508 = vmatprep.subr.bf16.mxu0 0
        %509 = vmatpush1.bf16.msra.mxu0 0
        %510 = vmatprep.subr.bf16.mxu0 0
        %511 = vmatpush1.bf16.msra.mxu0 0
        %512 = vmatprep.subr.bf16.mxu0 0
        %513 = vmatpush1.bf16.msra.mxu0 0
        %514 = vmatprep.subr.bf16.mxu0 0
        %515 = vmatpush1.bf16.msra.mxu0 0
        %516 = vmatprep.subr.bf16.mxu0 0
        %517 = vmatpush1.bf16.msra.mxu0 0
        %518 = vmatprep.subr.bf16.mxu0 0
        %519 = vmatpush1.bf16.msra.mxu0 0
        %520 = vmatprep.subr.bf16.mxu0 0
        %521 = vmatpush1.bf16.msra.mxu0 0
        %522 = vmatprep.subr.bf16.mxu0 0
        %523 = vmatpush1.bf16.msra.mxu0 0
        %524 = vmatprep.subr.bf16.mxu0 0
        %525 = vmatpush1.bf16.msra.mxu0 0
        %526 = vmatprep.subr.bf16.mxu0 0
        %527 = vmatpush1.bf16.msra.mxu0 0
        %528 = vmatprep.mubr.bf16.mxu0 0
        %529 = vmatmul.mubr.bf16.gmra.mrb[0].mxu0 %v449
        %v530 = vpop.f32.mrb[0].mxu0
        %v531 = vadd.f32 0.0, %v530
        %v532 = vpop.f32.mrb[0].mxu0
        %v533 = vpop.f32.mrb[0].mxu0
        %v534 = vadd.f32 0.0, %v533
        %v535 = vpop.f32.mrb[0].mxu0
        %536 = vmatprep.mubr.bf16.mxu0 0
        %537 = vmatmul.mubr.bf16.gmra.mrb[0].mxu0 %v452
        %v538 = vpop.f32.mrb[0].mxu0
        %v539 = vadd.f32 0.0, %v538
        %v540 = vpop.f32.mrb[0].mxu0
        %v541 = vpop.f32.mrb[0].mxu0
        %v542 = vadd.f32 0.0, %v541
        %v543 = vpop.f32.mrb[0].mxu0
        %544 = vmatprep.mubr.bf16.mxu0 0
        %545 = vmatmul.mubr.bf16.gmra.mrb[0].mxu0 %v455
        %v546 = vpop.f32.mrb[0].mxu0
        %v547 = vadd.f32 0.0, %v546
        %v548 = vpop.f32.mrb[0].mxu0
        %v549 = vpop.f32.mrb[0].mxu0
        %v550 = vadd.f32 0.0, %v549
        %v551 = vpop.f32.mrb[0].mxu0
        %552 = vmatprep.mubr.bf16.mxu0 0
        %553 = vmatmul.mubr.bf16.gmra.mrb[0].mxu0 %v458
        %v554 = vpop.f32.mrb[0].mxu0
        %v555 = vadd.f32 0.0, %v554
        %v556 = vpop.f32.mrb[0].mxu0
        %v557 = vpop.f32.mrb[0].mxu0
        %v558 = vadd.f32 0.0, %v557
        %v559 = vpop.f32.mrb[0].mxu0
        %560 = vmatprep.mubr.bf16.mxu0 0
        %561 = vmatmul.mubr.bf16.gmra.mrb[0].mxu0 %v461
        %v562 = vpop.f32.mrb[0].mxu0
        %v563 = vadd.f32 0.0, %v562
        %v564 = vpop.f32.mrb[0].mxu0
        %v565 = vpop.f32.mrb[0].mxu0
        %v566 = vadd.f32 0.0, %v565
        %v567 = vpop.f32.mrb[0].mxu0
        %568 = vmatprep.mubr.bf16.mxu0 0
        %569 = vmatmul.mubr.bf16.gmra.mrb[0].mxu0 %v464
        %v570 = vpop.f32.mrb[0].mxu0
        %v571 = vadd.f32 0.0, %v570
        %v572 = vpop.f32.mrb[0].mxu0
        %v573 = vpop.f32.mrb[0].mxu0
        %v574 = vadd.f32 0.0, %v573
        %v575 = vpop.f32.mrb[0].mxu0
        %576 = vmatprep.mubr.bf16.mxu0 0
        %577 = vmatmul.mubr.bf16.gmra.mrb[0].mxu0 %v467
        %v578 = vpop.f32.mrb[0].mxu0
        %v579 = vadd.f32 0.0, %v578
        %v580 = vpop.f32.mrb[0].mxu0
        %v581 = vpop.f32.mrb[0].mxu0
        %v582 = vadd.f32 0.0, %v581
        %v583 = vpop.f32.mrb[0].mxu0
        %584 = vmatprep.mubr.bf16.mxu0 0
        %585 = vmatmul.mubr.bf16.gmra.mrb[0].mxu0 %v470
        %v586 = vpop.f32.mrb[0].mxu0
        %v587 = vadd.f32 0.0, %v586
        %v588 = vpop.f32.mrb[0].mxu0
        %v589 = vpop.f32.mrb[0].mxu0
        %v590 = vadd.f32 0.0, %v589
        %v591 = vpop.f32.mrb[0].mxu0
        %592 = vmatprep.mubr.bf16.mxu0 0
        %593 = vmatmul.mubr.bf16.gmra.mrb[0].mxu0 %v473
        %v594 = vpop.f32.mrb[0].mxu0
        %v595 = vadd.f32 0.0, %v594
        %v596 = vpop.f32.mrb[0].mxu0
        %v597 = vpop.f32.mrb[0].mxu0
        %v598 = vadd.f32 0.0, %v597
        %v599 = vpop.f32.mrb[0].mxu0
        %600 = vmatprep.mubr.bf16.mxu0 0
        %601 = vmatmul.mubr.bf16.gmra.mrb[0].mxu0 %v476
        %v602 = vpop.f32.mrb[0].mxu0
        %v603 = vadd.f32 0.0, %v602
        %v604 = vpop.f32.mrb[0].mxu0
        %v605 = vpop.f32.mrb[0].mxu0
        %v606 = vadd.f32 0.0, %v605
        %v607 = vpop.f32.mrb[0].mxu0
        %608 = vmatprep.mubr.bf16.mxu0 0
        %609 = vmatmul.mubr.bf16.gmra.mrb[0].mxu0 %v479
        %v610 = vpop.f32.mrb[0].mxu0
        %v611 = vadd.f32 0.0, %v610
        %v612 = vpop.f32.mrb[0].mxu0
        %v613 = vpop.f32.mrb[0].mxu0
        %v614 = vadd.f32 0.0, %v613
        %v615 = vpop.f32.mrb[0].mxu0
        %616 = vmatprep.mubr.bf16.mxu0 0
        %617 = vmatmul.mubr.bf16.gmra.mrb[0].mxu0 %v482
        %v618 = vpop.f32.mrb[0].mxu0
        %v619 = vadd.f32 0.0, %v618
        %v620 = vpop.f32.mrb[0].mxu0
        %v621 = vpop.f32.mrb[0].mxu0
        %v622 = vadd.f32 0.0, %v621
        %v623 = vpop.f32.mrb[0].mxu0
        %624 = vmatprep.mubr.bf16.mxu0 0
        %625 = vmatmul.mubr.bf16.gmra.mrb[0].mxu0 %v485
        %v626 = vpop.f32.mrb[0].mxu0
        %v627 = vadd.f32 0.0, %v626
        %v628 = vpop.f32.mrb[0].mxu0
        %v629 = vpop.f32.mrb[0].mxu0
        %v630 = vadd.f32 0.0, %v629
        %v631 = vpop.f32.mrb[0].mxu0
        %632 = vmatprep.mubr.bf16.mxu0 0
        %633 = vmatmul.mubr.bf16.gmra.mrb[0].mxu0 %v488
        %v634 = vpop.f32.mrb[0].mxu0
        %v635 = vadd.f32 0.0, %v634
        %v636 = vpop.f32.mrb[0].mxu0
        %v637 = vpop.f32.mrb[0].mxu0
        %v638 = vadd.f32 0.0, %v637
        %v639 = vpop.f32.mrb[0].mxu0
        %640 = vmatprep.mubr.bf16.mxu0 0
        %641 = vmatmul.mubr.bf16.gmra.mrb[0].mxu0 %v491
        %v642 = vpop.f32.mrb[0].mxu0
        %v643 = vadd.f32 0.0, %v642
        %v644 = vpop.f32.mrb[0].mxu0
        %v645 = vpop.f32.mrb[0].mxu0
        %v646 = vadd.f32 0.0, %v645
        %v647 = vpop.f32.mrb[0].mxu0
        %648 = vmatprep.mubr.bf16.mxu0 0
        %649 = vmatmul.mubr.bf16.gmra.mrb[0].mxu0 %v494
        %v650 = vpop.f32.mrb[0].mxu0
        %v651 = vadd.f32 0.0, %v650
        %v652 = vpop.f32.mrb[0].mxu0
        %v653 = vpop.f32.mrb[0].mxu0
        %v654 = vadd.f32 0.0, %v653
        %v655 = vpop.f32.mrb[0].mxu0
        %656 = vdwg.mxu0
        %v657 = vmul.f32 %v531, %v352
        %v658 = vmul.f32 %v534, %v353
        %v659 = vmul.f32 %v539, %v352
        %v660 = vmul.f32 %v542, %v353
        %v661 = vmul.f32 %v547, %v352
        %v662 = vmul.f32 %v550, %v353
        %v663 = vmul.f32 %v555, %v352
        %v664 = vmul.f32 %v558, %v353
        %v665 = vmul.f32 %v563, %v352
        %v666 = vmul.f32 %v566, %v353
        %v667 = vmul.f32 %v571, %v352
        %v668 = vmul.f32 %v574, %v353
        %v669 = vmul.f32 %v579, %v352
        %v670 = vmul.f32 %v582, %v353
        %v671 = vmul.f32 %v587, %v352
        %v672 = vmul.f32 %v590, %v353
        %v673 = vmul.f32 %v595, %v352
        %v674 = vmul.f32 %v598, %v353
        %v675 = vmul.f32 %v603, %v352
        %v676 = vmul.f32 %v606, %v353
        %v677 = vmul.f32 %v611, %v352
        %v678 = vmul.f32 %v614, %v353
        %v679 = vmul.f32 %v619, %v352
        %v680 = vmul.f32 %v622, %v353
        %v681 = vmul.f32 %v627, %v352
        %v682 = vmul.f32 %v630, %v353
        %v683 = vmul.f32 %v635, %v352
        %v684 = vmul.f32 %v638, %v353
        %v685 = vmul.f32 %v643, %v352
        %v686 = vmul.f32 %v646, %v353
        %v687 = vmul.f32 %v651, %v352
        %v688 = vmul.f32 %v654, %v353
        %v689 = vadd.f32 %v657, %v658
        %v690 = vrot.slane %v689, 4
        %v691 = vadd.f32 %v689, %v690
        %v692 = vrot.slane %v691, 2
        %v693 = vadd.f32 %v691, %v692
        %v694 = vrot.slane %v693, 1
        %v695 = vadd.f32 %v693, %v694
        %v696 = vadd.f32 %v659, %v660
        %v697 = vrot.slane %v696, 4
        %v698 = vadd.f32 %v696, %v697
        %v699 = vrot.slane %v698, 2
        %v700 = vadd.f32 %v698, %v699
        %v701 = vrot.slane %v700, 1
        %v702 = vadd.f32 %v700, %v701
        %v703 = vadd.f32 %v661, %v662
        %v704 = vrot.slane %v703, 4
        %v705 = vadd.f32 %v703, %v704
        %v706 = vrot.slane %v705, 2
        %v707 = vadd.f32 %v705, %v706
        %v708 = vrot.slane %v707, 1
        %v709 = vadd.f32 %v707, %v708
        %v710 = vadd.f32 %v663, %v664
        %v711 = vrot.slane %v710, 4
        %v712 = vadd.f32 %v710, %v711
        %v713 = vrot.slane %v712, 2
        %v714 = vadd.f32 %v712, %v713
        %v715 = vrot.slane %v714, 1
        %v716 = vadd.f32 %v714, %v715
        %v717 = vadd.f32 %v665, %v666
        %v718 = vrot.slane %v717, 4
        %v719 = vadd.f32 %v717, %v718
        %v720 = vrot.slane %v719, 2
        %v721 = vadd.f32 %v719, %v720
        %v722 = vrot.slane %v721, 1
        %v723 = vadd.f32 %v721, %v722
        %v724 = vadd.f32 %v667, %v668
        %v725 = vrot.slane %v724, 4
        %v726 = vadd.f32 %v724, %v725
        %v727 = vrot.slane %v726, 2
        %v728 = vadd.f32 %v726, %v727
        %v729 = vrot.slane %v728, 1
        %v730 = vadd.f32 %v728, %v729
        %v731 = vadd.f32 %v669, %v670
        %v732 = vrot.slane %v731, 4
        %v733 = vadd.f32 %v731, %v732
        %v734 = vrot.slane %v733, 2
        %v735 = vadd.f32 %v733, %v734
        %v736 = vrot.slane %v735, 1
        %v737 = vadd.f32 %v735, %v736
        %v738 = vadd.f32 %v671, %v672
        %v739 = vrot.slane %v738, 4
        %v740 = vadd.f32 %v738, %v739
        %v741 = vrot.slane %v740, 2
        %v742 = vadd.f32 %v740, %v741
        %v743 = vrot.slane %v742, 1
        %v744 = vadd.f32 %v742, %v743
        %v745 = vadd.f32 %v673, %v674
        %v746 = vrot.slane %v745, 4
        %v747 = vadd.f32 %v745, %v746
        %v748 = vrot.slane %v747, 2
        %v749 = vadd.f32 %v747, %v748
        %v750 = vrot.slane %v749, 1
        %v751 = vadd.f32 %v749, %v750
        %v752 = vadd.f32 %v675, %v676
        %v753 = vrot.slane %v752, 4
        %v754 = vadd.f32 %v752, %v753
        %v755 = vrot.slane %v754, 2
        %v756 = vadd.f32 %v754, %v755
        %v757 = vrot.slane %v756, 1
        %v758 = vadd.f32 %v756, %v757
        %v759 = vadd.f32 %v677, %v678
        %v760 = vrot.slane %v759, 4
        %v761 = vadd.f32 %v759, %v760
        %v762 = vrot.slane %v761, 2
        %v763 = vadd.f32 %v761, %v762
        %v764 = vrot.slane %v763, 1
        %v765 = vadd.f32 %v763, %v764
        %v766 = vadd.f32 %v679, %v680
        %v767 = vrot.slane %v766, 4
        %v768 = vadd.f32 %v766, %v767
        %v769 = vrot.slane %v768, 2
        %v770 = vadd.f32 %v768, %v769
        %v771 = vrot.slane %v770, 1
        %v772 = vadd.f32 %v770, %v771
        %v773 = vadd.f32 %v681, %v682
        %v774 = vrot.slane %v773, 4
        %v775 = vadd.f32 %v773, %v774
        %v776 = vrot.slane %v775, 2
        %v777 = vadd.f32 %v775, %v776
        %v778 = vrot.slane %v777, 1
        %v779 = vadd.f32 %v777, %v778
        %v780 = vadd.f32 %v683, %v684
        %v781 = vrot.slane %v780, 4
        %v782 = vadd.f32 %v780, %v781
        %v783 = vrot.slane %v782, 2
        %v784 = vadd.f32 %v782, %v783
        %v785 = vrot.slane %v784, 1
        %v786 = vadd.f32 %v784, %v785
        %v787 = vadd.f32 %v685, %v686
        %v788 = vrot.slane %v787, 4
        %v789 = vadd.f32 %v787, %v788
        %v790 = vrot.slane %v789, 2
        %v791 = vadd.f32 %v789, %v790
        %v792 = vrot.slane %v791, 1
        %v793 = vadd.f32 %v791, %v792
        %v794 = vadd.f32 %v687, %v688
        %v795 = vrot.slane %v794, 4
        %v796 = vadd.f32 %v794, %v795
        %v797 = vrot.slane %v796, 2
        %v798 = vadd.f32 %v796, %v797
        %v799 = vrot.slane %v798, 1
        %v800 = vadd.f32 %v798, %v799
        %v801 = vpack.c.bf16 %v695, %v695
        %v802 = vpack.c.bf16 %v702, %v702
        %v803 = vpack.c.bf16 %v709, %v709
        %v804 = vpack.c.bf16 %v716, %v716
        %v805 = vpack.c.bf16 %v723, %v723
        %v806 = vpack.c.bf16 %v730, %v730
        %v807 = vpack.c.bf16 %v737, %v737
        %v808 = vpack.c.bf16 %v744, %v744
        %v809 = vpack.c.bf16 %v751, %v751
        %v810 = vpack.c.bf16 %v758, %v758
        %v811 = vpack.c.bf16 %v765, %v765
        %v812 = vpack.c.bf16 %v772, %v772
        %v813 = vpack.c.bf16 %v779, %v779
        %v814 = vpack.c.bf16 %v786, %v786
        %v815 = vpack.c.bf16 %v793, %v793
        %v816 = vpack.c.bf16 %v800, %v800
        %v833 = vunpack.c.l.b16 %v801
        %v834 = vunpack.c.l.b16 %v802
        %v835 = vunpack.c.l.b16 %v803
        %v836 = vunpack.c.l.b16 %v804
        %v837 = vunpack.c.l.b16 %v805
        %v838 = vunpack.c.l.b16 %v806
        %v839 = vunpack.c.l.b16 %v807
        %v840 = vunpack.c.l.b16 %v808
        %v841 = vunpack.c.l.b16 %v809
        %v842 = vunpack.c.l.b16 %v810
        %v843 = vunpack.c.l.b16 %v811
        %v844 = vunpack.c.l.b16 %v812
        %v845 = vunpack.c.l.b16 %v813
        %v846 = vunpack.c.l.b16 %v814
        %v847 = vunpack.c.l.b16 %v815
        %v848 = vunpack.c.l.b16 %v816
        %vm849 = vcmask 1041409
        %v850 = vsel %vm849, %v834, %v833
        %vm851 = vcmask 1042434
        %v852 = vsel %vm851, %v835, %v850
        %vm853 = vcmask 1043459
        %v854 = vsel %vm853, %v836, %v852
        %vm855 = vcmask 1044484
        %v856 = vsel %vm855, %v837, %v854
        %vm857 = vcmask 1045509
        %v858 = vsel %vm857, %v838, %v856
        %vm859 = vcmask 1046534
        %v860 = vsel %vm859, %v839, %v858
        %vm861 = vcmask 1047559
        %v862 = vsel %vm861, %v840, %v860
        %v863 = vsel %vm849, %v842, %v841
        %v864 = vsel %vm851, %v843, %v863
        %v865 = vsel %vm853, %v844, %v864
        %v866 = vsel %vm855, %v845, %v865
        %v867 = vsel %vm857, %v846, %v866
        %v868 = vsel %vm859, %v847, %v867
        %v869 = vsel %vm861, %v848, %v868
        %v870 = vpack.c.b16 %v869, %v862
        %872 = vst [vmem:[#allocation2] sm:$0xff] %v870
        %v873 = vld [vmem:[%s249 + $0x1] sm:$0x1]
        %v874 = vld [vmem:[%s249 + $0xa] sm:$0x1]
        %v875 = vlaneseq
        %v876 = vshrl.u32 %v875, 7
        %v877 = vsub.s32 0, %v876
        %v878 = vrot.slane %v873, %v877
        %v879 = vsub.f32 %v878, %v288
        %v880 = vsub.f32 %v878, %v289
        %v881 = vand.u32 2147483647, %v879
        %v882 = vand.u32 2147483647, %v880
        %v883 = vsub.f32 1.0, %v881
        %v884 = vsub.f32 1.0, %v882
        %v885 = vmax.f32 %v883, 0.0
        %v886 = vmax.f32 %v884, 0.0
        %v887 = vlaneseq
        %v888 = vshrl.u32 %v887, 7
        %v889 = vsub.s32 1, %v888
        %v890 = vrot.slane %v332, %v889
        %v891 = vmul.f32 %v885, %v890
        %v892 = vmul.f32 %v886, %v890
        %v893 = vlaneseq
        %v894 = vshrl.u32 %v893, 7
        %v895 = vsub.s32 0, %v894
        %v896 = vrot.slane %v874, %v895
        %v897 = vsub.f32 %v896, %v288
        %v898 = vsub.f32 %v896, %v289
        %v899 = vand.u32 2147483647, %v897
        %v900 = vand.u32 2147483647, %v898
        %v901 = vsub.f32 1.0, %v899
        %v902 = vsub.f32 1.0, %v900
        %v903 = vmax.f32 %v901, 0.0
        %v904 = vmax.f32 %v902, 0.0
        %v905 = vpack.c.bf16 %v904, %v903
        %906 = vmatprep.subr.bf16.mxu0 0
        %907 = vmatpush1.bf16.msra.mxu0 %v905
        %908 = vmatprep.subr.bf16.mxu0 0
        %909 = vmatpush1.bf16.msra.mxu0 0
        %910 = vmatprep.subr.bf16.mxu0 0
        %911 = vmatpush1.bf16.msra.mxu0 0
        %912 = vmatprep.subr.bf16.mxu0 0
        %913 = vmatpush1.bf16.msra.mxu0 0
        %914 = vmatprep.subr.bf16.mxu0 0
        %915 = vmatpush1.bf16.msra.mxu0 0
        %916 = vmatprep.subr.bf16.mxu0 0
        %917 = vmatpush1.bf16.msra.mxu0 0
        %918 = vmatprep.subr.bf16.mxu0 0
        %919 = vmatpush1.bf16.msra.mxu0 0
        %920 = vmatprep.subr.bf16.mxu0 0
        %921 = vmatpush1.bf16.msra.mxu0 0
        %922 = vmatprep.subr.bf16.mxu0 0
        %923 = vmatpush1.bf16.msra.mxu0 0
        %924 = vmatprep.subr.bf16.mxu0 0
        %925 = vmatpush1.bf16.msra.mxu0 0
        %926 = vmatprep.subr.bf16.mxu0 0
        %927 = vmatpush1.bf16.msra.mxu0 0
        %928 = vmatprep.subr.bf16.mxu0 0
        %929 = vmatpush1.bf16.msra.mxu0 0
        %930 = vmatprep.subr.bf16.mxu0 0
        %931 = vmatpush1.bf16.msra.mxu0 0
        %932 = vmatprep.subr.bf16.mxu0 0
        %933 = vmatpush1.bf16.msra.mxu0 0
        %934 = vmatprep.subr.bf16.mxu0 0
        %935 = vmatpush1.bf16.msra.mxu0 0
        %936 = vmatprep.subr.bf16.mxu0 0
        %937 = vmatpush1.bf16.msra.mxu0 0
        %938 = vmatprep.mubr.bf16.mxu0 0
        %939 = vmatmul.mubr.bf16.gmra.mrb[0].mxu0 %v449
        %v940 = vpop.f32.mrb[0].mxu0
        %v941 = vadd.f32 0.0, %v940
        %v942 = vpop.f32.mrb[0].mxu0
        %v943 = vpop.f32.mrb[0].mxu0
        %v944 = vadd.f32 0.0, %v943
        %v945 = vpop.f32.mrb[0].mxu0
        %946 = vmatprep.mubr.bf16.mxu0 0
        %947 = vmatmul.mubr.bf16.gmra.mrb[0].mxu0 %v452
        %v948 = vpop.f32.mrb[0].mxu0
        %v949 = vadd.f32 0.0, %v948
        %v950 = vpop.f32.mrb[0].mxu0
        %v951 = vpop.f32.mrb[0].mxu0
        %v952 = vadd.f32 0.0, %v951
        %v953 = vpop.f32.mrb[0].mxu0
        %954 = vmatprep.mubr.bf16.mxu0 0
        %955 = vmatmul.mubr.bf16.gmra.mrb[0].mxu0 %v455
        %v956 = vpop.f32.mrb[0].mxu0
        %v957 = vadd.f32 0.0, %v956
        %v958 = vpop.f32.mrb[0].mxu0
        %v959 = vpop.f32.mrb[0].mxu0
        %v960 = vadd.f32 0.0, %v959
        %v961 = vpop.f32.mrb[0].mxu0
        %962 = vmatprep.mubr.bf16.mxu0 0
        %963 = vmatmul.mubr.bf16.gmra.mrb[0].mxu0 %v458
        %v964 = vpop.f32.mrb[0].mxu0
        %v965 = vadd.f32 0.0, %v964
        %v966 = vpop.f32.mrb[0].mxu0
        %v967 = vpop.f32.mrb[0].mxu0
        %v968 = vadd.f32 0.0, %v967
        %v969 = vpop.f32.mrb[0].mxu0
        %970 = vmatprep.mubr.bf16.mxu0 0
        %971 = vmatmul.mubr.bf16.gmra.mrb[0].mxu0 %v461
        %v972 = vpop.f32.mrb[0].mxu0
        %v973 = vadd.f32 0.0, %v972
        %v974 = vpop.f32.mrb[0].mxu0
        %v975 = vpop.f32.mrb[0].mxu0
        %v976 = vadd.f32 0.0, %v975
        %v977 = vpop.f32.mrb[0].mxu0
        %978 = vmatprep.mubr.bf16.mxu0 0
        %979 = vmatmul.mubr.bf16.gmra.mrb[0].mxu0 %v464
        %v980 = vpop.f32.mrb[0].mxu0
        %v981 = vadd.f32 0.0, %v980
        %v982 = vpop.f32.mrb[0].mxu0
        %v983 = vpop.f32.mrb[0].mxu0
        %v984 = vadd.f32 0.0, %v983
        %v985 = vpop.f32.mrb[0].mxu0
        %986 = vmatprep.mubr.bf16.mxu0 0
        %987 = vmatmul.mubr.bf16.gmra.mrb[0].mxu0 %v467
        %v988 = vpop.f32.mrb[0].mxu0
        %v989 = vadd.f32 0.0, %v988
        %v990 = vpop.f32.mrb[0].mxu0
        %v991 = vpop.f32.mrb[0].mxu0
        %v992 = vadd.f32 0.0, %v991
        %v993 = vpop.f32.mrb[0].mxu0
        %994 = vmatprep.mubr.bf16.mxu0 0
        %995 = vmatmul.mubr.bf16.gmra.mrb[0].mxu0 %v470
        %v996 = vpop.f32.mrb[0].mxu0
        %v997 = vadd.f32 0.0, %v996
        %v998 = vpop.f32.mrb[0].mxu0
        %v999 = vpop.f32.mrb[0].mxu0
        %v1000 = vadd.f32 0.0, %v999
        %v1001 = vpop.f32.mrb[0].mxu0
        %1002 = vmatprep.mubr.bf16.mxu0 0
        %1003 = vmatmul.mubr.bf16.gmra.mrb[0].mxu0 %v473
        %v1004 = vpop.f32.mrb[0].mxu0
        %v1005 = vadd.f32 0.0, %v1004
        %v1006 = vpop.f32.mrb[0].mxu0
        %v1007 = vpop.f32.mrb[0].mxu0
        %v1008 = vadd.f32 0.0, %v1007
        %v1009 = vpop.f32.mrb[0].mxu0
        %1010 = vmatprep.mubr.bf16.mxu0 0
        %1011 = vmatmul.mubr.bf16.gmra.mrb[0].mxu0 %v476
        %v1012 = vpop.f32.mrb[0].mxu0
        %v1013 = vadd.f32 0.0, %v1012
        %v1014 = vpop.f32.mrb[0].mxu0
        %v1015 = vpop.f32.mrb[0].mxu0
        %v1016 = vadd.f32 0.0, %v1015
        %v1017 = vpop.f32.mrb[0].mxu0
        %1018 = vmatprep.mubr.bf16.mxu0 0
        %1019 = vmatmul.mubr.bf16.gmra.mrb[0].mxu0 %v479
        %v1020 = vpop.f32.mrb[0].mxu0
        %v1021 = vadd.f32 0.0, %v1020
        %v1022 = vpop.f32.mrb[0].mxu0
        %v1023 = vpop.f32.mrb[0].mxu0
        %v1024 = vadd.f32 0.0, %v1023
        %v1025 = vpop.f32.mrb[0].mxu0
        %1026 = vmatprep.mubr.bf16.mxu0 0
        %1027 = vmatmul.mubr.bf16.gmra.mrb[0].mxu0 %v482
        %v1028 = vpop.f32.mrb[0].mxu0
        %v1029 = vadd.f32 0.0, %v1028
        %v1030 = vpop.f32.mrb[0].mxu0
        %v1031 = vpop.f32.mrb[0].mxu0
        %v1032 = vadd.f32 0.0, %v1031
        %v1033 = vpop.f32.mrb[0].mxu0
        %1034 = vmatprep.mubr.bf16.mxu0 0
        %1035 = vmatmul.mubr.bf16.gmra.mrb[0].mxu0 %v485
        %v1036 = vpop.f32.mrb[0].mxu0
        %v1037 = vadd.f32 0.0, %v1036
        %v1038 = vpop.f32.mrb[0].mxu0
        %v1039 = vpop.f32.mrb[0].mxu0
        %v1040 = vadd.f32 0.0, %v1039
        %v1041 = vpop.f32.mrb[0].mxu0
        %1042 = vmatprep.mubr.bf16.mxu0 0
        %1043 = vmatmul.mubr.bf16.gmra.mrb[0].mxu0 %v488
        %v1044 = vpop.f32.mrb[0].mxu0
        %v1045 = vadd.f32 0.0, %v1044
        %v1046 = vpop.f32.mrb[0].mxu0
        %v1047 = vpop.f32.mrb[0].mxu0
        %v1048 = vadd.f32 0.0, %v1047
        %v1049 = vpop.f32.mrb[0].mxu0
        %1050 = vmatprep.mubr.bf16.mxu0 0
        %1051 = vmatmul.mubr.bf16.gmra.mrb[0].mxu0 %v491
        %v1052 = vpop.f32.mrb[0].mxu0
        %v1053 = vadd.f32 0.0, %v1052
        %v1054 = vpop.f32.mrb[0].mxu0
        %v1055 = vpop.f32.mrb[0].mxu0
        %v1056 = vadd.f32 0.0, %v1055
        %v1057 = vpop.f32.mrb[0].mxu0
        %1058 = vmatprep.mubr.bf16.mxu0 0
        %1059 = vmatmul.mubr.bf16.gmra.mrb[0].mxu0 %v494
        %v1060 = vpop.f32.mrb[0].mxu0
        %v1061 = vadd.f32 0.0, %v1060
        %v1062 = vpop.f32.mrb[0].mxu0
        %v1063 = vpop.f32.mrb[0].mxu0
        %v1064 = vadd.f32 0.0, %v1063
        %v1065 = vpop.f32.mrb[0].mxu0
        %1066 = vdwg.mxu0
        %v1067 = vmul.f32 %v941, %v891
        %v1068 = vmul.f32 %v944, %v892
        %v1069 = vmul.f32 %v949, %v891
        %v1070 = vmul.f32 %v952, %v892
        %v1071 = vmul.f32 %v957, %v891
        %v1072 = vmul.f32 %v960, %v892
        %v1073 = vmul.f32 %v965, %v891
        %v1074 = vmul.f32 %v968, %v892
        %v1075 = vmul.f32 %v973, %v891
        %v1076 = vmul.f32 %v976, %v892
        %v1077 = vmul.f32 %v981, %v891
        %v1078 = vmul.f32 %v984, %v892
        %v1079 = vmul.f32 %v989, %v891
        %v1080 = vmul.f32 %v992, %v892
        %v1081 = vmul.f32 %v997, %v891
        %v1082 = vmul.f32 %v1000, %v892
        %v1083 = vmul.f32 %v1005, %v891
        %v1084 = vmul.f32 %v1008, %v892
        %v1085 = vmul.f32 %v1013, %v891
        %v1086 = vmul.f32 %v1016, %v892
        %v1087 = vmul.f32 %v1021, %v891
        %v1088 = vmul.f32 %v1024, %v892
        %v1089 = vmul.f32 %v1029, %v891
        %v1090 = vmul.f32 %v1032, %v892
        %v1091 = vmul.f32 %v1037, %v891
        %v1092 = vmul.f32 %v1040, %v892
        %v1093 = vmul.f32 %v1045, %v891
        %v1094 = vmul.f32 %v1048, %v892
        %v1095 = vmul.f32 %v1053, %v891
        %v1096 = vmul.f32 %v1056, %v892
        %v1097 = vmul.f32 %v1061, %v891
        %v1098 = vmul.f32 %v1064, %v892
        %v1099 = vadd.f32 %v1067, %v1068
        %v1100 = vrot.slane %v1099, 4
        %v1101 = vadd.f32 %v1099, %v1100
        %v1102 = vrot.slane %v1101, 2
        %v1103 = vadd.f32 %v1101, %v1102
        %v1104 = vrot.slane %v1103, 1
        %v1105 = vadd.f32 %v1103, %v1104
        %v1106 = vadd.f32 %v1069, %v1070
        %v1107 = vrot.slane %v1106, 4
        %v1108 = vadd.f32 %v1106, %v1107
        %v1109 = vrot.slane %v1108, 2
        %v1110 = vadd.f32 %v1108, %v1109
        %v1111 = vrot.slane %v1110, 1
        %v1112 = vadd.f32 %v1110, %v1111
        %v1113 = vadd.f32 %v1071, %v1072
        %v1114 = vrot.slane %v1113, 4
        %v1115 = vadd.f32 %v1113, %v1114
        %v1116 = vrot.slane %v1115, 2
        %v1117 = vadd.f32 %v1115, %v1116
        %v1118 = vrot.slane %v1117, 1
        %v1119 = vadd.f32 %v1117, %v1118
        %v1120 = vadd.f32 %v1073, %v1074
        %v1121 = vrot.slane %v1120, 4
        %v1122 = vadd.f32 %v1120, %v1121
        %v1123 = vrot.slane %v1122, 2
        %v1124 = vadd.f32 %v1122, %v1123
        %v1125 = vrot.slane %v1124, 1
        %v1126 = vadd.f32 %v1124, %v1125
        %v1127 = vadd.f32 %v1075, %v1076
        %v1128 = vrot.slane %v1127, 4
        %v1129 = vadd.f32 %v1127, %v1128
        %v1130 = vrot.slane %v1129, 2
        %v1131 = vadd.f32 %v1129, %v1130
        %v1132 = vrot.slane %v1131, 1
        %v1133 = vadd.f32 %v1131, %v1132
        %v1134 = vadd.f32 %v1077, %v1078
        %v1135 = vrot.slane %v1134, 4
        %v1136 = vadd.f32 %v1134, %v1135
        %v1137 = vrot.slane %v1136, 2
        %v1138 = vadd.f32 %v1136, %v1137
        %v1139 = vrot.slane %v1138, 1
        %v1140 = vadd.f32 %v1138, %v1139
        %v1141 = vadd.f32 %v1079, %v1080
        %v1142 = vrot.slane %v1141, 4
        %v1143 = vadd.f32 %v1141, %v1142
        %v1144 = vrot.slane %v1143, 2
        %v1145 = vadd.f32 %v1143, %v1144
        %v1146 = vrot.slane %v1145, 1
        %v1147 = vadd.f32 %v1145, %v1146
        %v1148 = vadd.f32 %v1081, %v1082
        %v1149 = vrot.slane %v1148, 4
        %v1150 = vadd.f32 %v1148, %v1149
        %v1151 = vrot.slane %v1150, 2
        %v1152 = vadd.f32 %v1150, %v1151
        %v1153 = vrot.slane %v1152, 1
        %v1154 = vadd.f32 %v1152, %v1153
        %v1155 = vadd.f32 %v1083, %v1084
        %v1156 = vrot.slane %v1155, 4
        %v1157 = vadd.f32 %v1155, %v1156
        %v1158 = vrot.slane %v1157, 2
        %v1159 = vadd.f32 %v1157, %v1158
        %v1160 = vrot.slane %v1159, 1
        %v1161 = vadd.f32 %v1159, %v1160
        %v1162 = vadd.f32 %v1085, %v1086
        %v1163 = vrot.slane %v1162, 4
        %v1164 = vadd.f32 %v1162, %v1163
        %v1165 = vrot.slane %v1164, 2
        %v1166 = vadd.f32 %v1164, %v1165
        %v1167 = vrot.slane %v1166, 1
        %v1168 = vadd.f32 %v1166, %v1167
        %v1169 = vadd.f32 %v1087, %v1088
        %v1170 = vrot.slane %v1169, 4
        %v1171 = vadd.f32 %v1169, %v1170
        %v1172 = vrot.slane %v1171, 2
        %v1173 = vadd.f32 %v1171, %v1172
        %v1174 = vrot.slane %v1173, 1
        %v1175 = vadd.f32 %v1173, %v1174
        %v1176 = vadd.f32 %v1089, %v1090
        %v1177 = vrot.slane %v1176, 4
        %v1178 = vadd.f32 %v1176, %v1177
        %v1179 = vrot.slane %v1178, 2
        %v1180 = vadd.f32 %v1178, %v1179
        %v1181 = vrot.slane %v1180, 1
        %v1182 = vadd.f32 %v1180, %v1181
        %v1183 = vadd.f32 %v1091, %v1092
        %v1184 = vrot.slane %v1183, 4
        %v1185 = vadd.f32 %v1183, %v1184
        %v1186 = vrot.slane %v1185, 2
        %v1187 = vadd.f32 %v1185, %v1186
        %v1188 = vrot.slane %v1187, 1
        %v1189 = vadd.f32 %v1187, %v1188
        %v1190 = vadd.f32 %v1093, %v1094
        %v1191 = vrot.slane %v1190, 4
        %v1192 = vadd.f32 %v1190, %v1191
        %v1193 = vrot.slane %v1192, 2
        %v1194 = vadd.f32 %v1192, %v1193
        %v1195 = vrot.slane %v1194, 1
        %v1196 = vadd.f32 %v1194, %v1195
        %v1197 = vadd.f32 %v1095, %v1096
        %v1198 = vrot.slane %v1197, 4
        %v1199 = vadd.f32 %v1197, %v1198
        %v1200 = vrot.slane %v1199, 2
        %v1201 = vadd.f32 %v1199, %v1200
        %v1202 = vrot.slane %v1201, 1
        %v1203 = vadd.f32 %v1201, %v1202
        %v1204 = vadd.f32 %v1097, %v1098
        %v1205 = vrot.slane %v1204, 4
        %v1206 = vadd.f32 %v1204, %v1205
        %v1207 = vrot.slane %v1206, 2
        %v1208 = vadd.f32 %v1206, %v1207
        %v1209 = vrot.slane %v1208, 1
        %v1210 = vadd.f32 %v1208, %v1209
        %v1211 = vpack.c.bf16 %v1105, %v1105
        %v1212 = vpack.c.bf16 %v1112, %v1112
        %v1213 = vpack.c.bf16 %v1119, %v1119
        %v1214 = vpack.c.bf16 %v1126, %v1126
        %v1215 = vpack.c.bf16 %v1133, %v1133
        %v1216 = vpack.c.bf16 %v1140, %v1140
        %v1217 = vpack.c.bf16 %v1147, %v1147
        %v1218 = vpack.c.bf16 %v1154, %v1154
        %v1219 = vpack.c.bf16 %v1161, %v1161
        %v1220 = vpack.c.bf16 %v1168, %v1168
        %v1221 = vpack.c.bf16 %v1175, %v1175
        %v1222 = vpack.c.bf16 %v1182, %v1182
        %v1223 = vpack.c.bf16 %v1189, %v1189
        %v1224 = vpack.c.bf16 %v1196, %v1196
        %v1225 = vpack.c.bf16 %v1203, %v1203
        %v1226 = vpack.c.bf16 %v1210, %v1210
        %v1243 = vunpack.c.l.b16 %v1211
        %v1244 = vunpack.c.l.b16 %v1212
        %v1245 = vunpack.c.l.b16 %v1213
        %v1246 = vunpack.c.l.b16 %v1214
        %v1247 = vunpack.c.l.b16 %v1215
        %v1248 = vunpack.c.l.b16 %v1216
        %v1249 = vunpack.c.l.b16 %v1217
        %v1250 = vunpack.c.l.b16 %v1218
        %v1251 = vunpack.c.l.b16 %v1219
        %v1252 = vunpack.c.l.b16 %v1220
        %v1253 = vunpack.c.l.b16 %v1221
        %v1254 = vunpack.c.l.b16 %v1222
        %v1255 = vunpack.c.l.b16 %v1223
        %v1256 = vunpack.c.l.b16 %v1224
        %v1257 = vunpack.c.l.b16 %v1225
        %v1258 = vunpack.c.l.b16 %v1226
        %v1259 = vsel %vm849, %v1244, %v1243
        %v1260 = vsel %vm851, %v1245, %v1259
        %v1261 = vsel %vm853, %v1246, %v1260
        %v1262 = vsel %vm855, %v1247, %v1261
        %v1263 = vsel %vm857, %v1248, %v1262
        %v1264 = vsel %vm859, %v1249, %v1263
        %v1265 = vsel %vm861, %v1250, %v1264
        %v1266 = vsel %vm849, %v1252, %v1251
        %v1267 = vsel %vm851, %v1253, %v1266
        %v1268 = vsel %vm853, %v1254, %v1267
        %v1269 = vsel %vm855, %v1255, %v1268
        %v1270 = vsel %vm857, %v1256, %v1269
        %v1271 = vsel %vm859, %v1257, %v1270
        %v1272 = vsel %vm861, %v1258, %v1271
        %v1273 = vpack.c.b16 %v1272, %v1265
        %1275 = vst [vmem:[#allocation2 + $0x8] sm:$0xff] %v1273
        %v1276 = vld [vmem:[%s249 + $0x2] sm:$0x1]
        %v1277 = vld [vmem:[%s249 + $0xb] sm:$0x1]
        %v1278 = vlaneseq
        %v1279 = vshrl.u32 %v1278, 7
        %v1280 = vsub.s32 0, %v1279
        %v1281 = vrot.slane %v1276, %v1280
        %v1282 = vsub.f32 %v1281, %v288
        %v1283 = vsub.f32 %v1281, %v289
        %v1284 = vand.u32 2147483647, %v1282
        %v1285 = vand.u32 2147483647, %v1283
        %v1286 = vsub.f32 1.0, %v1284
        %v1287 = vsub.f32 1.0, %v1285
        %v1288 = vmax.f32 %v1286, 0.0
        %v1289 = vmax.f32 %v1287, 0.0
        %v1290 = vlaneseq
        %v1291 = vshrl.u32 %v1290, 7
        %v1292 = vsub.s32 2, %v1291
        %v1293 = vrot.slane %v332, %v1292
        %v1294 = vmul.f32 %v1288, %v1293
        %v1295 = vmul.f32 %v1289, %v1293
        %v1296 = vlaneseq
        %v1297 = vshrl.u32 %v1296, 7
        %v1298 = vsub.s32 0, %v1297
        %v1299 = vrot.slane %v1277, %v1298
        %v1300 = vsub.f32 %v1299, %v288
        %v1301 = vsub.f32 %v1299, %v289
        %v1302 = vand.u32 2147483647, %v1300
        %v1303 = vand.u32 2147483647, %v1301
        %v1304 = vsub.f32 1.0, %v1302
        %v1305 = vsub.f32 1.0, %v1303
        %v1306 = vmax.f32 %v1304, 0.0
        %v1307 = vmax.f32 %v1305, 0.0
        %v1308 = vpack.c.bf16 %v1307, %v1306
        %1309 = vmatprep.subr.bf16.mxu0 0
        %1310 = vmatpush1.bf16.msra.mxu0 %v1308
        %1311 = vmatprep.subr.bf16.mxu0 0
        %1312 = vmatpush1.bf16.msra.mxu0 0
        %1313 = vmatprep.subr.bf16.mxu0 0
        %1314 = vmatpush1.bf16.msra.mxu0 0
        %1315 = vmatprep.subr.bf16.mxu0 0
        %1316 = vmatpush1.bf16.msra.mxu0 0
        %1317 = vmatprep.subr.bf16.mxu0 0
        %1318 = vmatpush1.bf16.msra.mxu0 0
        %1319 = vmatprep.subr.bf16.mxu0 0
        %1320 = vmatpush1.bf16.msra.mxu0 0
        %1321 = vmatprep.subr.bf16.mxu0 0
        %1322 = vmatpush1.bf16.msra.mxu0 0
        %1323 = vmatprep.subr.bf16.mxu0 0
        %1324 = vmatpush1.bf16.msra.mxu0 0
        %1325 = vmatprep.subr.bf16.mxu0 0
        %1326 = vmatpush1.bf16.msra.mxu0 0
        %1327 = vmatprep.subr.bf16.mxu0 0
        %1328 = vmatpush1.bf16.msra.mxu0 0
        %1329 = vmatprep.subr.bf16.mxu0 0
        %1330 = vmatpush1.bf16.msra.mxu0 0
        %1331 = vmatprep.subr.bf16.mxu0 0
        %1332 = vmatpush1.bf16.msra.mxu0 0
        %1333 = vmatprep.subr.bf16.mxu0 0
        %1334 = vmatpush1.bf16.msra.mxu0 0
        %1335 = vmatprep.subr.bf16.mxu0 0
        %1336 = vmatpush1.bf16.msra.mxu0 0
        %1337 = vmatprep.subr.bf16.mxu0 0
        %1338 = vmatpush1.bf16.msra.mxu0 0
        %1339 = vmatprep.subr.bf16.mxu0 0
        %1340 = vmatpush1.bf16.msra.mxu0 0
        %1341 = vmatprep.mubr.bf16.mxu0 0
        %1342 = vmatmul.mubr.bf16.gmra.mrb[0].mxu0 %v449
        %v1343 = vpop.f32.mrb[0].mxu0
        %v1344 = vadd.f32 0.0, %v1343
        %v1345 = vpop.f32.mrb[0].mxu0
        %v1346 = vpop.f32.mrb[0].mxu0
        %v1347 = vadd.f32 0.0, %v1346
        %v1348 = vpop.f32.mrb[0].mxu0
        %1349 = vmatprep.mubr.bf16.mxu0 0
        %1350 = vmatmul.mubr.bf16.gmra.mrb[0].mxu0 %v452
        %v1351 = vpop.f32.mrb[0].mxu0
        %v1352 = vadd.f32 0.0, %v1351
        %v1353 = vpop.f32.mrb[0].mxu0
        %v1354 = vpop.f32.mrb[0].mxu0
        %v1355 = vadd.f32 0.0, %v1354
        %v1356 = vpop.f32.mrb[0].mxu0
        %1357 = vmatprep.mubr.bf16.mxu0 0
        %1358 = vmatmul.mubr.bf16.gmra.mrb[0].mxu0 %v455
        %v1359 = vpop.f32.mrb[0].mxu0
        %v1360 = vadd.f32 0.0, %v1359
        %v1361 = vpop.f32.mrb[0].mxu0
        %v1362 = vpop.f32.mrb[0].mxu0
        %v1363 = vadd.f32 0.0, %v1362
        %v1364 = vpop.f32.mrb[0].mxu0
        %1365 = vmatprep.mubr.bf16.mxu0 0
        %1366 = vmatmul.mubr.bf16.gmra.mrb[0].mxu0 %v458
        %v1367 = vpop.f32.mrb[0].mxu0
        %v1368 = vadd.f32 0.0, %v1367
        %v1369 = vpop.f32.mrb[0].mxu0
        %v1370 = vpop.f32.mrb[0].mxu0
        %v1371 = vadd.f32 0.0, %v1370
        %v1372 = vpop.f32.mrb[0].mxu0
        %1373 = vmatprep.mubr.bf16.mxu0 0
        %1374 = vmatmul.mubr.bf16.gmra.mrb[0].mxu0 %v461
        %v1375 = vpop.f32.mrb[0].mxu0
        %v1376 = vadd.f32 0.0, %v1375
        %v1377 = vpop.f32.mrb[0].mxu0
        %v1378 = vpop.f32.mrb[0].mxu0
        %v1379 = vadd.f32 0.0, %v1378
        %v1380 = vpop.f32.mrb[0].mxu0
        %1381 = vmatprep.mubr.bf16.mxu0 0
        %1382 = vmatmul.mubr.bf16.gmra.mrb[0].mxu0 %v464
        %v1383 = vpop.f32.mrb[0].mxu0
        %v1384 = vadd.f32 0.0, %v1383
        %v1385 = vpop.f32.mrb[0].mxu0
        %v1386 = vpop.f32.mrb[0].mxu0
        %v1387 = vadd.f32 0.0, %v1386
        %v1388 = vpop.f32.mrb[0].mxu0
        %1389 = vmatprep.mubr.bf16.mxu0 0
        %1390 = vmatmul.mubr.bf16.gmra.mrb[0].mxu0 %v467
        %v1391 = vpop.f32.mrb[0].mxu0
        %v1392 = vadd.f32 0.0, %v1391
        %v1393 = vpop.f32.mrb[0].mxu0
        %v1394 = vpop.f32.mrb[0].mxu0
        %v1395 = vadd.f32 0.0, %v1394
        %v1396 = vpop.f32.mrb[0].mxu0
        %1397 = vmatprep.mubr.bf16.mxu0 0
        %1398 = vmatmul.mubr.bf16.gmra.mrb[0].mxu0 %v470
        %v1399 = vpop.f32.mrb[0].mxu0
        %v1400 = vadd.f32 0.0, %v1399
        %v1401 = vpop.f32.mrb[0].mxu0
        %v1402 = vpop.f32.mrb[0].mxu0
        %v1403 = vadd.f32 0.0, %v1402
        %v1404 = vpop.f32.mrb[0].mxu0
        %1405 = vmatprep.mubr.bf16.mxu0 0
        %1406 = vmatmul.mubr.bf16.gmra.mrb[0].mxu0 %v473
        %v1407 = vpop.f32.mrb[0].mxu0
        %v1408 = vadd.f32 0.0, %v1407
        %v1409 = vpop.f32.mrb[0].mxu0
        %v1410 = vpop.f32.mrb[0].mxu0
        %v1411 = vadd.f32 0.0, %v1410
        %v1412 = vpop.f32.mrb[0].mxu0
        %1413 = vmatprep.mubr.bf16.mxu0 0
        %1414 = vmatmul.mubr.bf16.gmra.mrb[0].mxu0 %v476
        %v1415 = vpop.f32.mrb[0].mxu0
        %v1416 = vadd.f32 0.0, %v1415
        %v1417 = vpop.f32.mrb[0].mxu0
        %v1418 = vpop.f32.mrb[0].mxu0
        %v1419 = vadd.f32 0.0, %v1418
        %v1420 = vpop.f32.mrb[0].mxu0
        %1421 = vmatprep.mubr.bf16.mxu0 0
        %1422 = vmatmul.mubr.bf16.gmra.mrb[0].mxu0 %v479
        %v1423 = vpop.f32.mrb[0].mxu0
        %v1424 = vadd.f32 0.0, %v1423
        %v1425 = vpop.f32.mrb[0].mxu0
        %v1426 = vpop.f32.mrb[0].mxu0
        %v1427 = vadd.f32 0.0, %v1426
        %v1428 = vpop.f32.mrb[0].mxu0
        %1429 = vmatprep.mubr.bf16.mxu0 0
        %1430 = vmatmul.mubr.bf16.gmra.mrb[0].mxu0 %v482
        %v1431 = vpop.f32.mrb[0].mxu0
        %v1432 = vadd.f32 0.0, %v1431
        %v1433 = vpop.f32.mrb[0].mxu0
        %v1434 = vpop.f32.mrb[0].mxu0
        %v1435 = vadd.f32 0.0, %v1434
        %v1436 = vpop.f32.mrb[0].mxu0
        %1437 = vmatprep.mubr.bf16.mxu0 0
        %1438 = vmatmul.mubr.bf16.gmra.mrb[0].mxu0 %v485
        %v1439 = vpop.f32.mrb[0].mxu0
        %v1440 = vadd.f32 0.0, %v1439
        %v1441 = vpop.f32.mrb[0].mxu0
        %v1442 = vpop.f32.mrb[0].mxu0
        %v1443 = vadd.f32 0.0, %v1442
        %v1444 = vpop.f32.mrb[0].mxu0
        %1445 = vmatprep.mubr.bf16.mxu0 0
        %1446 = vmatmul.mubr.bf16.gmra.mrb[0].mxu0 %v488
        %v1447 = vpop.f32.mrb[0].mxu0
        %v1448 = vadd.f32 0.0, %v1447
        %v1449 = vpop.f32.mrb[0].mxu0
        %v1450 = vpop.f32.mrb[0].mxu0
        %v1451 = vadd.f32 0.0, %v1450
        %v1452 = vpop.f32.mrb[0].mxu0
        %1453 = vmatprep.mubr.bf16.mxu0 0
        %1454 = vmatmul.mubr.bf16.gmra.mrb[0].mxu0 %v491
        %v1455 = vpop.f32.mrb[0].mxu0
        %v1456 = vadd.f32 0.0, %v1455
        %v1457 = vpop.f32.mrb[0].mxu0
        %v1458 = vpop.f32.mrb[0].mxu0
        %v1459 = vadd.f32 0.0, %v1458
        %v1460 = vpop.f32.mrb[0].mxu0
        %1461 = vmatprep.mubr.bf16.mxu0 0
        %1462 = vmatmul.mubr.bf16.gmra.mrb[0].mxu0 %v494
        %v1463 = vpop.f32.mrb[0].mxu0
        %v1464 = vadd.f32 0.0, %v1463
        %v1465 = vpop.f32.mrb[0].mxu0
        %v1466 = vpop.f32.mrb[0].mxu0
        %v1467 = vadd.f32 0.0, %v1466
        %v1468 = vpop.f32.mrb[0].mxu0
        %1469 = vdwg.mxu0
        %v1470 = vmul.f32 %v1344, %v1294
        %v1471 = vmul.f32 %v1347, %v1295
        %v1472 = vmul.f32 %v1352, %v1294
        %v1473 = vmul.f32 %v1355, %v1295
        %v1474 = vmul.f32 %v1360, %v1294
        %v1475 = vmul.f32 %v1363, %v1295
        %v1476 = vmul.f32 %v1368, %v1294
        %v1477 = vmul.f32 %v1371, %v1295
        %v1478 = vmul.f32 %v1376, %v1294
        %v1479 = vmul.f32 %v1379, %v1295
        %v1480 = vmul.f32 %v1384, %v1294
        %v1481 = vmul.f32 %v1387, %v1295
        %v1482 = vmul.f32 %v1392, %v1294
        %v1483 = vmul.f32 %v1395, %v1295
        %v1484 = vmul.f32 %v1400, %v1294
        %v1485 = vmul.f32 %v1403, %v1295
        %v1486 = vmul.f32 %v1408, %v1294
        %v1487 = vmul.f32 %v1411, %v1295
        %v1488 = vmul.f32 %v1416, %v1294
        %v1489 = vmul.f32 %v1419, %v1295
        %v1490 = vmul.f32 %v1424, %v1294
        %v1491 = vmul.f32 %v1427, %v1295
        %v1492 = vmul.f32 %v1432, %v1294
        %v1493 = vmul.f32 %v1435, %v1295
        %v1494 = vmul.f32 %v1440, %v1294
        %v1495 = vmul.f32 %v1443, %v1295
        %v1496 = vmul.f32 %v1448, %v1294
        %v1497 = vmul.f32 %v1451, %v1295
        %v1498 = vmul.f32 %v1456, %v1294
        %v1499 = vmul.f32 %v1459, %v1295
        %v1500 = vmul.f32 %v1464, %v1294
        %v1501 = vmul.f32 %v1467, %v1295
        %v1502 = vadd.f32 %v1470, %v1471
        %v1503 = vrot.slane %v1502, 4
        %v1504 = vadd.f32 %v1502, %v1503
        %v1505 = vrot.slane %v1504, 2
        %v1506 = vadd.f32 %v1504, %v1505
        %v1507 = vrot.slane %v1506, 1
        %v1508 = vadd.f32 %v1506, %v1507
        %v1509 = vadd.f32 %v1472, %v1473
        %v1510 = vrot.slane %v1509, 4
        %v1511 = vadd.f32 %v1509, %v1510
        %v1512 = vrot.slane %v1511, 2
        %v1513 = vadd.f32 %v1511, %v1512
        %v1514 = vrot.slane %v1513, 1
        %v1515 = vadd.f32 %v1513, %v1514
        %v1516 = vadd.f32 %v1474, %v1475
        %v1517 = vrot.slane %v1516, 4
        %v1518 = vadd.f32 %v1516, %v1517
        %v1519 = vrot.slane %v1518, 2
        %v1520 = vadd.f32 %v1518, %v1519
        %v1521 = vrot.slane %v1520, 1
        %v1522 = vadd.f32 %v1520, %v1521
        %v1523 = vadd.f32 %v1476, %v1477
        %v1524 = vrot.slane %v1523, 4
        %v1525 = vadd.f32 %v1523, %v1524
        %v1526 = vrot.slane %v1525, 2
        %v1527 = vadd.f32 %v1525, %v1526
        %v1528 = vrot.slane %v1527, 1
        %v1529 = vadd.f32 %v1527, %v1528
        %v1530 = vadd.f32 %v1478, %v1479
        %v1531 = vrot.slane %v1530, 4
        %v1532 = vadd.f32 %v1530, %v1531
        %v1533 = vrot.slane %v1532, 2
        %v1534 = vadd.f32 %v1532, %v1533
        %v1535 = vrot.slane %v1534, 1
        %v1536 = vadd.f32 %v1534, %v1535
        %v1537 = vadd.f32 %v1480, %v1481
        %v1538 = vrot.slane %v1537, 4
        %v1539 = vadd.f32 %v1537, %v1538
        %v1540 = vrot.slane %v1539, 2
        %v1541 = vadd.f32 %v1539, %v1540
        %v1542 = vrot.slane %v1541, 1
        %v1543 = vadd.f32 %v1541, %v1542
        %v1544 = vadd.f32 %v1482, %v1483
        %v1545 = vrot.slane %v1544, 4
        %v1546 = vadd.f32 %v1544, %v1545
        %v1547 = vrot.slane %v1546, 2
        %v1548 = vadd.f32 %v1546, %v1547
        %v1549 = vrot.slane %v1548, 1
        %v1550 = vadd.f32 %v1548, %v1549
        %v1551 = vadd.f32 %v1484, %v1485
        %v1552 = vrot.slane %v1551, 4
        %v1553 = vadd.f32 %v1551, %v1552
        %v1554 = vrot.slane %v1553, 2
        %v1555 = vadd.f32 %v1553, %v1554
        %v1556 = vrot.slane %v1555, 1
        %v1557 = vadd.f32 %v1555, %v1556
        %v1558 = vadd.f32 %v1486, %v1487
        %v1559 = vrot.slane %v1558, 4
        %v1560 = vadd.f32 %v1558, %v1559
        %v1561 = vrot.slane %v1560, 2
        %v1562 = vadd.f32 %v1560, %v1561
        %v1563 = vrot.slane %v1562, 1
        %v1564 = vadd.f32 %v1562, %v1563
        %v1565 = vadd.f32 %v1488, %v1489
        %v1566 = vrot.slane %v1565, 4
        %v1567 = vadd.f32 %v1565, %v1566
        %v1568 = vrot.slane %v1567, 2
        %v1569 = vadd.f32 %v1567, %v1568
        %v1570 = vrot.slane %v1569, 1
        %v1571 = vadd.f32 %v1569, %v1570
        %v1572 = vadd.f32 %v1490, %v1491
        %v1573 = vrot.slane %v1572, 4
        %v1574 = vadd.f32 %v1572, %v1573
        %v1575 = vrot.slane %v1574, 2
        %v1576 = vadd.f32 %v1574, %v1575
        %v1577 = vrot.slane %v1576, 1
        %v1578 = vadd.f32 %v1576, %v1577
        %v1579 = vadd.f32 %v1492, %v1493
        %v1580 = vrot.slane %v1579, 4
        %v1581 = vadd.f32 %v1579, %v1580
        %v1582 = vrot.slane %v1581, 2
        %v1583 = vadd.f32 %v1581, %v1582
        %v1584 = vrot.slane %v1583, 1
        %v1585 = vadd.f32 %v1583, %v1584
        %v1586 = vadd.f32 %v1494, %v1495
        %v1587 = vrot.slane %v1586, 4
        %v1588 = vadd.f32 %v1586, %v1587
        %v1589 = vrot.slane %v1588, 2
        %v1590 = vadd.f32 %v1588, %v1589
        %v1591 = vrot.slane %v1590, 1
        %v1592 = vadd.f32 %v1590, %v1591
        %v1593 = vadd.f32 %v1496, %v1497
        %v1594 = vrot.slane %v1593, 4
        %v1595 = vadd.f32 %v1593, %v1594
        %v1596 = vrot.slane %v1595, 2
        %v1597 = vadd.f32 %v1595, %v1596
        %v1598 = vrot.slane %v1597, 1
        %v1599 = vadd.f32 %v1597, %v1598
        %v1600 = vadd.f32 %v1498, %v1499
        %v1601 = vrot.slane %v1600, 4
        %v1602 = vadd.f32 %v1600, %v1601
        %v1603 = vrot.slane %v1602, 2
        %v1604 = vadd.f32 %v1602, %v1603
        %v1605 = vrot.slane %v1604, 1
        %v1606 = vadd.f32 %v1604, %v1605
        %v1607 = vadd.f32 %v1500, %v1501
        %v1608 = vrot.slane %v1607, 4
        %v1609 = vadd.f32 %v1607, %v1608
        %v1610 = vrot.slane %v1609, 2
        %v1611 = vadd.f32 %v1609, %v1610
        %v1612 = vrot.slane %v1611, 1
        %v1613 = vadd.f32 %v1611, %v1612
        %v1614 = vpack.c.bf16 %v1508, %v1508
        %v1615 = vpack.c.bf16 %v1515, %v1515
        %v1616 = vpack.c.bf16 %v1522, %v1522
        %v1617 = vpack.c.bf16 %v1529, %v1529
        %v1618 = vpack.c.bf16 %v1536, %v1536
        %v1619 = vpack.c.bf16 %v1543, %v1543
        %v1620 = vpack.c.bf16 %v1550, %v1550
        %v1621 = vpack.c.bf16 %v1557, %v1557
        %v1622 = vpack.c.bf16 %v1564, %v1564
        %v1623 = vpack.c.bf16 %v1571, %v1571
        %v1624 = vpack.c.bf16 %v1578, %v1578
        %v1625 = vpack.c.bf16 %v1585, %v1585
        %v1626 = vpack.c.bf16 %v1592, %v1592
        %v1627 = vpack.c.bf16 %v1599, %v1599
        %v1628 = vpack.c.bf16 %v1606, %v1606
        %v1629 = vpack.c.bf16 %v1613, %v1613
        %v1646 = vunpack.c.l.b16 %v1614
        %v1647 = vunpack.c.l.b16 %v1615
        %v1648 = vunpack.c.l.b16 %v1616
        %v1649 = vunpack.c.l.b16 %v1617
        %v1650 = vunpack.c.l.b16 %v1618
        %v1651 = vunpack.c.l.b16 %v1619
        %v1652 = vunpack.c.l.b16 %v1620
        %v1653 = vunpack.c.l.b16 %v1621
        %v1654 = vunpack.c.l.b16 %v1622
        %v1655 = vunpack.c.l.b16 %v1623
        %v1656 = vunpack.c.l.b16 %v1624
        %v1657 = vunpack.c.l.b16 %v1625
        %v1658 = vunpack.c.l.b16 %v1626
        %v1659 = vunpack.c.l.b16 %v1627
        %v1660 = vunpack.c.l.b16 %v1628
        %v1661 = vunpack.c.l.b16 %v1629
        %v1662 = vsel %vm849, %v1647, %v1646
        %v1663 = vsel %vm851, %v1648, %v1662
        %v1664 = vsel %vm853, %v1649, %v1663
        %v1665 = vsel %vm855, %v1650, %v1664
        %v1666 = vsel %vm857, %v1651, %v1665
        %v1667 = vsel %vm859, %v1652, %v1666
        %v1668 = vsel %vm861, %v1653, %v1667
        %v1669 = vsel %vm849, %v1655, %v1654
        %v1670 = vsel %vm851, %v1656, %v1669
        %v1671 = vsel %vm853, %v1657, %v1670
        %v1672 = vsel %vm855, %v1658, %v1671
        %v1673 = vsel %vm857, %v1659, %v1672
        %v1674 = vsel %vm859, %v1660, %v1673
        %v1675 = vsel %vm861, %v1661, %v1674
        %v1676 = vpack.c.b16 %v1675, %v1668
        %1678 = vst [vmem:[#allocation2 + $0x10] sm:$0xff] %v1676
        %v1679 = vld [vmem:[%s249 + $0x3] sm:$0x1]
        %v1680 = vld [vmem:[%s249 + $0xc] sm:$0x1]
        %v1681 = vlaneseq
        %v1682 = vshrl.u32 %v1681, 7
        %v1683 = vsub.s32 0, %v1682
        %v1684 = vrot.slane %v1679, %v1683
        %v1685 = vsub.f32 %v1684, %v288
        %v1686 = vsub.f32 %v1684, %v289
        %v1687 = vand.u32 2147483647, %v1685
        %v1688 = vand.u32 2147483647, %v1686
        %v1689 = vsub.f32 1.0, %v1687
        %v1690 = vsub.f32 1.0, %v1688
        %v1691 = vmax.f32 %v1689, 0.0
        %v1692 = vmax.f32 %v1690, 0.0
        %v1693 = vlaneseq
        %v1694 = vshrl.u32 %v1693, 7
        %v1695 = vsub.s32 3, %v1694
        %v1696 = vrot.slane %v332, %v1695
        %v1697 = vmul.f32 %v1691, %v1696
        %v1698 = vmul.f32 %v1692, %v1696
        %v1699 = vlaneseq
        %v1700 = vshrl.u32 %v1699, 7
        %v1701 = vsub.s32 0, %v1700
        %v1702 = vrot.slane %v1680, %v1701
        %v1703 = vsub.f32 %v1702, %v288
        %v1704 = vsub.f32 %v1702, %v289
        %v1705 = vand.u32 2147483647, %v1703
        %v1706 = vand.u32 2147483647, %v1704
        %v1707 = vsub.f32 1.0, %v1705
        %v1708 = vsub.f32 1.0, %v1706
        %v1709 = vmax.f32 %v1707, 0.0
        %v1710 = vmax.f32 %v1708, 0.0
        %v1711 = vpack.c.bf16 %v1710, %v1709
        %1712 = vmatprep.subr.bf16.mxu0 0
        %1713 = vmatpush1.bf16.msra.mxu0 %v1711
        %1714 = vmatprep.subr.bf16.mxu0 0
        %1715 = vmatpush1.bf16.msra.mxu0 0
        %1716 = vmatprep.subr.bf16.mxu0 0
        %1717 = vmatpush1.bf16.msra.mxu0 0
        %1718 = vmatprep.subr.bf16.mxu0 0
        %1719 = vmatpush1.bf16.msra.mxu0 0
        %1720 = vmatprep.subr.bf16.mxu0 0
        %1721 = vmatpush1.bf16.msra.mxu0 0
        %1722 = vmatprep.subr.bf16.mxu0 0
        %1723 = vmatpush1.bf16.msra.mxu0 0
        %1724 = vmatprep.subr.bf16.mxu0 0
        %1725 = vmatpush1.bf16.msra.mxu0 0
        %1726 = vmatprep.subr.bf16.mxu0 0
        %1727 = vmatpush1.bf16.msra.mxu0 0
        %1728 = vmatprep.subr.bf16.mxu0 0
        %1729 = vmatpush1.bf16.msra.mxu0 0
        %1730 = vmatprep.subr.bf16.mxu0 0
        %1731 = vmatpush1.bf16.msra.mxu0 0
        %1732 = vmatprep.subr.bf16.mxu0 0
        %1733 = vmatpush1.bf16.msra.mxu0 0
        %1734 = vmatprep.subr.bf16.mxu0 0
        %1735 = vmatpush1.bf16.msra.mxu0 0
        %1736 = vmatprep.subr.bf16.mxu0 0
        %1737 = vmatpush1.bf16.msra.mxu0 0
        %1738 = vmatprep.subr.bf16.mxu0 0
        %1739 = vmatpush1.bf16.msra.mxu0 0
        %1740 = vmatprep.subr.bf16.mxu0 0
        %1741 = vmatpush1.bf16.msra.mxu0 0
        %1742 = vmatprep.subr.bf16.mxu0 0
        %1743 = vmatpush1.bf16.msra.mxu0 0
        %1744 = vmatprep.mubr.bf16.mxu0 0
        %1745 = vmatmul.mubr.bf16.gmra.mrb[0].mxu0 %v449
        %v1746 = vpop.f32.mrb[0].mxu0
        %v1747 = vadd.f32 0.0, %v1746
        %v1748 = vpop.f32.mrb[0].mxu0
        %v1749 = vpop.f32.mrb[0].mxu0
        %v1750 = vadd.f32 0.0, %v1749
        %v1751 = vpop.f32.mrb[0].mxu0
        %1752 = vmatprep.mubr.bf16.mxu0 0
        %1753 = vmatmul.mubr.bf16.gmra.mrb[0].mxu0 %v452
        %v1754 = vpop.f32.mrb[0].mxu0
        %v1755 = vadd.f32 0.0, %v1754
        %v1756 = vpop.f32.mrb[0].mxu0
        %v1757 = vpop.f32.mrb[0].mxu0
        %v1758 = vadd.f32 0.0, %v1757
        %v1759 = vpop.f32.mrb[0].mxu0
        %1760 = vmatprep.mubr.bf16.mxu0 0
        %1761 = vmatmul.mubr.bf16.gmra.mrb[0].mxu0 %v455
        %v1762 = vpop.f32.mrb[0].mxu0
        %v1763 = vadd.f32 0.0, %v1762
        %v1764 = vpop.f32.mrb[0].mxu0
        %v1765 = vpop.f32.mrb[0].mxu0
        %v1766 = vadd.f32 0.0, %v1765
        %v1767 = vpop.f32.mrb[0].mxu0
        %1768 = vmatprep.mubr.bf16.mxu0 0
        %1769 = vmatmul.mubr.bf16.gmra.mrb[0].mxu0 %v458
        %v1770 = vpop.f32.mrb[0].mxu0
        %v1771 = vadd.f32 0.0, %v1770
        %v1772 = vpop.f32.mrb[0].mxu0
        %v1773 = vpop.f32.mrb[0].mxu0
        %v1774 = vadd.f32 0.0, %v1773
        %v1775 = vpop.f32.mrb[0].mxu0
        %1776 = vmatprep.mubr.bf16.mxu0 0
        %1777 = vmatmul.mubr.bf16.gmra.mrb[0].mxu0 %v461
        %v1778 = vpop.f32.mrb[0].mxu0
        %v1779 = vadd.f32 0.0, %v1778
        %v1780 = vpop.f32.mrb[0].mxu0
        %v1781 = vpop.f32.mrb[0].mxu0
        %v1782 = vadd.f32 0.0, %v1781
        %v1783 = vpop.f32.mrb[0].mxu0
        %1784 = vmatprep.mubr.bf16.mxu0 0
        %1785 = vmatmul.mubr.bf16.gmra.mrb[0].mxu0 %v464
        %v1786 = vpop.f32.mrb[0].mxu0
        %v1787 = vadd.f32 0.0, %v1786
        %v1788 = vpop.f32.mrb[0].mxu0
        %v1789 = vpop.f32.mrb[0].mxu0
        %v1790 = vadd.f32 0.0, %v1789
        %v1791 = vpop.f32.mrb[0].mxu0
        %1792 = vmatprep.mubr.bf16.mxu0 0
        %1793 = vmatmul.mubr.bf16.gmra.mrb[0].mxu0 %v467
        %v1794 = vpop.f32.mrb[0].mxu0
        %v1795 = vadd.f32 0.0, %v1794
        %v1796 = vpop.f32.mrb[0].mxu0
        %v1797 = vpop.f32.mrb[0].mxu0
        %v1798 = vadd.f32 0.0, %v1797
        %v1799 = vpop.f32.mrb[0].mxu0
        %1800 = vmatprep.mubr.bf16.mxu0 0
        %1801 = vmatmul.mubr.bf16.gmra.mrb[0].mxu0 %v470
        %v1802 = vpop.f32.mrb[0].mxu0
        %v1803 = vadd.f32 0.0, %v1802
        %v1804 = vpop.f32.mrb[0].mxu0
        %v1805 = vpop.f32.mrb[0].mxu0
        %v1806 = vadd.f32 0.0, %v1805
        %v1807 = vpop.f32.mrb[0].mxu0
        %1808 = vmatprep.mubr.bf16.mxu0 0
        %1809 = vmatmul.mubr.bf16.gmra.mrb[0].mxu0 %v473
        %v1810 = vpop.f32.mrb[0].mxu0
        %v1811 = vadd.f32 0.0, %v1810
        %v1812 = vpop.f32.mrb[0].mxu0
        %v1813 = vpop.f32.mrb[0].mxu0
        %v1814 = vadd.f32 0.0, %v1813
        %v1815 = vpop.f32.mrb[0].mxu0
        %1816 = vmatprep.mubr.bf16.mxu0 0
        %1817 = vmatmul.mubr.bf16.gmra.mrb[0].mxu0 %v476
        %v1818 = vpop.f32.mrb[0].mxu0
        %v1819 = vadd.f32 0.0, %v1818
        %v1820 = vpop.f32.mrb[0].mxu0
        %v1821 = vpop.f32.mrb[0].mxu0
        %v1822 = vadd.f32 0.0, %v1821
        %v1823 = vpop.f32.mrb[0].mxu0
        %1824 = vmatprep.mubr.bf16.mxu0 0
        %1825 = vmatmul.mubr.bf16.gmra.mrb[0].mxu0 %v479
        %v1826 = vpop.f32.mrb[0].mxu0
        %v1827 = vadd.f32 0.0, %v1826
        %v1828 = vpop.f32.mrb[0].mxu0
        %v1829 = vpop.f32.mrb[0].mxu0
        %v1830 = vadd.f32 0.0, %v1829
        %v1831 = vpop.f32.mrb[0].mxu0
        %1832 = vmatprep.mubr.bf16.mxu0 0
        %1833 = vmatmul.mubr.bf16.gmra.mrb[0].mxu0 %v482
        %v1834 = vpop.f32.mrb[0].mxu0
        %v1835 = vadd.f32 0.0, %v1834
        %v1836 = vpop.f32.mrb[0].mxu0
        %v1837 = vpop.f32.mrb[0].mxu0
        %v1838 = vadd.f32 0.0, %v1837
        %v1839 = vpop.f32.mrb[0].mxu0
        %1840 = vmatprep.mubr.bf16.mxu0 0
        %1841 = vmatmul.mubr.bf16.gmra.mrb[0].mxu0 %v485
        %v1842 = vpop.f32.mrb[0].mxu0
        %v1843 = vadd.f32 0.0, %v1842
        %v1844 = vpop.f32.mrb[0].mxu0
        %v1845 = vpop.f32.mrb[0].mxu0
        %v1846 = vadd.f32 0.0, %v1845
        %v1847 = vpop.f32.mrb[0].mxu0
        %1848 = vmatprep.mubr.bf16.mxu0 0
        %1849 = vmatmul.mubr.bf16.gmra.mrb[0].mxu0 %v488
        %v1850 = vpop.f32.mrb[0].mxu0
        %v1851 = vadd.f32 0.0, %v1850
        %v1852 = vpop.f32.mrb[0].mxu0
        %v1853 = vpop.f32.mrb[0].mxu0
        %v1854 = vadd.f32 0.0, %v1853
        %v1855 = vpop.f32.mrb[0].mxu0
        %1856 = vmatprep.mubr.bf16.mxu0 0
        %1857 = vmatmul.mubr.bf16.gmra.mrb[0].mxu0 %v491
        %v1858 = vpop.f32.mrb[0].mxu0
        %v1859 = vadd.f32 0.0, %v1858
        %v1860 = vpop.f32.mrb[0].mxu0
        %v1861 = vpop.f32.mrb[0].mxu0
        %v1862 = vadd.f32 0.0, %v1861
        %v1863 = vpop.f32.mrb[0].mxu0
        %1864 = vmatprep.mubr.bf16.mxu0 0
        %1865 = vmatmul.mubr.bf16.gmra.mrb[0].mxu0 %v494
        %v1866 = vpop.f32.mrb[0].mxu0
        %v1867 = vadd.f32 0.0, %v1866
        %v1868 = vpop.f32.mrb[0].mxu0
        %v1869 = vpop.f32.mrb[0].mxu0
        %v1870 = vadd.f32 0.0, %v1869
        %v1871 = vpop.f32.mrb[0].mxu0
        %1872 = vdwg.mxu0
        %v1873 = vmul.f32 %v1747, %v1697
        %v1874 = vmul.f32 %v1750, %v1698
        %v1875 = vmul.f32 %v1755, %v1697
        %v1876 = vmul.f32 %v1758, %v1698
        %v1877 = vmul.f32 %v1763, %v1697
        %v1878 = vmul.f32 %v1766, %v1698
        %v1879 = vmul.f32 %v1771, %v1697
        %v1880 = vmul.f32 %v1774, %v1698
        %v1881 = vmul.f32 %v1779, %v1697
        %v1882 = vmul.f32 %v1782, %v1698
        %v1883 = vmul.f32 %v1787, %v1697
        %v1884 = vmul.f32 %v1790, %v1698
        %v1885 = vmul.f32 %v1795, %v1697
        %v1886 = vmul.f32 %v1798, %v1698
        %v1887 = vmul.f32 %v1803, %v1697
        %v1888 = vmul.f32 %v1806, %v1698
        %v1889 = vmul.f32 %v1811, %v1697
        %v1890 = vmul.f32 %v1814, %v1698
        %v1891 = vmul.f32 %v1819, %v1697
        %v1892 = vmul.f32 %v1822, %v1698
        %v1893 = vmul.f32 %v1827, %v1697
        %v1894 = vmul.f32 %v1830, %v1698
        %v1895 = vmul.f32 %v1835, %v1697
        %v1896 = vmul.f32 %v1838, %v1698
        %v1897 = vmul.f32 %v1843, %v1697
        %v1898 = vmul.f32 %v1846, %v1698
        %v1899 = vmul.f32 %v1851, %v1697
        %v1900 = vmul.f32 %v1854, %v1698
        %v1901 = vmul.f32 %v1859, %v1697
        %v1902 = vmul.f32 %v1862, %v1698
        %v1903 = vmul.f32 %v1867, %v1697
        %v1904 = vmul.f32 %v1870, %v1698
        %v1905 = vadd.f32 %v1873, %v1874
        %v1906 = vrot.slane %v1905, 4
        %v1907 = vadd.f32 %v1905, %v1906
        %v1908 = vrot.slane %v1907, 2
        %v1909 = vadd.f32 %v1907, %v1908
        %v1910 = vrot.slane %v1909, 1
        %v1911 = vadd.f32 %v1909, %v1910
        %v1912 = vadd.f32 %v1875, %v1876
        %v1913 = vrot.slane %v1912, 4
        %v1914 = vadd.f32 %v1912, %v1913
        %v1915 = vrot.slane %v1914, 2
        %v1916 = vadd.f32 %v1914, %v1915
        %v1917 = vrot.slane %v1916, 1
        %v1918 = vadd.f32 %v1916, %v1917
        %v1919 = vadd.f32 %v1877, %v1878
        %v1920 = vrot.slane %v1919, 4
        %v1921 = vadd.f32 %v1919, %v1920
        %v1922 = vrot.slane %v1921, 2
        %v1923 = vadd.f32 %v1921, %v1922
        %v1924 = vrot.slane %v1923, 1
        %v1925 = vadd.f32 %v1923, %v1924
        %v1926 = vadd.f32 %v1879, %v1880
        %v1927 = vrot.slane %v1926, 4
        %v1928 = vadd.f32 %v1926, %v1927
        %v1929 = vrot.slane %v1928, 2
        %v1930 = vadd.f32 %v1928, %v1929
        %v1931 = vrot.slane %v1930, 1
        %v1932 = vadd.f32 %v1930, %v1931
        %v1933 = vadd.f32 %v1881, %v1882
        %v1934 = vrot.slane %v1933, 4
        %v1935 = vadd.f32 %v1933, %v1934
        %v1936 = vrot.slane %v1935, 2
        %v1937 = vadd.f32 %v1935, %v1936
        %v1938 = vrot.slane %v1937, 1
        %v1939 = vadd.f32 %v1937, %v1938
        %v1940 = vadd.f32 %v1883, %v1884
        %v1941 = vrot.slane %v1940, 4
        %v1942 = vadd.f32 %v1940, %v1941
        %v1943 = vrot.slane %v1942, 2
        %v1944 = vadd.f32 %v1942, %v1943
        %v1945 = vrot.slane %v1944, 1
        %v1946 = vadd.f32 %v1944, %v1945
        %v1947 = vadd.f32 %v1885, %v1886
        %v1948 = vrot.slane %v1947, 4
        %v1949 = vadd.f32 %v1947, %v1948
        %v1950 = vrot.slane %v1949, 2
        %v1951 = vadd.f32 %v1949, %v1950
        %v1952 = vrot.slane %v1951, 1
        %v1953 = vadd.f32 %v1951, %v1952
        %v1954 = vadd.f32 %v1887, %v1888
        %v1955 = vrot.slane %v1954, 4
        %v1956 = vadd.f32 %v1954, %v1955
        %v1957 = vrot.slane %v1956, 2
        %v1958 = vadd.f32 %v1956, %v1957
        %v1959 = vrot.slane %v1958, 1
        %v1960 = vadd.f32 %v1958, %v1959
        %v1961 = vadd.f32 %v1889, %v1890
        %v1962 = vrot.slane %v1961, 4
        %v1963 = vadd.f32 %v1961, %v1962
        %v1964 = vrot.slane %v1963, 2
        %v1965 = vadd.f32 %v1963, %v1964
        %v1966 = vrot.slane %v1965, 1
        %v1967 = vadd.f32 %v1965, %v1966
        %v1968 = vadd.f32 %v1891, %v1892
        %v1969 = vrot.slane %v1968, 4
        %v1970 = vadd.f32 %v1968, %v1969
        %v1971 = vrot.slane %v1970, 2
        %v1972 = vadd.f32 %v1970, %v1971
        %v1973 = vrot.slane %v1972, 1
        %v1974 = vadd.f32 %v1972, %v1973
        %v1975 = vadd.f32 %v1893, %v1894
        %v1976 = vrot.slane %v1975, 4
        %v1977 = vadd.f32 %v1975, %v1976
        %v1978 = vrot.slane %v1977, 2
        %v1979 = vadd.f32 %v1977, %v1978
        %v1980 = vrot.slane %v1979, 1
        %v1981 = vadd.f32 %v1979, %v1980
        %v1982 = vadd.f32 %v1895, %v1896
        %v1983 = vrot.slane %v1982, 4
        %v1984 = vadd.f32 %v1982, %v1983
        %v1985 = vrot.slane %v1984, 2
        %v1986 = vadd.f32 %v1984, %v1985
        %v1987 = vrot.slane %v1986, 1
        %v1988 = vadd.f32 %v1986, %v1987
        %v1989 = vadd.f32 %v1897, %v1898
        %v1990 = vrot.slane %v1989, 4
        %v1991 = vadd.f32 %v1989, %v1990
        %v1992 = vrot.slane %v1991, 2
        %v1993 = vadd.f32 %v1991, %v1992
        %v1994 = vrot.slane %v1993, 1
        %v1995 = vadd.f32 %v1993, %v1994
        %v1996 = vadd.f32 %v1899, %v1900
        %v1997 = vrot.slane %v1996, 4
        %v1998 = vadd.f32 %v1996, %v1997
        %v1999 = vrot.slane %v1998, 2
        %v2000 = vadd.f32 %v1998, %v1999
        %v2001 = vrot.slane %v2000, 1
        %v2002 = vadd.f32 %v2000, %v2001
        %v2003 = vadd.f32 %v1901, %v1902
        %v2004 = vrot.slane %v2003, 4
        %v2005 = vadd.f32 %v2003, %v2004
        %v2006 = vrot.slane %v2005, 2
        %v2007 = vadd.f32 %v2005, %v2006
        %v2008 = vrot.slane %v2007, 1
        %v2009 = vadd.f32 %v2007, %v2008
        %v2010 = vadd.f32 %v1903, %v1904
        %v2011 = vrot.slane %v2010, 4
        %v2012 = vadd.f32 %v2010, %v2011
        %v2013 = vrot.slane %v2012, 2
        %v2014 = vadd.f32 %v2012, %v2013
        %v2015 = vrot.slane %v2014, 1
        %v2016 = vadd.f32 %v2014, %v2015
        %v2017 = vpack.c.bf16 %v1911, %v1911
        %v2018 = vpack.c.bf16 %v1918, %v1918
        %v2019 = vpack.c.bf16 %v1925, %v1925
        %v2020 = vpack.c.bf16 %v1932, %v1932
        %v2021 = vpack.c.bf16 %v1939, %v1939
        %v2022 = vpack.c.bf16 %v1946, %v1946
        %v2023 = vpack.c.bf16 %v1953, %v1953
        %v2024 = vpack.c.bf16 %v1960, %v1960
        %v2025 = vpack.c.bf16 %v1967, %v1967
        %v2026 = vpack.c.bf16 %v1974, %v1974
        %v2027 = vpack.c.bf16 %v1981, %v1981
        %v2028 = vpack.c.bf16 %v1988, %v1988
        %v2029 = vpack.c.bf16 %v1995, %v1995
        %v2030 = vpack.c.bf16 %v2002, %v2002
        %v2031 = vpack.c.bf16 %v2009, %v2009
        %v2032 = vpack.c.bf16 %v2016, %v2016
        %v2049 = vunpack.c.l.b16 %v2017
        %v2050 = vunpack.c.l.b16 %v2018
        %v2051 = vunpack.c.l.b16 %v2019
        %v2052 = vunpack.c.l.b16 %v2020
        %v2053 = vunpack.c.l.b16 %v2021
        %v2054 = vunpack.c.l.b16 %v2022
        %v2055 = vunpack.c.l.b16 %v2023
        %v2056 = vunpack.c.l.b16 %v2024
        %v2057 = vunpack.c.l.b16 %v2025
        %v2058 = vunpack.c.l.b16 %v2026
        %v2059 = vunpack.c.l.b16 %v2027
        %v2060 = vunpack.c.l.b16 %v2028
        %v2061 = vunpack.c.l.b16 %v2029
        %v2062 = vunpack.c.l.b16 %v2030
        %v2063 = vunpack.c.l.b16 %v2031
        %v2064 = vunpack.c.l.b16 %v2032
        %v2065 = vsel %vm849, %v2050, %v2049
        %v2066 = vsel %vm851, %v2051, %v2065
        %v2067 = vsel %vm853, %v2052, %v2066
        %v2068 = vsel %vm855, %v2053, %v2067
        %v2069 = vsel %vm857, %v2054, %v2068
        %v2070 = vsel %vm859, %v2055, %v2069
        %v2071 = vsel %vm861, %v2056, %v2070
        %v2072 = vsel %vm849, %v2058, %v2057
        %v2073 = vsel %vm851, %v2059, %v2072
        %v2074 = vsel %vm853, %v2060, %v2073
        %v2075 = vsel %vm855, %v2061, %v2074
        %v2076 = vsel %vm857, %v2062, %v2075
        %v2077 = vsel %vm859, %v2063, %v2076
        %v2078 = vsel %vm861, %v2064, %v2077
        %v2079 = vpack.c.b16 %v2078, %v2071
        %2081 = vst [vmem:[#allocation2 + $0x18] sm:$0xff] %v2079
        %v2082 = vld [vmem:[%s249 + $0x4] sm:$0x1]
        %v2083 = vld [vmem:[%s249 + $0xd] sm:$0x1]
        %v2084 = vlaneseq
        %v2085 = vshrl.u32 %v2084, 7
        %v2086 = vsub.s32 0, %v2085
        %v2087 = vrot.slane %v2082, %v2086
        %v2088 = vsub.f32 %v2087, %v288
        %v2089 = vsub.f32 %v2087, %v289
        %v2090 = vand.u32 2147483647, %v2088
        %v2091 = vand.u32 2147483647, %v2089
        %v2092 = vsub.f32 1.0, %v2090
        %v2093 = vsub.f32 1.0, %v2091
        %v2094 = vmax.f32 %v2092, 0.0
        %v2095 = vmax.f32 %v2093, 0.0
        %v2096 = vlaneseq
        %v2097 = vshrl.u32 %v2096, 7
        %v2098 = vsub.s32 4, %v2097
        %v2099 = vrot.slane %v332, %v2098
        %v2100 = vmul.f32 %v2094, %v2099
        %v2101 = vmul.f32 %v2095, %v2099
        %v2102 = vlaneseq
        %v2103 = vshrl.u32 %v2102, 7
        %v2104 = vsub.s32 0, %v2103
        %v2105 = vrot.slane %v2083, %v2104
        %v2106 = vsub.f32 %v2105, %v288
        %v2107 = vsub.f32 %v2105, %v289
        %v2108 = vand.u32 2147483647, %v2106
        %v2109 = vand.u32 2147483647, %v2107
        %v2110 = vsub.f32 1.0, %v2108
        %v2111 = vsub.f32 1.0, %v2109
        %v2112 = vmax.f32 %v2110, 0.0
        %v2113 = vmax.f32 %v2111, 0.0
        %v2114 = vpack.c.bf16 %v2113, %v2112
        %2115 = vmatprep.subr.bf16.mxu0 0
        %2116 = vmatpush1.bf16.msra.mxu0 %v2114
        %2117 = vmatprep.subr.bf16.mxu0 0
        %2118 = vmatpush1.bf16.msra.mxu0 0
        %2119 = vmatprep.subr.bf16.mxu0 0
        %2120 = vmatpush1.bf16.msra.mxu0 0
        %2121 = vmatprep.subr.bf16.mxu0 0
        %2122 = vmatpush1.bf16.msra.mxu0 0
        %2123 = vmatprep.subr.bf16.mxu0 0
        %2124 = vmatpush1.bf16.msra.mxu0 0
        %2125 = vmatprep.subr.bf16.mxu0 0
        %2126 = vmatpush1.bf16.msra.mxu0 0
        %2127 = vmatprep.subr.bf16.mxu0 0
        %2128 = vmatpush1.bf16.msra.mxu0 0
        %2129 = vmatprep.subr.bf16.mxu0 0
        %2130 = vmatpush1.bf16.msra.mxu0 0
        %2131 = vmatprep.subr.bf16.mxu0 0
        %2132 = vmatpush1.bf16.msra.mxu0 0
        %2133 = vmatprep.subr.bf16.mxu0 0
        %2134 = vmatpush1.bf16.msra.mxu0 0
        %2135 = vmatprep.subr.bf16.mxu0 0
        %2136 = vmatpush1.bf16.msra.mxu0 0
        %2137 = vmatprep.subr.bf16.mxu0 0
        %2138 = vmatpush1.bf16.msra.mxu0 0
        %2139 = vmatprep.subr.bf16.mxu0 0
        %2140 = vmatpush1.bf16.msra.mxu0 0
        %2141 = vmatprep.subr.bf16.mxu0 0
        %2142 = vmatpush1.bf16.msra.mxu0 0
        %2143 = vmatprep.subr.bf16.mxu0 0
        %2144 = vmatpush1.bf16.msra.mxu0 0
        %2145 = vmatprep.subr.bf16.mxu0 0
        %2146 = vmatpush1.bf16.msra.mxu0 0
        %2147 = vmatprep.mubr.bf16.mxu0 0
        %2148 = vmatmul.mubr.bf16.gmra.mrb[0].mxu0 %v449
        %v2149 = vpop.f32.mrb[0].mxu0
        %v2150 = vadd.f32 0.0, %v2149
        %v2151 = vpop.f32.mrb[0].mxu0
        %v2152 = vpop.f32.mrb[0].mxu0
        %v2153 = vadd.f32 0.0, %v2152
        %v2154 = vpop.f32.mrb[0].mxu0
        %2155 = vmatprep.mubr.bf16.mxu0 0
        %2156 = vmatmul.mubr.bf16.gmra.mrb[0].mxu0 %v452
        %v2157 = vpop.f32.mrb[0].mxu0
        %v2158 = vadd.f32 0.0, %v2157
        %v2159 = vpop.f32.mrb[0].mxu0
        %v2160 = vpop.f32.mrb[0].mxu0
        %v2161 = vadd.f32 0.0, %v2160
        %v2162 = vpop.f32.mrb[0].mxu0
        %2163 = vmatprep.mubr.bf16.mxu0 0
        %2164 = vmatmul.mubr.bf16.gmra.mrb[0].mxu0 %v455
        %v2165 = vpop.f32.mrb[0].mxu0
        %v2166 = vadd.f32 0.0, %v2165
        %v2167 = vpop.f32.mrb[0].mxu0
        %v2168 = vpop.f32.mrb[0].mxu0
        %v2169 = vadd.f32 0.0, %v2168
        %v2170 = vpop.f32.mrb[0].mxu0
        %2171 = vmatprep.mubr.bf16.mxu0 0
        %2172 = vmatmul.mubr.bf16.gmra.mrb[0].mxu0 %v458
        %v2173 = vpop.f32.mrb[0].mxu0
        %v2174 = vadd.f32 0.0, %v2173
        %v2175 = vpop.f32.mrb[0].mxu0
        %v2176 = vpop.f32.mrb[0].mxu0
        %v2177 = vadd.f32 0.0, %v2176
        %v2178 = vpop.f32.mrb[0].mxu0
        %2179 = vmatprep.mubr.bf16.mxu0 0
        %2180 = vmatmul.mubr.bf16.gmra.mrb[0].mxu0 %v461
        %v2181 = vpop.f32.mrb[0].mxu0
        %v2182 = vadd.f32 0.0, %v2181
        %v2183 = vpop.f32.mrb[0].mxu0
        %v2184 = vpop.f32.mrb[0].mxu0
        %v2185 = vadd.f32 0.0, %v2184
        %v2186 = vpop.f32.mrb[0].mxu0
        %2187 = vmatprep.mubr.bf16.mxu0 0
        %2188 = vmatmul.mubr.bf16.gmra.mrb[0].mxu0 %v464
        %v2189 = vpop.f32.mrb[0].mxu0
        %v2190 = vadd.f32 0.0, %v2189
        %v2191 = vpop.f32.mrb[0].mxu0
        %v2192 = vpop.f32.mrb[0].mxu0
        %v2193 = vadd.f32 0.0, %v2192
        %v2194 = vpop.f32.mrb[0].mxu0
        %2195 = vmatprep.mubr.bf16.mxu0 0
        %2196 = vmatmul.mubr.bf16.gmra.mrb[0].mxu0 %v467
        %v2197 = vpop.f32.mrb[0].mxu0
        %v2198 = vadd.f32 0.0, %v2197
        %v2199 = vpop.f32.mrb[0].mxu0
        %v2200 = vpop.f32.mrb[0].mxu0
        %v2201 = vadd.f32 0.0, %v2200
        %v2202 = vpop.f32.mrb[0].mxu0
        %2203 = vmatprep.mubr.bf16.mxu0 0
        %2204 = vmatmul.mubr.bf16.gmra.mrb[0].mxu0 %v470
        %v2205 = vpop.f32.mrb[0].mxu0
        %v2206 = vadd.f32 0.0, %v2205
        %v2207 = vpop.f32.mrb[0].mxu0
        %v2208 = vpop.f32.mrb[0].mxu0
        %v2209 = vadd.f32 0.0, %v2208
        %v2210 = vpop.f32.mrb[0].mxu0
        %2211 = vmatprep.mubr.bf16.mxu0 0
        %2212 = vmatmul.mubr.bf16.gmra.mrb[0].mxu0 %v473
        %v2213 = vpop.f32.mrb[0].mxu0
        %v2214 = vadd.f32 0.0, %v2213
        %v2215 = vpop.f32.mrb[0].mxu0
        %v2216 = vpop.f32.mrb[0].mxu0
        %v2217 = vadd.f32 0.0, %v2216
        %v2218 = vpop.f32.mrb[0].mxu0
        %2219 = vmatprep.mubr.bf16.mxu0 0
        %2220 = vmatmul.mubr.bf16.gmra.mrb[0].mxu0 %v476
        %v2221 = vpop.f32.mrb[0].mxu0
        %v2222 = vadd.f32 0.0, %v2221
        %v2223 = vpop.f32.mrb[0].mxu0
        %v2224 = vpop.f32.mrb[0].mxu0
        %v2225 = vadd.f32 0.0, %v2224
        %v2226 = vpop.f32.mrb[0].mxu0
        %2227 = vmatprep.mubr.bf16.mxu0 0
        %2228 = vmatmul.mubr.bf16.gmra.mrb[0].mxu0 %v479
        %v2229 = vpop.f32.mrb[0].mxu0
        %v2230 = vadd.f32 0.0, %v2229
        %v2231 = vpop.f32.mrb[0].mxu0
        %v2232 = vpop.f32.mrb[0].mxu0
        %v2233 = vadd.f32 0.0, %v2232
        %v2234 = vpop.f32.mrb[0].mxu0
        %2235 = vmatprep.mubr.bf16.mxu0 0
        %2236 = vmatmul.mubr.bf16.gmra.mrb[0].mxu0 %v482
        %v2237 = vpop.f32.mrb[0].mxu0
        %v2238 = vadd.f32 0.0, %v2237
        %v2239 = vpop.f32.mrb[0].mxu0
        %v2240 = vpop.f32.mrb[0].mxu0
        %v2241 = vadd.f32 0.0, %v2240
        %v2242 = vpop.f32.mrb[0].mxu0
        %2243 = vmatprep.mubr.bf16.mxu0 0
        %2244 = vmatmul.mubr.bf16.gmra.mrb[0].mxu0 %v485
        %v2245 = vpop.f32.mrb[0].mxu0
        %v2246 = vadd.f32 0.0, %v2245
        %v2247 = vpop.f32.mrb[0].mxu0
        %v2248 = vpop.f32.mrb[0].mxu0
        %v2249 = vadd.f32 0.0, %v2248
        %v2250 = vpop.f32.mrb[0].mxu0
        %2251 = vmatprep.mubr.bf16.mxu0 0
        %2252 = vmatmul.mubr.bf16.gmra.mrb[0].mxu0 %v488
        %v2253 = vpop.f32.mrb[0].mxu0
        %v2254 = vadd.f32 0.0, %v2253
        %v2255 = vpop.f32.mrb[0].mxu0
        %v2256 = vpop.f32.mrb[0].mxu0
        %v2257 = vadd.f32 0.0, %v2256
        %v2258 = vpop.f32.mrb[0].mxu0
        %2259 = vmatprep.mubr.bf16.mxu0 0
        %2260 = vmatmul.mubr.bf16.gmra.mrb[0].mxu0 %v491
        %v2261 = vpop.f32.mrb[0].mxu0
        %v2262 = vadd.f32 0.0, %v2261
        %v2263 = vpop.f32.mrb[0].mxu0
        %v2264 = vpop.f32.mrb[0].mxu0
        %v2265 = vadd.f32 0.0, %v2264
        %v2266 = vpop.f32.mrb[0].mxu0
        %2267 = vmatprep.mubr.bf16.mxu0 0
        %2268 = vmatmul.mubr.bf16.gmra.mrb[0].mxu0 %v494
        %v2269 = vpop.f32.mrb[0].mxu0
        %v2270 = vadd.f32 0.0, %v2269
        %v2271 = vpop.f32.mrb[0].mxu0
        %v2272 = vpop.f32.mrb[0].mxu0
        %v2273 = vadd.f32 0.0, %v2272
        %v2274 = vpop.f32.mrb[0].mxu0
        %2275 = vdwg.mxu0
        %v2276 = vmul.f32 %v2150, %v2100
        %v2277 = vmul.f32 %v2153, %v2101
        %v2278 = vmul.f32 %v2158, %v2100
        %v2279 = vmul.f32 %v2161, %v2101
        %v2280 = vmul.f32 %v2166, %v2100
        %v2281 = vmul.f32 %v2169, %v2101
        %v2282 = vmul.f32 %v2174, %v2100
        %v2283 = vmul.f32 %v2177, %v2101
        %v2284 = vmul.f32 %v2182, %v2100
        %v2285 = vmul.f32 %v2185, %v2101
        %v2286 = vmul.f32 %v2190, %v2100
        %v2287 = vmul.f32 %v2193, %v2101
        %v2288 = vmul.f32 %v2198, %v2100
        %v2289 = vmul.f32 %v2201, %v2101
        %v2290 = vmul.f32 %v2206, %v2100
        %v2291 = vmul.f32 %v2209, %v2101
        %v2292 = vmul.f32 %v2214, %v2100
        %v2293 = vmul.f32 %v2217, %v2101
        %v2294 = vmul.f32 %v2222, %v2100
        %v2295 = vmul.f32 %v2225, %v2101
        %v2296 = vmul.f32 %v2230, %v2100
        %v2297 = vmul.f32 %v2233, %v2101
        %v2298 = vmul.f32 %v2238, %v2100
        %v2299 = vmul.f32 %v2241, %v2101
        %v2300 = vmul.f32 %v2246, %v2100
        %v2301 = vmul.f32 %v2249, %v2101
        %v2302 = vmul.f32 %v2254, %v2100
        %v2303 = vmul.f32 %v2257, %v2101
        %v2304 = vmul.f32 %v2262, %v2100
        %v2305 = vmul.f32 %v2265, %v2101
        %v2306 = vmul.f32 %v2270, %v2100
        %v2307 = vmul.f32 %v2273, %v2101
        %v2308 = vadd.f32 %v2276, %v2277
        %v2309 = vrot.slane %v2308, 4
        %v2310 = vadd.f32 %v2308, %v2309
        %v2311 = vrot.slane %v2310, 2
        %v2312 = vadd.f32 %v2310, %v2311
        %v2313 = vrot.slane %v2312, 1
        %v2314 = vadd.f32 %v2312, %v2313
        %v2315 = vadd.f32 %v2278, %v2279
        %v2316 = vrot.slane %v2315, 4
        %v2317 = vadd.f32 %v2315, %v2316
        %v2318 = vrot.slane %v2317, 2
        %v2319 = vadd.f32 %v2317, %v2318
        %v2320 = vrot.slane %v2319, 1
        %v2321 = vadd.f32 %v2319, %v2320
        %v2322 = vadd.f32 %v2280, %v2281
        %v2323 = vrot.slane %v2322, 4
        %v2324 = vadd.f32 %v2322, %v2323
        %v2325 = vrot.slane %v2324, 2
        %v2326 = vadd.f32 %v2324, %v2325
        %v2327 = vrot.slane %v2326, 1
        %v2328 = vadd.f32 %v2326, %v2327
        %v2329 = vadd.f32 %v2282, %v2283
        %v2330 = vrot.slane %v2329, 4
        %v2331 = vadd.f32 %v2329, %v2330
        %v2332 = vrot.slane %v2331, 2
        %v2333 = vadd.f32 %v2331, %v2332
        %v2334 = vrot.slane %v2333, 1
        %v2335 = vadd.f32 %v2333, %v2334
        %v2336 = vadd.f32 %v2284, %v2285
        %v2337 = vrot.slane %v2336, 4
        %v2338 = vadd.f32 %v2336, %v2337
        %v2339 = vrot.slane %v2338, 2
        %v2340 = vadd.f32 %v2338, %v2339
        %v2341 = vrot.slane %v2340, 1
        %v2342 = vadd.f32 %v2340, %v2341
        %v2343 = vadd.f32 %v2286, %v2287
        %v2344 = vrot.slane %v2343, 4
        %v2345 = vadd.f32 %v2343, %v2344
        %v2346 = vrot.slane %v2345, 2
        %v2347 = vadd.f32 %v2345, %v2346
        %v2348 = vrot.slane %v2347, 1
        %v2349 = vadd.f32 %v2347, %v2348
        %v2350 = vadd.f32 %v2288, %v2289
        %v2351 = vrot.slane %v2350, 4
        %v2352 = vadd.f32 %v2350, %v2351
        %v2353 = vrot.slane %v2352, 2
        %v2354 = vadd.f32 %v2352, %v2353
        %v2355 = vrot.slane %v2354, 1
        %v2356 = vadd.f32 %v2354, %v2355
        %v2357 = vadd.f32 %v2290, %v2291
        %v2358 = vrot.slane %v2357, 4
        %v2359 = vadd.f32 %v2357, %v2358
        %v2360 = vrot.slane %v2359, 2
        %v2361 = vadd.f32 %v2359, %v2360
        %v2362 = vrot.slane %v2361, 1
        %v2363 = vadd.f32 %v2361, %v2362
        %v2364 = vadd.f32 %v2292, %v2293
        %v2365 = vrot.slane %v2364, 4
        %v2366 = vadd.f32 %v2364, %v2365
        %v2367 = vrot.slane %v2366, 2
        %v2368 = vadd.f32 %v2366, %v2367
        %v2369 = vrot.slane %v2368, 1
        %v2370 = vadd.f32 %v2368, %v2369
        %v2371 = vadd.f32 %v2294, %v2295
        %v2372 = vrot.slane %v2371, 4
        %v2373 = vadd.f32 %v2371, %v2372
        %v2374 = vrot.slane %v2373, 2
        %v2375 = vadd.f32 %v2373, %v2374
        %v2376 = vrot.slane %v2375, 1
        %v2377 = vadd.f32 %v2375, %v2376
        %v2378 = vadd.f32 %v2296, %v2297
        %v2379 = vrot.slane %v2378, 4
        %v2380 = vadd.f32 %v2378, %v2379
        %v2381 = vrot.slane %v2380, 2
        %v2382 = vadd.f32 %v2380, %v2381
        %v2383 = vrot.slane %v2382, 1
        %v2384 = vadd.f32 %v2382, %v2383
        %v2385 = vadd.f32 %v2298, %v2299
        %v2386 = vrot.slane %v2385, 4
        %v2387 = vadd.f32 %v2385, %v2386
        %v2388 = vrot.slane %v2387, 2
        %v2389 = vadd.f32 %v2387, %v2388
        %v2390 = vrot.slane %v2389, 1
        %v2391 = vadd.f32 %v2389, %v2390
        %v2392 = vadd.f32 %v2300, %v2301
        %v2393 = vrot.slane %v2392, 4
        %v2394 = vadd.f32 %v2392, %v2393
        %v2395 = vrot.slane %v2394, 2
        %v2396 = vadd.f32 %v2394, %v2395
        %v2397 = vrot.slane %v2396, 1
        %v2398 = vadd.f32 %v2396, %v2397
        %v2399 = vadd.f32 %v2302, %v2303
        %v2400 = vrot.slane %v2399, 4
        %v2401 = vadd.f32 %v2399, %v2400
        %v2402 = vrot.slane %v2401, 2
        %v2403 = vadd.f32 %v2401, %v2402
        %v2404 = vrot.slane %v2403, 1
        %v2405 = vadd.f32 %v2403, %v2404
        %v2406 = vadd.f32 %v2304, %v2305
        %v2407 = vrot.slane %v2406, 4
        %v2408 = vadd.f32 %v2406, %v2407
        %v2409 = vrot.slane %v2408, 2
        %v2410 = vadd.f32 %v2408, %v2409
        %v2411 = vrot.slane %v2410, 1
        %v2412 = vadd.f32 %v2410, %v2411
        %v2413 = vadd.f32 %v2306, %v2307
        %v2414 = vrot.slane %v2413, 4
        %v2415 = vadd.f32 %v2413, %v2414
        %v2416 = vrot.slane %v2415, 2
        %v2417 = vadd.f32 %v2415, %v2416
        %v2418 = vrot.slane %v2417, 1
        %v2419 = vadd.f32 %v2417, %v2418
        %v2420 = vpack.c.bf16 %v2314, %v2314
        %v2421 = vpack.c.bf16 %v2321, %v2321
        %v2422 = vpack.c.bf16 %v2328, %v2328
        %v2423 = vpack.c.bf16 %v2335, %v2335
        %v2424 = vpack.c.bf16 %v2342, %v2342
        %v2425 = vpack.c.bf16 %v2349, %v2349
        %v2426 = vpack.c.bf16 %v2356, %v2356
        %v2427 = vpack.c.bf16 %v2363, %v2363
        %v2428 = vpack.c.bf16 %v2370, %v2370
        %v2429 = vpack.c.bf16 %v2377, %v2377
        %v2430 = vpack.c.bf16 %v2384, %v2384
        %v2431 = vpack.c.bf16 %v2391, %v2391
        %v2432 = vpack.c.bf16 %v2398, %v2398
        %v2433 = vpack.c.bf16 %v2405, %v2405
        %v2434 = vpack.c.bf16 %v2412, %v2412
        %v2435 = vpack.c.bf16 %v2419, %v2419
        %v2452 = vunpack.c.l.b16 %v2420
        %v2453 = vunpack.c.l.b16 %v2421
        %v2454 = vunpack.c.l.b16 %v2422
        %v2455 = vunpack.c.l.b16 %v2423
        %v2456 = vunpack.c.l.b16 %v2424
        %v2457 = vunpack.c.l.b16 %v2425
        %v2458 = vunpack.c.l.b16 %v2426
        %v2459 = vunpack.c.l.b16 %v2427
        %v2460 = vunpack.c.l.b16 %v2428
        %v2461 = vunpack.c.l.b16 %v2429
        %v2462 = vunpack.c.l.b16 %v2430
        %v2463 = vunpack.c.l.b16 %v2431
        %v2464 = vunpack.c.l.b16 %v2432
        %v2465 = vunpack.c.l.b16 %v2433
        %v2466 = vunpack.c.l.b16 %v2434
        %v2467 = vunpack.c.l.b16 %v2435
        %v2468 = vsel %vm849, %v2453, %v2452
        %v2469 = vsel %vm851, %v2454, %v2468
        %v2470 = vsel %vm853, %v2455, %v2469
        %v2471 = vsel %vm855, %v2456, %v2470
        %v2472 = vsel %vm857, %v2457, %v2471
        %v2473 = vsel %vm859, %v2458, %v2472
        %v2474 = vsel %vm861, %v2459, %v2473
        %v2475 = vsel %vm849, %v2461, %v2460
        %v2476 = vsel %vm851, %v2462, %v2475
        %v2477 = vsel %vm853, %v2463, %v2476
        %v2478 = vsel %vm855, %v2464, %v2477
        %v2479 = vsel %vm857, %v2465, %v2478
        %v2480 = vsel %vm859, %v2466, %v2479
        %v2481 = vsel %vm861, %v2467, %v2480
        %v2482 = vpack.c.b16 %v2481, %v2474
        %2484 = vst [vmem:[#allocation2 + $0x20] sm:$0xff] %v2482
        %v2485 = vld [vmem:[%s249 + $0x5] sm:$0x1]
        %v2486 = vld [vmem:[%s249 + $0xe] sm:$0x1]
        %v2487 = vlaneseq
        %v2488 = vshrl.u32 %v2487, 7
        %v2489 = vsub.s32 0, %v2488
        %v2490 = vrot.slane %v2485, %v2489
        %v2491 = vsub.f32 %v2490, %v288
        %v2492 = vsub.f32 %v2490, %v289
        %v2493 = vand.u32 2147483647, %v2491
        %v2494 = vand.u32 2147483647, %v2492
        %v2495 = vsub.f32 1.0, %v2493
        %v2496 = vsub.f32 1.0, %v2494
        %v2497 = vmax.f32 %v2495, 0.0
        %v2498 = vmax.f32 %v2496, 0.0
        %v2499 = vlaneseq
        %v2500 = vshrl.u32 %v2499, 7
        %v2501 = vsub.s32 5, %v2500
        %v2502 = vrot.slane %v332, %v2501
        %v2503 = vmul.f32 %v2497, %v2502
        %v2504 = vmul.f32 %v2498, %v2502
        %v2505 = vlaneseq
        %v2506 = vshrl.u32 %v2505, 7
        %v2507 = vsub.s32 0, %v2506
        %v2508 = vrot.slane %v2486, %v2507
        %v2509 = vsub.f32 %v2508, %v288
        %v2510 = vsub.f32 %v2508, %v289
        %v2511 = vand.u32 2147483647, %v2509
        %v2512 = vand.u32 2147483647, %v2510
        %v2513 = vsub.f32 1.0, %v2511
        %v2514 = vsub.f32 1.0, %v2512
        %v2515 = vmax.f32 %v2513, 0.0
        %v2516 = vmax.f32 %v2514, 0.0
        %v2517 = vpack.c.bf16 %v2516, %v2515
        %2518 = vmatprep.subr.bf16.mxu0 0
        %2519 = vmatpush1.bf16.msra.mxu0 %v2517
        %2520 = vmatprep.subr.bf16.mxu0 0
        %2521 = vmatpush1.bf16.msra.mxu0 0
        %2522 = vmatprep.subr.bf16.mxu0 0
        %2523 = vmatpush1.bf16.msra.mxu0 0
        %2524 = vmatprep.subr.bf16.mxu0 0
        %2525 = vmatpush1.bf16.msra.mxu0 0
        %2526 = vmatprep.subr.bf16.mxu0 0
        %2527 = vmatpush1.bf16.msra.mxu0 0
        %2528 = vmatprep.subr.bf16.mxu0 0
        %2529 = vmatpush1.bf16.msra.mxu0 0
        %2530 = vmatprep.subr.bf16.mxu0 0
        %2531 = vmatpush1.bf16.msra.mxu0 0
        %2532 = vmatprep.subr.bf16.mxu0 0
        %2533 = vmatpush1.bf16.msra.mxu0 0
        %2534 = vmatprep.subr.bf16.mxu0 0
        %2535 = vmatpush1.bf16.msra.mxu0 0
        %2536 = vmatprep.subr.bf16.mxu0 0
        %2537 = vmatpush1.bf16.msra.mxu0 0
        %2538 = vmatprep.subr.bf16.mxu0 0
        %2539 = vmatpush1.bf16.msra.mxu0 0
        %2540 = vmatprep.subr.bf16.mxu0 0
        %2541 = vmatpush1.bf16.msra.mxu0 0
        %2542 = vmatprep.subr.bf16.mxu0 0
        %2543 = vmatpush1.bf16.msra.mxu0 0
        %2544 = vmatprep.subr.bf16.mxu0 0
        %2545 = vmatpush1.bf16.msra.mxu0 0
        %2546 = vmatprep.subr.bf16.mxu0 0
        %2547 = vmatpush1.bf16.msra.mxu0 0
        %2548 = vmatprep.subr.bf16.mxu0 0
        %2549 = vmatpush1.bf16.msra.mxu0 0
        %2550 = vmatprep.mubr.bf16.mxu0 0
        %2551 = vmatmul.mubr.bf16.gmra.mrb[0].mxu0 %v449
        %v2552 = vpop.f32.mrb[0].mxu0
        %v2553 = vadd.f32 0.0, %v2552
        %v2554 = vpop.f32.mrb[0].mxu0
        %v2555 = vpop.f32.mrb[0].mxu0
        %v2556 = vadd.f32 0.0, %v2555
        %v2557 = vpop.f32.mrb[0].mxu0
        %2558 = vmatprep.mubr.bf16.mxu0 0
        %2559 = vmatmul.mubr.bf16.gmra.mrb[0].mxu0 %v452
        %v2560 = vpop.f32.mrb[0].mxu0
        %v2561 = vadd.f32 0.0, %v2560
        %v2562 = vpop.f32.mrb[0].mxu0
        %v2563 = vpop.f32.mrb[0].mxu0
        %v2564 = vadd.f32 0.0, %v2563
        %v2565 = vpop.f32.mrb[0].mxu0
        %2566 = vmatprep.mubr.bf16.mxu0 0
        %2567 = vmatmul.mubr.bf16.gmra.mrb[0].mxu0 %v455
        %v2568 = vpop.f32.mrb[0].mxu0
        %v2569 = vadd.f32 0.0, %v2568
        %v2570 = vpop.f32.mrb[0].mxu0
        %v2571 = vpop.f32.mrb[0].mxu0
        %v2572 = vadd.f32 0.0, %v2571
        %v2573 = vpop.f32.mrb[0].mxu0
        %2574 = vmatprep.mubr.bf16.mxu0 0
        %2575 = vmatmul.mubr.bf16.gmra.mrb[0].mxu0 %v458
        %v2576 = vpop.f32.mrb[0].mxu0
        %v2577 = vadd.f32 0.0, %v2576
        %v2578 = vpop.f32.mrb[0].mxu0
        %v2579 = vpop.f32.mrb[0].mxu0
        %v2580 = vadd.f32 0.0, %v2579
        %v2581 = vpop.f32.mrb[0].mxu0
        %2582 = vmatprep.mubr.bf16.mxu0 0
        %2583 = vmatmul.mubr.bf16.gmra.mrb[0].mxu0 %v461
        %v2584 = vpop.f32.mrb[0].mxu0
        %v2585 = vadd.f32 0.0, %v2584
        %v2586 = vpop.f32.mrb[0].mxu0
        %v2587 = vpop.f32.mrb[0].mxu0
        %v2588 = vadd.f32 0.0, %v2587
        %v2589 = vpop.f32.mrb[0].mxu0
        %2590 = vmatprep.mubr.bf16.mxu0 0
        %2591 = vmatmul.mubr.bf16.gmra.mrb[0].mxu0 %v464
        %v2592 = vpop.f32.mrb[0].mxu0
        %v2593 = vadd.f32 0.0, %v2592
        %v2594 = vpop.f32.mrb[0].mxu0
        %v2595 = vpop.f32.mrb[0].mxu0
        %v2596 = vadd.f32 0.0, %v2595
        %v2597 = vpop.f32.mrb[0].mxu0
        %2598 = vmatprep.mubr.bf16.mxu0 0
        %2599 = vmatmul.mubr.bf16.gmra.mrb[0].mxu0 %v467
        %v2600 = vpop.f32.mrb[0].mxu0
        %v2601 = vadd.f32 0.0, %v2600
        %v2602 = vpop.f32.mrb[0].mxu0
        %v2603 = vpop.f32.mrb[0].mxu0
        %v2604 = vadd.f32 0.0, %v2603
        %v2605 = vpop.f32.mrb[0].mxu0
        %2606 = vmatprep.mubr.bf16.mxu0 0
        %2607 = vmatmul.mubr.bf16.gmra.mrb[0].mxu0 %v470
        %v2608 = vpop.f32.mrb[0].mxu0
        %v2609 = vadd.f32 0.0, %v2608
        %v2610 = vpop.f32.mrb[0].mxu0
        %v2611 = vpop.f32.mrb[0].mxu0
        %v2612 = vadd.f32 0.0, %v2611
        %v2613 = vpop.f32.mrb[0].mxu0
        %2614 = vmatprep.mubr.bf16.mxu0 0
        %2615 = vmatmul.mubr.bf16.gmra.mrb[0].mxu0 %v473
        %v2616 = vpop.f32.mrb[0].mxu0
        %v2617 = vadd.f32 0.0, %v2616
        %v2618 = vpop.f32.mrb[0].mxu0
        %v2619 = vpop.f32.mrb[0].mxu0
        %v2620 = vadd.f32 0.0, %v2619
        %v2621 = vpop.f32.mrb[0].mxu0
        %2622 = vmatprep.mubr.bf16.mxu0 0
        %2623 = vmatmul.mubr.bf16.gmra.mrb[0].mxu0 %v476
        %v2624 = vpop.f32.mrb[0].mxu0
        %v2625 = vadd.f32 0.0, %v2624
        %v2626 = vpop.f32.mrb[0].mxu0
        %v2627 = vpop.f32.mrb[0].mxu0
        %v2628 = vadd.f32 0.0, %v2627
        %v2629 = vpop.f32.mrb[0].mxu0
        %2630 = vmatprep.mubr.bf16.mxu0 0
        %2631 = vmatmul.mubr.bf16.gmra.mrb[0].mxu0 %v479
        %v2632 = vpop.f32.mrb[0].mxu0
        %v2633 = vadd.f32 0.0, %v2632
        %v2634 = vpop.f32.mrb[0].mxu0
        %v2635 = vpop.f32.mrb[0].mxu0
        %v2636 = vadd.f32 0.0, %v2635
        %v2637 = vpop.f32.mrb[0].mxu0
        %2638 = vmatprep.mubr.bf16.mxu0 0
        %2639 = vmatmul.mubr.bf16.gmra.mrb[0].mxu0 %v482
        %v2640 = vpop.f32.mrb[0].mxu0
        %v2641 = vadd.f32 0.0, %v2640
        %v2642 = vpop.f32.mrb[0].mxu0
        %v2643 = vpop.f32.mrb[0].mxu0
        %v2644 = vadd.f32 0.0, %v2643
        %v2645 = vpop.f32.mrb[0].mxu0
        %2646 = vmatprep.mubr.bf16.mxu0 0
        %2647 = vmatmul.mubr.bf16.gmra.mrb[0].mxu0 %v485
        %v2648 = vpop.f32.mrb[0].mxu0
        %v2649 = vadd.f32 0.0, %v2648
        %v2650 = vpop.f32.mrb[0].mxu0
        %v2651 = vpop.f32.mrb[0].mxu0
        %v2652 = vadd.f32 0.0, %v2651
        %v2653 = vpop.f32.mrb[0].mxu0
        %2654 = vmatprep.mubr.bf16.mxu0 0
        %2655 = vmatmul.mubr.bf16.gmra.mrb[0].mxu0 %v488
        %v2656 = vpop.f32.mrb[0].mxu0
        %v2657 = vadd.f32 0.0, %v2656
        %v2658 = vpop.f32.mrb[0].mxu0
        %v2659 = vpop.f32.mrb[0].mxu0
        %v2660 = vadd.f32 0.0, %v2659
        %v2661 = vpop.f32.mrb[0].mxu0
        %2662 = vmatprep.mubr.bf16.mxu0 0
        %2663 = vmatmul.mubr.bf16.gmra.mrb[0].mxu0 %v491
        %v2664 = vpop.f32.mrb[0].mxu0
        %v2665 = vadd.f32 0.0, %v2664
        %v2666 = vpop.f32.mrb[0].mxu0
        %v2667 = vpop.f32.mrb[0].mxu0
        %v2668 = vadd.f32 0.0, %v2667
        %v2669 = vpop.f32.mrb[0].mxu0
        %2670 = vmatprep.mubr.bf16.mxu0 0
        %2671 = vmatmul.mubr.bf16.gmra.mrb[0].mxu0 %v494
        %v2672 = vpop.f32.mrb[0].mxu0
        %v2673 = vadd.f32 0.0, %v2672
        %v2674 = vpop.f32.mrb[0].mxu0
        %v2675 = vpop.f32.mrb[0].mxu0
        %v2676 = vadd.f32 0.0, %v2675
        %v2677 = vpop.f32.mrb[0].mxu0
        %2678 = vdwg.mxu0
        %v2679 = vmul.f32 %v2553, %v2503
        %v2680 = vmul.f32 %v2556, %v2504
        %v2681 = vmul.f32 %v2561, %v2503
        %v2682 = vmul.f32 %v2564, %v2504
        %v2683 = vmul.f32 %v2569, %v2503
        %v2684 = vmul.f32 %v2572, %v2504
        %v2685 = vmul.f32 %v2577, %v2503
        %v2686 = vmul.f32 %v2580, %v2504
        %v2687 = vmul.f32 %v2585, %v2503
        %v2688 = vmul.f32 %v2588, %v2504
        %v2689 = vmul.f32 %v2593, %v2503
        %v2690 = vmul.f32 %v2596, %v2504
        %v2691 = vmul.f32 %v2601, %v2503
        %v2692 = vmul.f32 %v2604, %v2504
        %v2693 = vmul.f32 %v2609, %v2503
        %v2694 = vmul.f32 %v2612, %v2504
        %v2695 = vmul.f32 %v2617, %v2503
        %v2696 = vmul.f32 %v2620, %v2504
        %v2697 = vmul.f32 %v2625, %v2503
        %v2698 = vmul.f32 %v2628, %v2504
        %v2699 = vmul.f32 %v2633, %v2503
        %v2700 = vmul.f32 %v2636, %v2504
        %v2701 = vmul.f32 %v2641, %v2503
        %v2702 = vmul.f32 %v2644, %v2504
        %v2703 = vmul.f32 %v2649, %v2503
        %v2704 = vmul.f32 %v2652, %v2504
        %v2705 = vmul.f32 %v2657, %v2503
        %v2706 = vmul.f32 %v2660, %v2504
        %v2707 = vmul.f32 %v2665, %v2503
        %v2708 = vmul.f32 %v2668, %v2504
        %v2709 = vmul.f32 %v2673, %v2503
        %v2710 = vmul.f32 %v2676, %v2504
        %v2711 = vadd.f32 %v2679, %v2680
        %v2712 = vrot.slane %v2711, 4
        %v2713 = vadd.f32 %v2711, %v2712
        %v2714 = vrot.slane %v2713, 2
        %v2715 = vadd.f32 %v2713, %v2714
        %v2716 = vrot.slane %v2715, 1
        %v2717 = vadd.f32 %v2715, %v2716
        %v2718 = vadd.f32 %v2681, %v2682
        %v2719 = vrot.slane %v2718, 4
        %v2720 = vadd.f32 %v2718, %v2719
        %v2721 = vrot.slane %v2720, 2
        %v2722 = vadd.f32 %v2720, %v2721
        %v2723 = vrot.slane %v2722, 1
        %v2724 = vadd.f32 %v2722, %v2723
        %v2725 = vadd.f32 %v2683, %v2684
        %v2726 = vrot.slane %v2725, 4
        %v2727 = vadd.f32 %v2725, %v2726
        %v2728 = vrot.slane %v2727, 2
        %v2729 = vadd.f32 %v2727, %v2728
        %v2730 = vrot.slane %v2729, 1
        %v2731 = vadd.f32 %v2729, %v2730
        %v2732 = vadd.f32 %v2685, %v2686
        %v2733 = vrot.slane %v2732, 4
        %v2734 = vadd.f32 %v2732, %v2733
        %v2735 = vrot.slane %v2734, 2
        %v2736 = vadd.f32 %v2734, %v2735
        %v2737 = vrot.slane %v2736, 1
        %v2738 = vadd.f32 %v2736, %v2737
        %v2739 = vadd.f32 %v2687, %v2688
        %v2740 = vrot.slane %v2739, 4
        %v2741 = vadd.f32 %v2739, %v2740
        %v2742 = vrot.slane %v2741, 2
        %v2743 = vadd.f32 %v2741, %v2742
        %v2744 = vrot.slane %v2743, 1
        %v2745 = vadd.f32 %v2743, %v2744
        %v2746 = vadd.f32 %v2689, %v2690
        %v2747 = vrot.slane %v2746, 4
        %v2748 = vadd.f32 %v2746, %v2747
        %v2749 = vrot.slane %v2748, 2
        %v2750 = vadd.f32 %v2748, %v2749
        %v2751 = vrot.slane %v2750, 1
        %v2752 = vadd.f32 %v2750, %v2751
        %v2753 = vadd.f32 %v2691, %v2692
        %v2754 = vrot.slane %v2753, 4
        %v2755 = vadd.f32 %v2753, %v2754
        %v2756 = vrot.slane %v2755, 2
        %v2757 = vadd.f32 %v2755, %v2756
        %v2758 = vrot.slane %v2757, 1
        %v2759 = vadd.f32 %v2757, %v2758
        %v2760 = vadd.f32 %v2693, %v2694
        %v2761 = vrot.slane %v2760, 4
        %v2762 = vadd.f32 %v2760, %v2761
        %v2763 = vrot.slane %v2762, 2
        %v2764 = vadd.f32 %v2762, %v2763
        %v2765 = vrot.slane %v2764, 1
        %v2766 = vadd.f32 %v2764, %v2765
        %v2767 = vadd.f32 %v2695, %v2696
        %v2768 = vrot.slane %v2767, 4
        %v2769 = vadd.f32 %v2767, %v2768
        %v2770 = vrot.slane %v2769, 2
        %v2771 = vadd.f32 %v2769, %v2770
        %v2772 = vrot.slane %v2771, 1
        %v2773 = vadd.f32 %v2771, %v2772
        %v2774 = vadd.f32 %v2697, %v2698
        %v2775 = vrot.slane %v2774, 4
        %v2776 = vadd.f32 %v2774, %v2775
        %v2777 = vrot.slane %v2776, 2
        %v2778 = vadd.f32 %v2776, %v2777
        %v2779 = vrot.slane %v2778, 1
        %v2780 = vadd.f32 %v2778, %v2779
        %v2781 = vadd.f32 %v2699, %v2700
        %v2782 = vrot.slane %v2781, 4
        %v2783 = vadd.f32 %v2781, %v2782
        %v2784 = vrot.slane %v2783, 2
        %v2785 = vadd.f32 %v2783, %v2784
        %v2786 = vrot.slane %v2785, 1
        %v2787 = vadd.f32 %v2785, %v2786
        %v2788 = vadd.f32 %v2701, %v2702
        %v2789 = vrot.slane %v2788, 4
        %v2790 = vadd.f32 %v2788, %v2789
        %v2791 = vrot.slane %v2790, 2
        %v2792 = vadd.f32 %v2790, %v2791
        %v2793 = vrot.slane %v2792, 1
        %v2794 = vadd.f32 %v2792, %v2793
        %v2795 = vadd.f32 %v2703, %v2704
        %v2796 = vrot.slane %v2795, 4
        %v2797 = vadd.f32 %v2795, %v2796
        %v2798 = vrot.slane %v2797, 2
        %v2799 = vadd.f32 %v2797, %v2798
        %v2800 = vrot.slane %v2799, 1
        %v2801 = vadd.f32 %v2799, %v2800
        %v2802 = vadd.f32 %v2705, %v2706
        %v2803 = vrot.slane %v2802, 4
        %v2804 = vadd.f32 %v2802, %v2803
        %v2805 = vrot.slane %v2804, 2
        %v2806 = vadd.f32 %v2804, %v2805
        %v2807 = vrot.slane %v2806, 1
        %v2808 = vadd.f32 %v2806, %v2807
        %v2809 = vadd.f32 %v2707, %v2708
        %v2810 = vrot.slane %v2809, 4
        %v2811 = vadd.f32 %v2809, %v2810
        %v2812 = vrot.slane %v2811, 2
        %v2813 = vadd.f32 %v2811, %v2812
        %v2814 = vrot.slane %v2813, 1
        %v2815 = vadd.f32 %v2813, %v2814
        %v2816 = vadd.f32 %v2709, %v2710
        %v2817 = vrot.slane %v2816, 4
        %v2818 = vadd.f32 %v2816, %v2817
        %v2819 = vrot.slane %v2818, 2
        %v2820 = vadd.f32 %v2818, %v2819
        %v2821 = vrot.slane %v2820, 1
        %v2822 = vadd.f32 %v2820, %v2821
        %v2823 = vpack.c.bf16 %v2717, %v2717
        %v2824 = vpack.c.bf16 %v2724, %v2724
        %v2825 = vpack.c.bf16 %v2731, %v2731
        %v2826 = vpack.c.bf16 %v2738, %v2738
        %v2827 = vpack.c.bf16 %v2745, %v2745
        %v2828 = vpack.c.bf16 %v2752, %v2752
        %v2829 = vpack.c.bf16 %v2759, %v2759
        %v2830 = vpack.c.bf16 %v2766, %v2766
        %v2831 = vpack.c.bf16 %v2773, %v2773
        %v2832 = vpack.c.bf16 %v2780, %v2780
        %v2833 = vpack.c.bf16 %v2787, %v2787
        %v2834 = vpack.c.bf16 %v2794, %v2794
        %v2835 = vpack.c.bf16 %v2801, %v2801
        %v2836 = vpack.c.bf16 %v2808, %v2808
        %v2837 = vpack.c.bf16 %v2815, %v2815
        %v2838 = vpack.c.bf16 %v2822, %v2822
        %v2855 = vunpack.c.l.b16 %v2823
        %v2856 = vunpack.c.l.b16 %v2824
        %v2857 = vunpack.c.l.b16 %v2825
        %v2858 = vunpack.c.l.b16 %v2826
        %v2859 = vunpack.c.l.b16 %v2827
        %v2860 = vunpack.c.l.b16 %v2828
        %v2861 = vunpack.c.l.b16 %v2829
        %v2862 = vunpack.c.l.b16 %v2830
        %v2863 = vunpack.c.l.b16 %v2831
        %v2864 = vunpack.c.l.b16 %v2832
        %v2865 = vunpack.c.l.b16 %v2833
        %v2866 = vunpack.c.l.b16 %v2834
        %v2867 = vunpack.c.l.b16 %v2835
        %v2868 = vunpack.c.l.b16 %v2836
        %v2869 = vunpack.c.l.b16 %v2837
        %v2870 = vunpack.c.l.b16 %v2838
        %v2871 = vsel %vm849, %v2856, %v2855
        %v2872 = vsel %vm851, %v2857, %v2871
        %v2873 = vsel %vm853, %v2858, %v2872
        %v2874 = vsel %vm855, %v2859, %v2873
        %v2875 = vsel %vm857, %v2860, %v2874
        %v2876 = vsel %vm859, %v2861, %v2875
        %v2877 = vsel %vm861, %v2862, %v2876
        %v2878 = vsel %vm849, %v2864, %v2863
        %v2879 = vsel %vm851, %v2865, %v2878
        %v2880 = vsel %vm853, %v2866, %v2879
        %v2881 = vsel %vm855, %v2867, %v2880
        %v2882 = vsel %vm857, %v2868, %v2881
        %v2883 = vsel %vm859, %v2869, %v2882
        %v2884 = vsel %vm861, %v2870, %v2883
        %v2885 = vpack.c.b16 %v2884, %v2877
        %2887 = vst [vmem:[#allocation2 + $0x28] sm:$0xff] %v2885
        %v2888 = vld [vmem:[%s249 + $0x6] sm:$0x1]
        %v2889 = vld [vmem:[%s249 + $0xf] sm:$0x1]
        %v2890 = vlaneseq
        %v2891 = vshrl.u32 %v2890, 7
        %v2892 = vsub.s32 0, %v2891
        %v2893 = vrot.slane %v2888, %v2892
        %v2894 = vsub.f32 %v2893, %v288
        %v2895 = vsub.f32 %v2893, %v289
        %v2896 = vand.u32 2147483647, %v2894
        %v2897 = vand.u32 2147483647, %v2895
        %v2898 = vsub.f32 1.0, %v2896
        %v2899 = vsub.f32 1.0, %v2897
        %v2900 = vmax.f32 %v2898, 0.0
        %v2901 = vmax.f32 %v2899, 0.0
        %v2902 = vlaneseq
        %v2903 = vshrl.u32 %v2902, 7
        %v2904 = vsub.s32 6, %v2903
        %v2905 = vrot.slane %v332, %v2904
        %v2906 = vmul.f32 %v2900, %v2905
        %v2907 = vmul.f32 %v2901, %v2905
        %v2908 = vlaneseq
        %v2909 = vshrl.u32 %v2908, 7
        %v2910 = vsub.s32 0, %v2909
        %v2911 = vrot.slane %v2889, %v2910
        %v2912 = vsub.f32 %v2911, %v288
        %v2913 = vsub.f32 %v2911, %v289
        %v2914 = vand.u32 2147483647, %v2912
        %v2915 = vand.u32 2147483647, %v2913
        %v2916 = vsub.f32 1.0, %v2914
        %v2917 = vsub.f32 1.0, %v2915
        %v2918 = vmax.f32 %v2916, 0.0
        %v2919 = vmax.f32 %v2917, 0.0
        %v2920 = vpack.c.bf16 %v2919, %v2918
        %2921 = vmatprep.subr.bf16.mxu0 0
        %2922 = vmatpush1.bf16.msra.mxu0 %v2920
        %2923 = vmatprep.subr.bf16.mxu0 0
        %2924 = vmatpush1.bf16.msra.mxu0 0
        %2925 = vmatprep.subr.bf16.mxu0 0
        %2926 = vmatpush1.bf16.msra.mxu0 0
        %2927 = vmatprep.subr.bf16.mxu0 0
        %2928 = vmatpush1.bf16.msra.mxu0 0
        %2929 = vmatprep.subr.bf16.mxu0 0
        %2930 = vmatpush1.bf16.msra.mxu0 0
        %2931 = vmatprep.subr.bf16.mxu0 0
        %2932 = vmatpush1.bf16.msra.mxu0 0
        %2933 = vmatprep.subr.bf16.mxu0 0
        %2934 = vmatpush1.bf16.msra.mxu0 0
        %2935 = vmatprep.subr.bf16.mxu0 0
        %2936 = vmatpush1.bf16.msra.mxu0 0
        %2937 = vmatprep.subr.bf16.mxu0 0
        %2938 = vmatpush1.bf16.msra.mxu0 0
        %2939 = vmatprep.subr.bf16.mxu0 0
        %2940 = vmatpush1.bf16.msra.mxu0 0
        %2941 = vmatprep.subr.bf16.mxu0 0
        %2942 = vmatpush1.bf16.msra.mxu0 0
        %2943 = vmatprep.subr.bf16.mxu0 0
        %2944 = vmatpush1.bf16.msra.mxu0 0
        %2945 = vmatprep.subr.bf16.mxu0 0
        %2946 = vmatpush1.bf16.msra.mxu0 0
        %2947 = vmatprep.subr.bf16.mxu0 0
        %2948 = vmatpush1.bf16.msra.mxu0 0
        %2949 = vmatprep.subr.bf16.mxu0 0
        %2950 = vmatpush1.bf16.msra.mxu0 0
        %2951 = vmatprep.subr.bf16.mxu0 0
        %2952 = vmatpush1.bf16.msra.mxu0 0
        %2953 = vmatprep.mubr.bf16.mxu0 0
        %2954 = vmatmul.mubr.bf16.gmra.mrb[0].mxu0 %v449
        %v2955 = vpop.f32.mrb[0].mxu0
        %v2956 = vadd.f32 0.0, %v2955
        %v2957 = vpop.f32.mrb[0].mxu0
        %v2958 = vpop.f32.mrb[0].mxu0
        %v2959 = vadd.f32 0.0, %v2958
        %v2960 = vpop.f32.mrb[0].mxu0
        %2961 = vmatprep.mubr.bf16.mxu0 0
        %2962 = vmatmul.mubr.bf16.gmra.mrb[0].mxu0 %v452
        %v2963 = vpop.f32.mrb[0].mxu0
        %v2964 = vadd.f32 0.0, %v2963
        %v2965 = vpop.f32.mrb[0].mxu0
        %v2966 = vpop.f32.mrb[0].mxu0
        %v2967 = vadd.f32 0.0, %v2966
        %v2968 = vpop.f32.mrb[0].mxu0
        %2969 = vmatprep.mubr.bf16.mxu0 0
        %2970 = vmatmul.mubr.bf16.gmra.mrb[0].mxu0 %v455
        %v2971 = vpop.f32.mrb[0].mxu0
        %v2972 = vadd.f32 0.0, %v2971
        %v2973 = vpop.f32.mrb[0].mxu0
        %v2974 = vpop.f32.mrb[0].mxu0
        %v2975 = vadd.f32 0.0, %v2974
        %v2976 = vpop.f32.mrb[0].mxu0
        %2977 = vmatprep.mubr.bf16.mxu0 0
        %2978 = vmatmul.mubr.bf16.gmra.mrb[0].mxu0 %v458
        %v2979 = vpop.f32.mrb[0].mxu0
        %v2980 = vadd.f32 0.0, %v2979
        %v2981 = vpop.f32.mrb[0].mxu0
        %v2982 = vpop.f32.mrb[0].mxu0
        %v2983 = vadd.f32 0.0, %v2982
        %v2984 = vpop.f32.mrb[0].mxu0
        %2985 = vmatprep.mubr.bf16.mxu0 0
        %2986 = vmatmul.mubr.bf16.gmra.mrb[0].mxu0 %v461
        %v2987 = vpop.f32.mrb[0].mxu0
        %v2988 = vadd.f32 0.0, %v2987
        %v2989 = vpop.f32.mrb[0].mxu0
        %v2990 = vpop.f32.mrb[0].mxu0
        %v2991 = vadd.f32 0.0, %v2990
        %v2992 = vpop.f32.mrb[0].mxu0
        %2993 = vmatprep.mubr.bf16.mxu0 0
        %2994 = vmatmul.mubr.bf16.gmra.mrb[0].mxu0 %v464
        %v2995 = vpop.f32.mrb[0].mxu0
        %v2996 = vadd.f32 0.0, %v2995
        %v2997 = vpop.f32.mrb[0].mxu0
        %v2998 = vpop.f32.mrb[0].mxu0
        %v2999 = vadd.f32 0.0, %v2998
        %v3000 = vpop.f32.mrb[0].mxu0
        %3001 = vmatprep.mubr.bf16.mxu0 0
        %3002 = vmatmul.mubr.bf16.gmra.mrb[0].mxu0 %v467
        %v3003 = vpop.f32.mrb[0].mxu0
        %v3004 = vadd.f32 0.0, %v3003
        %v3005 = vpop.f32.mrb[0].mxu0
        %v3006 = vpop.f32.mrb[0].mxu0
        %v3007 = vadd.f32 0.0, %v3006
        %v3008 = vpop.f32.mrb[0].mxu0
        %3009 = vmatprep.mubr.bf16.mxu0 0
        %3010 = vmatmul.mubr.bf16.gmra.mrb[0].mxu0 %v470
        %v3011 = vpop.f32.mrb[0].mxu0
        %v3012 = vadd.f32 0.0, %v3011
        %v3013 = vpop.f32.mrb[0].mxu0
        %v3014 = vpop.f32.mrb[0].mxu0
        %v3015 = vadd.f32 0.0, %v3014
        %v3016 = vpop.f32.mrb[0].mxu0
        %3017 = vmatprep.mubr.bf16.mxu0 0
        %3018 = vmatmul.mubr.bf16.gmra.mrb[0].mxu0 %v473
        %v3019 = vpop.f32.mrb[0].mxu0
        %v3020 = vadd.f32 0.0, %v3019
        %v3021 = vpop.f32.mrb[0].mxu0
        %v3022 = vpop.f32.mrb[0].mxu0
        %v3023 = vadd.f32 0.0, %v3022
        %v3024 = vpop.f32.mrb[0].mxu0
        %3025 = vmatprep.mubr.bf16.mxu0 0
        %3026 = vmatmul.mubr.bf16.gmra.mrb[0].mxu0 %v476
        %v3027 = vpop.f32.mrb[0].mxu0
        %v3028 = vadd.f32 0.0, %v3027
        %v3029 = vpop.f32.mrb[0].mxu0
        %v3030 = vpop.f32.mrb[0].mxu0
        %v3031 = vadd.f32 0.0, %v3030
        %v3032 = vpop.f32.mrb[0].mxu0
        %3033 = vmatprep.mubr.bf16.mxu0 0
        %3034 = vmatmul.mubr.bf16.gmra.mrb[0].mxu0 %v479
        %v3035 = vpop.f32.mrb[0].mxu0
        %v3036 = vadd.f32 0.0, %v3035
        %v3037 = vpop.f32.mrb[0].mxu0
        %v3038 = vpop.f32.mrb[0].mxu0
        %v3039 = vadd.f32 0.0, %v3038
        %v3040 = vpop.f32.mrb[0].mxu0
        %3041 = vmatprep.mubr.bf16.mxu0 0
        %3042 = vmatmul.mubr.bf16.gmra.mrb[0].mxu0 %v482
        %v3043 = vpop.f32.mrb[0].mxu0
        %v3044 = vadd.f32 0.0, %v3043
        %v3045 = vpop.f32.mrb[0].mxu0
        %v3046 = vpop.f32.mrb[0].mxu0
        %v3047 = vadd.f32 0.0, %v3046
        %v3048 = vpop.f32.mrb[0].mxu0
        %3049 = vmatprep.mubr.bf16.mxu0 0
        %3050 = vmatmul.mubr.bf16.gmra.mrb[0].mxu0 %v485
        %v3051 = vpop.f32.mrb[0].mxu0
        %v3052 = vadd.f32 0.0, %v3051
        %v3053 = vpop.f32.mrb[0].mxu0
        %v3054 = vpop.f32.mrb[0].mxu0
        %v3055 = vadd.f32 0.0, %v3054
        %v3056 = vpop.f32.mrb[0].mxu0
        %3057 = vmatprep.mubr.bf16.mxu0 0
        %3058 = vmatmul.mubr.bf16.gmra.mrb[0].mxu0 %v488
        %v3059 = vpop.f32.mrb[0].mxu0
        %v3060 = vadd.f32 0.0, %v3059
        %v3061 = vpop.f32.mrb[0].mxu0
        %v3062 = vpop.f32.mrb[0].mxu0
        %v3063 = vadd.f32 0.0, %v3062
        %v3064 = vpop.f32.mrb[0].mxu0
        %3065 = vmatprep.mubr.bf16.mxu0 0
        %3066 = vmatmul.mubr.bf16.gmra.mrb[0].mxu0 %v491
        %v3067 = vpop.f32.mrb[0].mxu0
        %v3068 = vadd.f32 0.0, %v3067
        %v3069 = vpop.f32.mrb[0].mxu0
        %v3070 = vpop.f32.mrb[0].mxu0
        %v3071 = vadd.f32 0.0, %v3070
        %v3072 = vpop.f32.mrb[0].mxu0
        %3073 = vmatprep.mubr.bf16.mxu0 0
        %3074 = vmatmul.mubr.bf16.gmra.mrb[0].mxu0 %v494
        %v3075 = vpop.f32.mrb[0].mxu0
        %v3076 = vadd.f32 0.0, %v3075
        %v3077 = vpop.f32.mrb[0].mxu0
        %v3078 = vpop.f32.mrb[0].mxu0
        %v3079 = vadd.f32 0.0, %v3078
        %v3080 = vpop.f32.mrb[0].mxu0
        %3081 = vdwg.mxu0
        %v3082 = vmul.f32 %v2956, %v2906
        %v3083 = vmul.f32 %v2959, %v2907
        %v3084 = vmul.f32 %v2964, %v2906
        %v3085 = vmul.f32 %v2967, %v2907
        %v3086 = vmul.f32 %v2972, %v2906
        %v3087 = vmul.f32 %v2975, %v2907
        %v3088 = vmul.f32 %v2980, %v2906
        %v3089 = vmul.f32 %v2983, %v2907
        %v3090 = vmul.f32 %v2988, %v2906
        %v3091 = vmul.f32 %v2991, %v2907
        %v3092 = vmul.f32 %v2996, %v2906
        %v3093 = vmul.f32 %v2999, %v2907
        %v3094 = vmul.f32 %v3004, %v2906
        %v3095 = vmul.f32 %v3007, %v2907
        %v3096 = vmul.f32 %v3012, %v2906
        %v3097 = vmul.f32 %v3015, %v2907
        %v3098 = vmul.f32 %v3020, %v2906
        %v3099 = vmul.f32 %v3023, %v2907
        %v3100 = vmul.f32 %v3028, %v2906
        %v3101 = vmul.f32 %v3031, %v2907
        %v3102 = vmul.f32 %v3036, %v2906
        %v3103 = vmul.f32 %v3039, %v2907
        %v3104 = vmul.f32 %v3044, %v2906
        %v3105 = vmul.f32 %v3047, %v2907
        %v3106 = vmul.f32 %v3052, %v2906
        %v3107 = vmul.f32 %v3055, %v2907
        %v3108 = vmul.f32 %v3060, %v2906
        %v3109 = vmul.f32 %v3063, %v2907
        %v3110 = vmul.f32 %v3068, %v2906
        %v3111 = vmul.f32 %v3071, %v2907
        %v3112 = vmul.f32 %v3076, %v2906
        %v3113 = vmul.f32 %v3079, %v2907
        %v3114 = vadd.f32 %v3082, %v3083
        %v3115 = vrot.slane %v3114, 4
        %v3116 = vadd.f32 %v3114, %v3115
        %v3117 = vrot.slane %v3116, 2
        %v3118 = vadd.f32 %v3116, %v3117
        %v3119 = vrot.slane %v3118, 1
        %v3120 = vadd.f32 %v3118, %v3119
        %v3121 = vadd.f32 %v3084, %v3085
        %v3122 = vrot.slane %v3121, 4
        %v3123 = vadd.f32 %v3121, %v3122
        %v3124 = vrot.slane %v3123, 2
        %v3125 = vadd.f32 %v3123, %v3124
        %v3126 = vrot.slane %v3125, 1
        %v3127 = vadd.f32 %v3125, %v3126
        %v3128 = vadd.f32 %v3086, %v3087
        %v3129 = vrot.slane %v3128, 4
        %v3130 = vadd.f32 %v3128, %v3129
        %v3131 = vrot.slane %v3130, 2
        %v3132 = vadd.f32 %v3130, %v3131
        %v3133 = vrot.slane %v3132, 1
        %v3134 = vadd.f32 %v3132, %v3133
        %v3135 = vadd.f32 %v3088, %v3089
        %v3136 = vrot.slane %v3135, 4
        %v3137 = vadd.f32 %v3135, %v3136
        %v3138 = vrot.slane %v3137, 2
        %v3139 = vadd.f32 %v3137, %v3138
        %v3140 = vrot.slane %v3139, 1
        %v3141 = vadd.f32 %v3139, %v3140
        %v3142 = vadd.f32 %v3090, %v3091
        %v3143 = vrot.slane %v3142, 4
        %v3144 = vadd.f32 %v3142, %v3143
        %v3145 = vrot.slane %v3144, 2
        %v3146 = vadd.f32 %v3144, %v3145
        %v3147 = vrot.slane %v3146, 1
        %v3148 = vadd.f32 %v3146, %v3147
        %v3149 = vadd.f32 %v3092, %v3093
        %v3150 = vrot.slane %v3149, 4
        %v3151 = vadd.f32 %v3149, %v3150
        %v3152 = vrot.slane %v3151, 2
        %v3153 = vadd.f32 %v3151, %v3152
        %v3154 = vrot.slane %v3153, 1
        %v3155 = vadd.f32 %v3153, %v3154
        %v3156 = vadd.f32 %v3094, %v3095
        %v3157 = vrot.slane %v3156, 4
        %v3158 = vadd.f32 %v3156, %v3157
        %v3159 = vrot.slane %v3158, 2
        %v3160 = vadd.f32 %v3158, %v3159
        %v3161 = vrot.slane %v3160, 1
        %v3162 = vadd.f32 %v3160, %v3161
        %v3163 = vadd.f32 %v3096, %v3097
        %v3164 = vrot.slane %v3163, 4
        %v3165 = vadd.f32 %v3163, %v3164
        %v3166 = vrot.slane %v3165, 2
        %v3167 = vadd.f32 %v3165, %v3166
        %v3168 = vrot.slane %v3167, 1
        %v3169 = vadd.f32 %v3167, %v3168
        %v3170 = vadd.f32 %v3098, %v3099
        %v3171 = vrot.slane %v3170, 4
        %v3172 = vadd.f32 %v3170, %v3171
        %v3173 = vrot.slane %v3172, 2
        %v3174 = vadd.f32 %v3172, %v3173
        %v3175 = vrot.slane %v3174, 1
        %v3176 = vadd.f32 %v3174, %v3175
        %v3177 = vadd.f32 %v3100, %v3101
        %v3178 = vrot.slane %v3177, 4
        %v3179 = vadd.f32 %v3177, %v3178
        %v3180 = vrot.slane %v3179, 2
        %v3181 = vadd.f32 %v3179, %v3180
        %v3182 = vrot.slane %v3181, 1
        %v3183 = vadd.f32 %v3181, %v3182
        %v3184 = vadd.f32 %v3102, %v3103
        %v3185 = vrot.slane %v3184, 4
        %v3186 = vadd.f32 %v3184, %v3185
        %v3187 = vrot.slane %v3186, 2
        %v3188 = vadd.f32 %v3186, %v3187
        %v3189 = vrot.slane %v3188, 1
        %v3190 = vadd.f32 %v3188, %v3189
        %v3191 = vadd.f32 %v3104, %v3105
        %v3192 = vrot.slane %v3191, 4
        %v3193 = vadd.f32 %v3191, %v3192
        %v3194 = vrot.slane %v3193, 2
        %v3195 = vadd.f32 %v3193, %v3194
        %v3196 = vrot.slane %v3195, 1
        %v3197 = vadd.f32 %v3195, %v3196
        %v3198 = vadd.f32 %v3106, %v3107
        %v3199 = vrot.slane %v3198, 4
        %v3200 = vadd.f32 %v3198, %v3199
        %v3201 = vrot.slane %v3200, 2
        %v3202 = vadd.f32 %v3200, %v3201
        %v3203 = vrot.slane %v3202, 1
        %v3204 = vadd.f32 %v3202, %v3203
        %v3205 = vadd.f32 %v3108, %v3109
        %v3206 = vrot.slane %v3205, 4
        %v3207 = vadd.f32 %v3205, %v3206
        %v3208 = vrot.slane %v3207, 2
        %v3209 = vadd.f32 %v3207, %v3208
        %v3210 = vrot.slane %v3209, 1
        %v3211 = vadd.f32 %v3209, %v3210
        %v3212 = vadd.f32 %v3110, %v3111
        %v3213 = vrot.slane %v3212, 4
        %v3214 = vadd.f32 %v3212, %v3213
        %v3215 = vrot.slane %v3214, 2
        %v3216 = vadd.f32 %v3214, %v3215
        %v3217 = vrot.slane %v3216, 1
        %v3218 = vadd.f32 %v3216, %v3217
        %v3219 = vadd.f32 %v3112, %v3113
        %v3220 = vrot.slane %v3219, 4
        %v3221 = vadd.f32 %v3219, %v3220
        %v3222 = vrot.slane %v3221, 2
        %v3223 = vadd.f32 %v3221, %v3222
        %v3224 = vrot.slane %v3223, 1
        %v3225 = vadd.f32 %v3223, %v3224
        %v3226 = vpack.c.bf16 %v3120, %v3120
        %v3227 = vpack.c.bf16 %v3127, %v3127
        %v3228 = vpack.c.bf16 %v3134, %v3134
        %v3229 = vpack.c.bf16 %v3141, %v3141
        %v3230 = vpack.c.bf16 %v3148, %v3148
        %v3231 = vpack.c.bf16 %v3155, %v3155
        %v3232 = vpack.c.bf16 %v3162, %v3162
        %v3233 = vpack.c.bf16 %v3169, %v3169
        %v3234 = vpack.c.bf16 %v3176, %v3176
        %v3235 = vpack.c.bf16 %v3183, %v3183
        %v3236 = vpack.c.bf16 %v3190, %v3190
        %v3237 = vpack.c.bf16 %v3197, %v3197
        %v3238 = vpack.c.bf16 %v3204, %v3204
        %v3239 = vpack.c.bf16 %v3211, %v3211
        %v3240 = vpack.c.bf16 %v3218, %v3218
        %v3241 = vpack.c.bf16 %v3225, %v3225
        %v3258 = vunpack.c.l.b16 %v3226
        %v3259 = vunpack.c.l.b16 %v3227
        %v3260 = vunpack.c.l.b16 %v3228
        %v3261 = vunpack.c.l.b16 %v3229
        %v3262 = vunpack.c.l.b16 %v3230
        %v3263 = vunpack.c.l.b16 %v3231
        %v3264 = vunpack.c.l.b16 %v3232
        %v3265 = vunpack.c.l.b16 %v3233
        %v3266 = vunpack.c.l.b16 %v3234
        %v3267 = vunpack.c.l.b16 %v3235
        %v3268 = vunpack.c.l.b16 %v3236
        %v3269 = vunpack.c.l.b16 %v3237
        %v3270 = vunpack.c.l.b16 %v3238
        %v3271 = vunpack.c.l.b16 %v3239
        %v3272 = vunpack.c.l.b16 %v3240
        %v3273 = vunpack.c.l.b16 %v3241
        %v3274 = vsel %vm849, %v3259, %v3258
        %v3275 = vsel %vm851, %v3260, %v3274
        %v3276 = vsel %vm853, %v3261, %v3275
        %v3277 = vsel %vm855, %v3262, %v3276
        %v3278 = vsel %vm857, %v3263, %v3277
        %v3279 = vsel %vm859, %v3264, %v3278
        %v3280 = vsel %vm861, %v3265, %v3279
        %v3281 = vsel %vm849, %v3267, %v3266
        %v3282 = vsel %vm851, %v3268, %v3281
        %v3283 = vsel %vm853, %v3269, %v3282
        %v3284 = vsel %vm855, %v3270, %v3283
        %v3285 = vsel %vm857, %v3271, %v3284
        %v3286 = vsel %vm859, %v3272, %v3285
        %v3287 = vsel %vm861, %v3273, %v3286
        %v3288 = vpack.c.b16 %v3287, %v3280
        %3290 = vst [vmem:[#allocation2 + $0x30] sm:$0xff] %v3288
        %v3291 = vld [vmem:[%s249 + $0x7] sm:$0x1]
        %v3292 = vld [vmem:[%s249 + $0x10] sm:$0x1]
        %v3293 = vlaneseq
        %v3294 = vshrl.u32 %v3293, 7
        %v3295 = vsub.s32 0, %v3294
        %v3296 = vrot.slane %v3291, %v3295
        %v3297 = vsub.f32 %v3296, %v288
        %v3298 = vsub.f32 %v3296, %v289
        %v3299 = vand.u32 2147483647, %v3297
        %v3300 = vand.u32 2147483647, %v3298
        %v3301 = vsub.f32 1.0, %v3299
        %v3302 = vsub.f32 1.0, %v3300
        %v3303 = vmax.f32 %v3301, 0.0
        %v3304 = vmax.f32 %v3302, 0.0
        %v3305 = vlaneseq
        %v3306 = vshrl.u32 %v3305, 7
        %v3307 = vsub.s32 7, %v3306
        %v3308 = vrot.slane %v332, %v3307
        %v3309 = vmul.f32 %v3303, %v3308
        %v3310 = vmul.f32 %v3304, %v3308
        %v3311 = vlaneseq
        %v3312 = vshrl.u32 %v3311, 7
        %v3313 = vsub.s32 0, %v3312
        %v3314 = vrot.slane %v3292, %v3313
        %v3315 = vsub.f32 %v3314, %v288
        %v3316 = vsub.f32 %v3314, %v289
        %v3317 = vand.u32 2147483647, %v3315
        %v3318 = vand.u32 2147483647, %v3316
        %v3319 = vsub.f32 1.0, %v3317
        %v3320 = vsub.f32 1.0, %v3318
        %v3321 = vmax.f32 %v3319, 0.0
        %v3322 = vmax.f32 %v3320, 0.0
        %v3323 = vpack.c.bf16 %v3322, %v3321
        %3324 = vmatprep.subr.bf16.mxu0 0
        %3325 = vmatpush1.bf16.msra.mxu0 %v3323
        %3326 = vmatprep.subr.bf16.mxu0 0
        %3327 = vmatpush1.bf16.msra.mxu0 0
        %3328 = vmatprep.subr.bf16.mxu0 0
        %3329 = vmatpush1.bf16.msra.mxu0 0
        %3330 = vmatprep.subr.bf16.mxu0 0
        %3331 = vmatpush1.bf16.msra.mxu0 0
        %3332 = vmatprep.subr.bf16.mxu0 0
        %3333 = vmatpush1.bf16.msra.mxu0 0
        %3334 = vmatprep.subr.bf16.mxu0 0
        %3335 = vmatpush1.bf16.msra.mxu0 0
        %3336 = vmatprep.subr.bf16.mxu0 0
        %3337 = vmatpush1.bf16.msra.mxu0 0
        %3338 = vmatprep.subr.bf16.mxu0 0
        %3339 = vmatpush1.bf16.msra.mxu0 0
        %3340 = vmatprep.subr.bf16.mxu0 0
        %3341 = vmatpush1.bf16.msra.mxu0 0
        %3342 = vmatprep.subr.bf16.mxu0 0
        %3343 = vmatpush1.bf16.msra.mxu0 0
        %3344 = vmatprep.subr.bf16.mxu0 0
        %3345 = vmatpush1.bf16.msra.mxu0 0
        %3346 = vmatprep.subr.bf16.mxu0 0
        %3347 = vmatpush1.bf16.msra.mxu0 0
        %3348 = vmatprep.subr.bf16.mxu0 0
        %3349 = vmatpush1.bf16.msra.mxu0 0
        %3350 = vmatprep.subr.bf16.mxu0 0
        %3351 = vmatpush1.bf16.msra.mxu0 0
        %3352 = vmatprep.subr.bf16.mxu0 0
        %3353 = vmatpush1.bf16.msra.mxu0 0
        %3354 = vmatprep.subr.bf16.mxu0 0
        %3355 = vmatpush1.bf16.msra.mxu0 0
        %3356 = vmatprep.mubr.bf16.mxu0 0
        %3357 = vmatmul.mubr.bf16.gmra.mrb[0].mxu0 %v449
        %v3358 = vpop.f32.mrb[0].mxu0
        %v3359 = vadd.f32 0.0, %v3358
        %v3360 = vpop.f32.mrb[0].mxu0
        %v3361 = vpop.f32.mrb[0].mxu0
        %v3362 = vadd.f32 0.0, %v3361
        %v3363 = vpop.f32.mrb[0].mxu0
        %3364 = vmatprep.mubr.bf16.mxu0 0
        %3365 = vmatmul.mubr.bf16.gmra.mrb[0].mxu0 %v452
        %v3366 = vpop.f32.mrb[0].mxu0
        %v3367 = vadd.f32 0.0, %v3366
        %v3368 = vpop.f32.mrb[0].mxu0
        %v3369 = vpop.f32.mrb[0].mxu0
        %v3370 = vadd.f32 0.0, %v3369
        %v3371 = vpop.f32.mrb[0].mxu0
        %3372 = vmatprep.mubr.bf16.mxu0 0
        %3373 = vmatmul.mubr.bf16.gmra.mrb[0].mxu0 %v455
        %v3374 = vpop.f32.mrb[0].mxu0
        %v3375 = vadd.f32 0.0, %v3374
        %v3376 = vpop.f32.mrb[0].mxu0
        %v3377 = vpop.f32.mrb[0].mxu0
        %v3378 = vadd.f32 0.0, %v3377
        %v3379 = vpop.f32.mrb[0].mxu0
        %3380 = vmatprep.mubr.bf16.mxu0 0
        %3381 = vmatmul.mubr.bf16.gmra.mrb[0].mxu0 %v458
        %v3382 = vpop.f32.mrb[0].mxu0
        %v3383 = vadd.f32 0.0, %v3382
        %v3384 = vpop.f32.mrb[0].mxu0
        %v3385 = vpop.f32.mrb[0].mxu0
        %v3386 = vadd.f32 0.0, %v3385
        %v3387 = vpop.f32.mrb[0].mxu0
        %3388 = vmatprep.mubr.bf16.mxu0 0
        %3389 = vmatmul.mubr.bf16.gmra.mrb[0].mxu0 %v461
        %v3390 = vpop.f32.mrb[0].mxu0
        %v3391 = vadd.f32 0.0, %v3390
        %v3392 = vpop.f32.mrb[0].mxu0
        %v3393 = vpop.f32.mrb[0].mxu0
        %v3394 = vadd.f32 0.0, %v3393
        %v3395 = vpop.f32.mrb[0].mxu0
        %3396 = vmatprep.mubr.bf16.mxu0 0
        %3397 = vmatmul.mubr.bf16.gmra.mrb[0].mxu0 %v464
        %v3398 = vpop.f32.mrb[0].mxu0
        %v3399 = vadd.f32 0.0, %v3398
        %v3400 = vpop.f32.mrb[0].mxu0
        %v3401 = vpop.f32.mrb[0].mxu0
        %v3402 = vadd.f32 0.0, %v3401
        %v3403 = vpop.f32.mrb[0].mxu0
        %3404 = vmatprep.mubr.bf16.mxu0 0
        %3405 = vmatmul.mubr.bf16.gmra.mrb[0].mxu0 %v467
        %v3406 = vpop.f32.mrb[0].mxu0
        %v3407 = vadd.f32 0.0, %v3406
        %v3408 = vpop.f32.mrb[0].mxu0
        %v3409 = vpop.f32.mrb[0].mxu0
        %v3410 = vadd.f32 0.0, %v3409
        %v3411 = vpop.f32.mrb[0].mxu0
        %3412 = vmatprep.mubr.bf16.mxu0 0
        %3413 = vmatmul.mubr.bf16.gmra.mrb[0].mxu0 %v470
        %v3414 = vpop.f32.mrb[0].mxu0
        %v3415 = vadd.f32 0.0, %v3414
        %v3416 = vpop.f32.mrb[0].mxu0
        %v3417 = vpop.f32.mrb[0].mxu0
        %v3418 = vadd.f32 0.0, %v3417
        %v3419 = vpop.f32.mrb[0].mxu0
        %3420 = vmatprep.mubr.bf16.mxu0 0
        %3421 = vmatmul.mubr.bf16.gmra.mrb[0].mxu0 %v473
        %v3422 = vpop.f32.mrb[0].mxu0
        %v3423 = vadd.f32 0.0, %v3422
        %v3424 = vpop.f32.mrb[0].mxu0
        %v3425 = vpop.f32.mrb[0].mxu0
        %v3426 = vadd.f32 0.0, %v3425
        %v3427 = vpop.f32.mrb[0].mxu0
        %3428 = vmatprep.mubr.bf16.mxu0 0
        %3429 = vmatmul.mubr.bf16.gmra.mrb[0].mxu0 %v476
        %v3430 = vpop.f32.mrb[0].mxu0
        %v3431 = vadd.f32 0.0, %v3430
        %v3432 = vpop.f32.mrb[0].mxu0
        %v3433 = vpop.f32.mrb[0].mxu0
        %v3434 = vadd.f32 0.0, %v3433
        %v3435 = vpop.f32.mrb[0].mxu0
        %3436 = vmatprep.mubr.bf16.mxu0 0
        %3437 = vmatmul.mubr.bf16.gmra.mrb[0].mxu0 %v479
        %v3438 = vpop.f32.mrb[0].mxu0
        %v3439 = vadd.f32 0.0, %v3438
        %v3440 = vpop.f32.mrb[0].mxu0
        %v3441 = vpop.f32.mrb[0].mxu0
        %v3442 = vadd.f32 0.0, %v3441
        %v3443 = vpop.f32.mrb[0].mxu0
        %3444 = vmatprep.mubr.bf16.mxu0 0
        %3445 = vmatmul.mubr.bf16.gmra.mrb[0].mxu0 %v482
        %v3446 = vpop.f32.mrb[0].mxu0
        %v3447 = vadd.f32 0.0, %v3446
        %v3448 = vpop.f32.mrb[0].mxu0
        %v3449 = vpop.f32.mrb[0].mxu0
        %v3450 = vadd.f32 0.0, %v3449
        %v3451 = vpop.f32.mrb[0].mxu0
        %3452 = vmatprep.mubr.bf16.mxu0 0
        %3453 = vmatmul.mubr.bf16.gmra.mrb[0].mxu0 %v485
        %v3454 = vpop.f32.mrb[0].mxu0
        %v3455 = vadd.f32 0.0, %v3454
        %v3456 = vpop.f32.mrb[0].mxu0
        %v3457 = vpop.f32.mrb[0].mxu0
        %v3458 = vadd.f32 0.0, %v3457
        %v3459 = vpop.f32.mrb[0].mxu0
        %3460 = vmatprep.mubr.bf16.mxu0 0
        %3461 = vmatmul.mubr.bf16.gmra.mrb[0].mxu0 %v488
        %v3462 = vpop.f32.mrb[0].mxu0
        %v3463 = vadd.f32 0.0, %v3462
        %v3464 = vpop.f32.mrb[0].mxu0
        %v3465 = vpop.f32.mrb[0].mxu0
        %v3466 = vadd.f32 0.0, %v3465
        %v3467 = vpop.f32.mrb[0].mxu0
        %3468 = vmatprep.mubr.bf16.mxu0 0
        %3469 = vmatmul.mubr.bf16.gmra.mrb[0].mxu0 %v491
        %v3470 = vpop.f32.mrb[0].mxu0
        %v3471 = vadd.f32 0.0, %v3470
        %v3472 = vpop.f32.mrb[0].mxu0
        %v3473 = vpop.f32.mrb[0].mxu0
        %v3474 = vadd.f32 0.0, %v3473
        %v3475 = vpop.f32.mrb[0].mxu0
        %3476 = vmatprep.mubr.bf16.mxu0 0
        %3477 = vmatmul.mubr.bf16.gmra.mrb[0].mxu0 %v494
        %v3478 = vpop.f32.mrb[0].mxu0
        %v3479 = vadd.f32 0.0, %v3478
        %v3480 = vpop.f32.mrb[0].mxu0
        %v3481 = vpop.f32.mrb[0].mxu0
        %v3482 = vadd.f32 0.0, %v3481
        %v3483 = vpop.f32.mrb[0].mxu0
        %3484 = vdwg.mxu0
        %v3485 = vmul.f32 %v3359, %v3309
        %v3486 = vmul.f32 %v3362, %v3310
        %v3487 = vmul.f32 %v3367, %v3309
        %v3488 = vmul.f32 %v3370, %v3310
        %v3489 = vmul.f32 %v3375, %v3309
        %v3490 = vmul.f32 %v3378, %v3310
        %v3491 = vmul.f32 %v3383, %v3309
        %v3492 = vmul.f32 %v3386, %v3310
        %v3493 = vmul.f32 %v3391, %v3309
        %v3494 = vmul.f32 %v3394, %v3310
        %v3495 = vmul.f32 %v3399, %v3309
        %v3496 = vmul.f32 %v3402, %v3310
        %v3497 = vmul.f32 %v3407, %v3309
        %v3498 = vmul.f32 %v3410, %v3310
        %v3499 = vmul.f32 %v3415, %v3309
        %v3500 = vmul.f32 %v3418, %v3310
        %v3501 = vmul.f32 %v3423, %v3309
        %v3502 = vmul.f32 %v3426, %v3310
        %v3503 = vmul.f32 %v3431, %v3309
        %v3504 = vmul.f32 %v3434, %v3310
        %v3505 = vmul.f32 %v3439, %v3309
        %v3506 = vmul.f32 %v3442, %v3310
        %v3507 = vmul.f32 %v3447, %v3309
        %v3508 = vmul.f32 %v3450, %v3310
        %v3509 = vmul.f32 %v3455, %v3309
        %v3510 = vmul.f32 %v3458, %v3310
        %v3511 = vmul.f32 %v3463, %v3309
        %v3512 = vmul.f32 %v3466, %v3310
        %v3513 = vmul.f32 %v3471, %v3309
        %v3514 = vmul.f32 %v3474, %v3310
        %v3515 = vmul.f32 %v3479, %v3309
        %v3516 = vmul.f32 %v3482, %v3310
        %v3517 = vadd.f32 %v3485, %v3486
        %v3518 = vrot.slane %v3517, 4
        %v3519 = vadd.f32 %v3517, %v3518
        %v3520 = vrot.slane %v3519, 2
        %v3521 = vadd.f32 %v3519, %v3520
        %v3522 = vrot.slane %v3521, 1
        %v3523 = vadd.f32 %v3521, %v3522
        %v3524 = vadd.f32 %v3487, %v3488
        %v3525 = vrot.slane %v3524, 4
        %v3526 = vadd.f32 %v3524, %v3525
        %v3527 = vrot.slane %v3526, 2
        %v3528 = vadd.f32 %v3526, %v3527
        %v3529 = vrot.slane %v3528, 1
        %v3530 = vadd.f32 %v3528, %v3529
        %v3531 = vadd.f32 %v3489, %v3490
        %v3532 = vrot.slane %v3531, 4
        %v3533 = vadd.f32 %v3531, %v3532
        %v3534 = vrot.slane %v3533, 2
        %v3535 = vadd.f32 %v3533, %v3534
        %v3536 = vrot.slane %v3535, 1
        %v3537 = vadd.f32 %v3535, %v3536
        %v3538 = vadd.f32 %v3491, %v3492
        %v3539 = vrot.slane %v3538, 4
        %v3540 = vadd.f32 %v3538, %v3539
        %v3541 = vrot.slane %v3540, 2
        %v3542 = vadd.f32 %v3540, %v3541
        %v3543 = vrot.slane %v3542, 1
        %v3544 = vadd.f32 %v3542, %v3543
        %v3545 = vadd.f32 %v3493, %v3494
        %v3546 = vrot.slane %v3545, 4
        %v3547 = vadd.f32 %v3545, %v3546
        %v3548 = vrot.slane %v3547, 2
        %v3549 = vadd.f32 %v3547, %v3548
        %v3550 = vrot.slane %v3549, 1
        %v3551 = vadd.f32 %v3549, %v3550
        %v3552 = vadd.f32 %v3495, %v3496
        %v3553 = vrot.slane %v3552, 4
        %v3554 = vadd.f32 %v3552, %v3553
        %v3555 = vrot.slane %v3554, 2
        %v3556 = vadd.f32 %v3554, %v3555
        %v3557 = vrot.slane %v3556, 1
        %v3558 = vadd.f32 %v3556, %v3557
        %v3559 = vadd.f32 %v3497, %v3498
        %v3560 = vrot.slane %v3559, 4
        %v3561 = vadd.f32 %v3559, %v3560
        %v3562 = vrot.slane %v3561, 2
        %v3563 = vadd.f32 %v3561, %v3562
        %v3564 = vrot.slane %v3563, 1
        %v3565 = vadd.f32 %v3563, %v3564
        %v3566 = vadd.f32 %v3499, %v3500
        %v3567 = vrot.slane %v3566, 4
        %v3568 = vadd.f32 %v3566, %v3567
        %v3569 = vrot.slane %v3568, 2
        %v3570 = vadd.f32 %v3568, %v3569
        %v3571 = vrot.slane %v3570, 1
        %v3572 = vadd.f32 %v3570, %v3571
        %v3573 = vadd.f32 %v3501, %v3502
        %v3574 = vrot.slane %v3573, 4
        %v3575 = vadd.f32 %v3573, %v3574
        %v3576 = vrot.slane %v3575, 2
        %v3577 = vadd.f32 %v3575, %v3576
        %v3578 = vrot.slane %v3577, 1
        %v3579 = vadd.f32 %v3577, %v3578
        %v3580 = vadd.f32 %v3503, %v3504
        %v3581 = vrot.slane %v3580, 4
        %v3582 = vadd.f32 %v3580, %v3581
        %v3583 = vrot.slane %v3582, 2
        %v3584 = vadd.f32 %v3582, %v3583
        %v3585 = vrot.slane %v3584, 1
        %v3586 = vadd.f32 %v3584, %v3585
        %v3587 = vadd.f32 %v3505, %v3506
        %v3588 = vrot.slane %v3587, 4
        %v3589 = vadd.f32 %v3587, %v3588
        %v3590 = vrot.slane %v3589, 2
        %v3591 = vadd.f32 %v3589, %v3590
        %v3592 = vrot.slane %v3591, 1
        %v3593 = vadd.f32 %v3591, %v3592
        %v3594 = vadd.f32 %v3507, %v3508
        %v3595 = vrot.slane %v3594, 4
        %v3596 = vadd.f32 %v3594, %v3595
        %v3597 = vrot.slane %v3596, 2
        %v3598 = vadd.f32 %v3596, %v3597
        %v3599 = vrot.slane %v3598, 1
        %v3600 = vadd.f32 %v3598, %v3599
        %v3601 = vadd.f32 %v3509, %v3510
        %v3602 = vrot.slane %v3601, 4
        %v3603 = vadd.f32 %v3601, %v3602
        %v3604 = vrot.slane %v3603, 2
        %v3605 = vadd.f32 %v3603, %v3604
        %v3606 = vrot.slane %v3605, 1
        %v3607 = vadd.f32 %v3605, %v3606
        %v3608 = vadd.f32 %v3511, %v3512
        %v3609 = vrot.slane %v3608, 4
        %v3610 = vadd.f32 %v3608, %v3609
        %v3611 = vrot.slane %v3610, 2
        %v3612 = vadd.f32 %v3610, %v3611
        %v3613 = vrot.slane %v3612, 1
        %v3614 = vadd.f32 %v3612, %v3613
        %v3615 = vadd.f32 %v3513, %v3514
        %v3616 = vrot.slane %v3615, 4
        %v3617 = vadd.f32 %v3615, %v3616
        %v3618 = vrot.slane %v3617, 2
        %v3619 = vadd.f32 %v3617, %v3618
        %v3620 = vrot.slane %v3619, 1
        %v3621 = vadd.f32 %v3619, %v3620
        %v3622 = vadd.f32 %v3515, %v3516
        %v3623 = vrot.slane %v3622, 4
        %v3624 = vadd.f32 %v3622, %v3623
        %v3625 = vrot.slane %v3624, 2
        %v3626 = vadd.f32 %v3624, %v3625
        %v3627 = vrot.slane %v3626, 1
        %v3628 = vadd.f32 %v3626, %v3627
        %v3629 = vpack.c.bf16 %v3523, %v3523
        %v3630 = vpack.c.bf16 %v3530, %v3530
        %v3631 = vpack.c.bf16 %v3537, %v3537
        %v3632 = vpack.c.bf16 %v3544, %v3544
        %v3633 = vpack.c.bf16 %v3551, %v3551
        %v3634 = vpack.c.bf16 %v3558, %v3558
        %v3635 = vpack.c.bf16 %v3565, %v3565
        %v3636 = vpack.c.bf16 %v3572, %v3572
        %v3637 = vpack.c.bf16 %v3579, %v3579
        %v3638 = vpack.c.bf16 %v3586, %v3586
        %v3639 = vpack.c.bf16 %v3593, %v3593
        %v3640 = vpack.c.bf16 %v3600, %v3600
        %v3641 = vpack.c.bf16 %v3607, %v3607
        %v3642 = vpack.c.bf16 %v3614, %v3614
        %v3643 = vpack.c.bf16 %v3621, %v3621
        %v3644 = vpack.c.bf16 %v3628, %v3628
        %v3661 = vunpack.c.l.b16 %v3629
        %v3662 = vunpack.c.l.b16 %v3630
        %v3663 = vunpack.c.l.b16 %v3631
        %v3664 = vunpack.c.l.b16 %v3632
        %v3665 = vunpack.c.l.b16 %v3633
        %v3666 = vunpack.c.l.b16 %v3634
        %v3667 = vunpack.c.l.b16 %v3635
        %v3668 = vunpack.c.l.b16 %v3636
        %v3669 = vunpack.c.l.b16 %v3637
        %v3670 = vunpack.c.l.b16 %v3638
        %v3671 = vunpack.c.l.b16 %v3639
        %v3672 = vunpack.c.l.b16 %v3640
        %v3673 = vunpack.c.l.b16 %v3641
        %v3674 = vunpack.c.l.b16 %v3642
        %v3675 = vunpack.c.l.b16 %v3643
        %v3676 = vunpack.c.l.b16 %v3644
        %v3677 = vsel %vm849, %v3662, %v3661
        %v3678 = vsel %vm851, %v3663, %v3677
        %v3679 = vsel %vm853, %v3664, %v3678
        %v3680 = vsel %vm855, %v3665, %v3679
        %v3681 = vsel %vm857, %v3666, %v3680
        %v3682 = vsel %vm859, %v3667, %v3681
        %v3683 = vsel %vm861, %v3668, %v3682
        %v3684 = vsel %vm849, %v3670, %v3669
        %v3685 = vsel %vm851, %v3671, %v3684
        %v3686 = vsel %vm853, %v3672, %v3685
        %v3687 = vsel %vm855, %v3673, %v3686
        %v3688 = vsel %vm857, %v3674, %v3687
        %v3689 = vsel %vm859, %v3675, %v3688
        %v3690 = vsel %vm861, %v3676, %v3689
        %v3691 = vpack.c.b16 %v3690, %v3683
        %3693 = vst [vmem:[#allocation2 + $0x38] sm:$0xff] %v3691
        %v3694 = vld [vmem:[%s249 + $0x8] sm:$0x1]
        %v3695 = vld [vmem:[%s249 + $0x11] sm:$0x1]
        %v3696 = vlaneseq
        %v3697 = vshrl.u32 %v3696, 7
        %v3698 = vsub.s32 0, %v3697
        %v3699 = vrot.slane %v3694, %v3698
        %v3700 = vsub.f32 %v3699, %v288
        %v3701 = vsub.f32 %v3699, %v289
        %v3702 = vand.u32 2147483647, %v3700
        %v3703 = vand.u32 2147483647, %v3701
        %v3704 = vsub.f32 1.0, %v3702
        %v3705 = vsub.f32 1.0, %v3703
        %v3706 = vmax.f32 %v3704, 0.0
        %v3707 = vmax.f32 %v3705, 0.0
        %v3708 = vlaneseq
        %v3709 = vshrl.u32 %v3708, 7
        %v3710 = vsub.s32 0, %v3709
        %v3711 = vrot.slane %v333, %v3710
        %v3712 = vmul.f32 %v3706, %v3711
        %v3713 = vmul.f32 %v3707, %v3711
        %v3714 = vlaneseq
        %v3715 = vshrl.u32 %v3714, 7
        %v3716 = vsub.s32 0, %v3715
        %v3717 = vrot.slane %v3695, %v3716
        %v3718 = vsub.f32 %v3717, %v288
        %v3719 = vsub.f32 %v3717, %v289
        %v3720 = vand.u32 2147483647, %v3718
        %v3721 = vand.u32 2147483647, %v3719
        %v3722 = vsub.f32 1.0, %v3720
        %v3723 = vsub.f32 1.0, %v3721
        %v3724 = vmax.f32 %v3722, 0.0
        %v3725 = vmax.f32 %v3723, 0.0
        %v3726 = vpack.c.bf16 %v3725, %v3724
        %3727 = vmatprep.subr.bf16.mxu0 0
        %3728 = vmatpush1.bf16.msra.mxu0 %v3726
        %3729 = vmatprep.subr.bf16.mxu0 0
        %3730 = vmatpush1.bf16.msra.mxu0 0
        %3731 = vmatprep.subr.bf16.mxu0 0
        %3732 = vmatpush1.bf16.msra.mxu0 0
        %3733 = vmatprep.subr.bf16.mxu0 0
        %3734 = vmatpush1.bf16.msra.mxu0 0
        %3735 = vmatprep.subr.bf16.mxu0 0
        %3736 = vmatpush1.bf16.msra.mxu0 0
        %3737 = vmatprep.subr.bf16.mxu0 0
        %3738 = vmatpush1.bf16.msra.mxu0 0
        %3739 = vmatprep.subr.bf16.mxu0 0
        %3740 = vmatpush1.bf16.msra.mxu0 0
        %3741 = vmatprep.subr.bf16.mxu0 0
        %3742 = vmatpush1.bf16.msra.mxu0 0
        %3743 = vmatprep.subr.bf16.mxu0 0
        %3744 = vmatpush1.bf16.msra.mxu0 0
        %3745 = vmatprep.subr.bf16.mxu0 0
        %3746 = vmatpush1.bf16.msra.mxu0 0
        %3747 = vmatprep.subr.bf16.mxu0 0
        %3748 = vmatpush1.bf16.msra.mxu0 0
        %3749 = vmatprep.subr.bf16.mxu0 0
        %3750 = vmatpush1.bf16.msra.mxu0 0
        %3751 = vmatprep.subr.bf16.mxu0 0
        %3752 = vmatpush1.bf16.msra.mxu0 0
        %3753 = vmatprep.subr.bf16.mxu0 0
        %3754 = vmatpush1.bf16.msra.mxu0 0
        %3755 = vmatprep.subr.bf16.mxu0 0
        %3756 = vmatpush1.bf16.msra.mxu0 0
        %3757 = vmatprep.subr.bf16.mxu0 0
        %3758 = vmatpush1.bf16.msra.mxu0 0
        %3759 = vmatprep.mubr.bf16.mxu0 0
        %3760 = vmatmul.mubr.bf16.gmra.mrb[0].mxu0 %v449
        %v3761 = vpop.f32.mrb[0].mxu0
        %v3762 = vadd.f32 0.0, %v3761
        %v3763 = vpop.f32.mrb[0].mxu0
        %v3764 = vpop.f32.mrb[0].mxu0
        %v3765 = vadd.f32 0.0, %v3764
        %v3766 = vpop.f32.mrb[0].mxu0
        %3767 = vmatprep.mubr.bf16.mxu0 0
        %3768 = vmatmul.mubr.bf16.gmra.mrb[0].mxu0 %v452
        %v3769 = vpop.f32.mrb[0].mxu0
        %v3770 = vadd.f32 0.0, %v3769
        %v3771 = vpop.f32.mrb[0].mxu0
        %v3772 = vpop.f32.mrb[0].mxu0
        %v3773 = vadd.f32 0.0, %v3772
        %v3774 = vpop.f32.mrb[0].mxu0
        %3775 = vmatprep.mubr.bf16.mxu0 0
        %3776 = vmatmul.mubr.bf16.gmra.mrb[0].mxu0 %v455
        %v3777 = vpop.f32.mrb[0].mxu0
        %v3778 = vadd.f32 0.0, %v3777
        %v3779 = vpop.f32.mrb[0].mxu0
        %v3780 = vpop.f32.mrb[0].mxu0
        %v3781 = vadd.f32 0.0, %v3780
        %v3782 = vpop.f32.mrb[0].mxu0
        %3783 = vmatprep.mubr.bf16.mxu0 0
        %3784 = vmatmul.mubr.bf16.gmra.mrb[0].mxu0 %v458
        %v3785 = vpop.f32.mrb[0].mxu0
        %v3786 = vadd.f32 0.0, %v3785
        %v3787 = vpop.f32.mrb[0].mxu0
        %v3788 = vpop.f32.mrb[0].mxu0
        %v3789 = vadd.f32 0.0, %v3788
        %v3790 = vpop.f32.mrb[0].mxu0
        %3791 = vmatprep.mubr.bf16.mxu0 0
        %3792 = vmatmul.mubr.bf16.gmra.mrb[0].mxu0 %v461
        %v3793 = vpop.f32.mrb[0].mxu0
        %v3794 = vadd.f32 0.0, %v3793
        %v3795 = vpop.f32.mrb[0].mxu0
        %v3796 = vpop.f32.mrb[0].mxu0
        %v3797 = vadd.f32 0.0, %v3796
        %v3798 = vpop.f32.mrb[0].mxu0
        %3799 = vmatprep.mubr.bf16.mxu0 0
        %3800 = vmatmul.mubr.bf16.gmra.mrb[0].mxu0 %v464
        %v3801 = vpop.f32.mrb[0].mxu0
        %v3802 = vadd.f32 0.0, %v3801
        %v3803 = vpop.f32.mrb[0].mxu0
        %v3804 = vpop.f32.mrb[0].mxu0
        %v3805 = vadd.f32 0.0, %v3804
        %v3806 = vpop.f32.mrb[0].mxu0
        %3807 = vmatprep.mubr.bf16.mxu0 0
        %3808 = vmatmul.mubr.bf16.gmra.mrb[0].mxu0 %v467
        %v3809 = vpop.f32.mrb[0].mxu0
        %v3810 = vadd.f32 0.0, %v3809
        %v3811 = vpop.f32.mrb[0].mxu0
        %v3812 = vpop.f32.mrb[0].mxu0
        %v3813 = vadd.f32 0.0, %v3812
        %v3814 = vpop.f32.mrb[0].mxu0
        %3815 = vmatprep.mubr.bf16.mxu0 0
        %3816 = vmatmul.mubr.bf16.gmra.mrb[0].mxu0 %v470
        %v3817 = vpop.f32.mrb[0].mxu0
        %v3818 = vadd.f32 0.0, %v3817
        %v3819 = vpop.f32.mrb[0].mxu0
        %v3820 = vpop.f32.mrb[0].mxu0
        %v3821 = vadd.f32 0.0, %v3820
        %v3822 = vpop.f32.mrb[0].mxu0
        %3823 = vmatprep.mubr.bf16.mxu0 0
        %3824 = vmatmul.mubr.bf16.gmra.mrb[0].mxu0 %v473
        %v3825 = vpop.f32.mrb[0].mxu0
        %v3826 = vadd.f32 0.0, %v3825
        %v3827 = vpop.f32.mrb[0].mxu0
        %v3828 = vpop.f32.mrb[0].mxu0
        %v3829 = vadd.f32 0.0, %v3828
        %v3830 = vpop.f32.mrb[0].mxu0
        %3831 = vmatprep.mubr.bf16.mxu0 0
        %3832 = vmatmul.mubr.bf16.gmra.mrb[0].mxu0 %v476
        %v3833 = vpop.f32.mrb[0].mxu0
        %v3834 = vadd.f32 0.0, %v3833
        %v3835 = vpop.f32.mrb[0].mxu0
        %v3836 = vpop.f32.mrb[0].mxu0
        %v3837 = vadd.f32 0.0, %v3836
        %v3838 = vpop.f32.mrb[0].mxu0
        %3839 = vmatprep.mubr.bf16.mxu0 0
        %3840 = vmatmul.mubr.bf16.gmra.mrb[0].mxu0 %v479
        %v3841 = vpop.f32.mrb[0].mxu0
        %v3842 = vadd.f32 0.0, %v3841
        %v3843 = vpop.f32.mrb[0].mxu0
        %v3844 = vpop.f32.mrb[0].mxu0
        %v3845 = vadd.f32 0.0, %v3844
        %v3846 = vpop.f32.mrb[0].mxu0
        %3847 = vmatprep.mubr.bf16.mxu0 0
        %3848 = vmatmul.mubr.bf16.gmra.mrb[0].mxu0 %v482
        %v3849 = vpop.f32.mrb[0].mxu0
        %v3850 = vadd.f32 0.0, %v3849
        %v3851 = vpop.f32.mrb[0].mxu0
        %v3852 = vpop.f32.mrb[0].mxu0
        %v3853 = vadd.f32 0.0, %v3852
        %v3854 = vpop.f32.mrb[0].mxu0
        %3855 = vmatprep.mubr.bf16.mxu0 0
        %3856 = vmatmul.mubr.bf16.gmra.mrb[0].mxu0 %v485
        %v3857 = vpop.f32.mrb[0].mxu0
        %v3858 = vadd.f32 0.0, %v3857
        %v3859 = vpop.f32.mrb[0].mxu0
        %v3860 = vpop.f32.mrb[0].mxu0
        %v3861 = vadd.f32 0.0, %v3860
        %v3862 = vpop.f32.mrb[0].mxu0
        %3863 = vmatprep.mubr.bf16.mxu0 0
        %3864 = vmatmul.mubr.bf16.gmra.mrb[0].mxu0 %v488
        %v3865 = vpop.f32.mrb[0].mxu0
        %v3866 = vadd.f32 0.0, %v3865
        %v3867 = vpop.f32.mrb[0].mxu0
        %v3868 = vpop.f32.mrb[0].mxu0
        %v3869 = vadd.f32 0.0, %v3868
        %v3870 = vpop.f32.mrb[0].mxu0
        %3871 = vmatprep.mubr.bf16.mxu0 0
        %3872 = vmatmul.mubr.bf16.gmra.mrb[0].mxu0 %v491
        %v3873 = vpop.f32.mrb[0].mxu0
        %v3874 = vadd.f32 0.0, %v3873
        %v3875 = vpop.f32.mrb[0].mxu0
        %v3876 = vpop.f32.mrb[0].mxu0
        %v3877 = vadd.f32 0.0, %v3876
        %v3878 = vpop.f32.mrb[0].mxu0
        %3879 = vmatprep.mubr.bf16.mxu0 0
        %3880 = vmatmul.mubr.bf16.gmra.mrb[0].mxu0 %v494
        %v3881 = vpop.f32.mrb[0].mxu0
        %v3882 = vadd.f32 0.0, %v3881
        %v3883 = vpop.f32.mrb[0].mxu0
        %v3884 = vpop.f32.mrb[0].mxu0
        %v3885 = vadd.f32 0.0, %v3884
        %v3886 = vpop.f32.mrb[0].mxu0
        %3887 = vdwg.mxu0
        %v3888 = vmul.f32 %v3762, %v3712
        %v3889 = vmul.f32 %v3765, %v3713
        %v3890 = vmul.f32 %v3770, %v3712
        %v3891 = vmul.f32 %v3773, %v3713
        %v3892 = vmul.f32 %v3778, %v3712
        %v3893 = vmul.f32 %v3781, %v3713
        %v3894 = vmul.f32 %v3786, %v3712
        %v3895 = vmul.f32 %v3789, %v3713
        %v3896 = vmul.f32 %v3794, %v3712
        %v3897 = vmul.f32 %v3797, %v3713
        %v3898 = vmul.f32 %v3802, %v3712
        %v3899 = vmul.f32 %v3805, %v3713
        %v3900 = vmul.f32 %v3810, %v3712
        %v3901 = vmul.f32 %v3813, %v3713
        %v3902 = vmul.f32 %v3818, %v3712
        %v3903 = vmul.f32 %v3821, %v3713
        %v3904 = vmul.f32 %v3826, %v3712
        %v3905 = vmul.f32 %v3829, %v3713
        %v3906 = vmul.f32 %v3834, %v3712
        %v3907 = vmul.f32 %v3837, %v3713
        %v3908 = vmul.f32 %v3842, %v3712
        %v3909 = vmul.f32 %v3845, %v3713
        %v3910 = vmul.f32 %v3850, %v3712
        %v3911 = vmul.f32 %v3853, %v3713
        %v3912 = vmul.f32 %v3858, %v3712
        %v3913 = vmul.f32 %v3861, %v3713
        %v3914 = vmul.f32 %v3866, %v3712
        %v3915 = vmul.f32 %v3869, %v3713
        %v3916 = vmul.f32 %v3874, %v3712
        %v3917 = vmul.f32 %v3877, %v3713
        %v3918 = vmul.f32 %v3882, %v3712
        %v3919 = vmul.f32 %v3885, %v3713
        %v3920 = vadd.f32 %v3888, %v3889
        %v3921 = vrot.slane %v3920, 4
        %v3922 = vadd.f32 %v3920, %v3921
        %v3923 = vrot.slane %v3922, 2
        %v3924 = vadd.f32 %v3922, %v3923
        %v3925 = vrot.slane %v3924, 1
        %v3926 = vadd.f32 %v3924, %v3925
        %v3927 = vadd.f32 %v3890, %v3891
        %v3928 = vrot.slane %v3927, 4
        %v3929 = vadd.f32 %v3927, %v3928
        %v3930 = vrot.slane %v3929, 2
        %v3931 = vadd.f32 %v3929, %v3930
        %v3932 = vrot.slane %v3931, 1
        %v3933 = vadd.f32 %v3931, %v3932
        %v3934 = vadd.f32 %v3892, %v3893
        %v3935 = vrot.slane %v3934, 4
        %v3936 = vadd.f32 %v3934, %v3935
        %v3937 = vrot.slane %v3936, 2
        %v3938 = vadd.f32 %v3936, %v3937
        %v3939 = vrot.slane %v3938, 1
        %v3940 = vadd.f32 %v3938, %v3939
        %v3941 = vadd.f32 %v3894, %v3895
        %v3942 = vrot.slane %v3941, 4
        %v3943 = vadd.f32 %v3941, %v3942
        %v3944 = vrot.slane %v3943, 2
        %v3945 = vadd.f32 %v3943, %v3944
        %v3946 = vrot.slane %v3945, 1
        %v3947 = vadd.f32 %v3945, %v3946
        %v3948 = vadd.f32 %v3896, %v3897
        %v3949 = vrot.slane %v3948, 4
        %v3950 = vadd.f32 %v3948, %v3949
        %v3951 = vrot.slane %v3950, 2
        %v3952 = vadd.f32 %v3950, %v3951
        %v3953 = vrot.slane %v3952, 1
        %v3954 = vadd.f32 %v3952, %v3953
        %v3955 = vadd.f32 %v3898, %v3899
        %v3956 = vrot.slane %v3955, 4
        %v3957 = vadd.f32 %v3955, %v3956
        %v3958 = vrot.slane %v3957, 2
        %v3959 = vadd.f32 %v3957, %v3958
        %v3960 = vrot.slane %v3959, 1
        %v3961 = vadd.f32 %v3959, %v3960
        %v3962 = vadd.f32 %v3900, %v3901
        %v3963 = vrot.slane %v3962, 4
        %v3964 = vadd.f32 %v3962, %v3963
        %v3965 = vrot.slane %v3964, 2
        %v3966 = vadd.f32 %v3964, %v3965
        %v3967 = vrot.slane %v3966, 1
        %v3968 = vadd.f32 %v3966, %v3967
        %v3969 = vadd.f32 %v3902, %v3903
        %v3970 = vrot.slane %v3969, 4
        %v3971 = vadd.f32 %v3969, %v3970
        %v3972 = vrot.slane %v3971, 2
        %v3973 = vadd.f32 %v3971, %v3972
        %v3974 = vrot.slane %v3973, 1
        %v3975 = vadd.f32 %v3973, %v3974
        %v3976 = vadd.f32 %v3904, %v3905
        %v3977 = vrot.slane %v3976, 4
        %v3978 = vadd.f32 %v3976, %v3977
        %v3979 = vrot.slane %v3978, 2
        %v3980 = vadd.f32 %v3978, %v3979
        %v3981 = vrot.slane %v3980, 1
        %v3982 = vadd.f32 %v3980, %v3981
        %v3983 = vadd.f32 %v3906, %v3907
        %v3984 = vrot.slane %v3983, 4
        %v3985 = vadd.f32 %v3983, %v3984
        %v3986 = vrot.slane %v3985, 2
        %v3987 = vadd.f32 %v3985, %v3986
        %v3988 = vrot.slane %v3987, 1
        %v3989 = vadd.f32 %v3987, %v3988
        %v3990 = vadd.f32 %v3908, %v3909
        %v3991 = vrot.slane %v3990, 4
        %v3992 = vadd.f32 %v3990, %v3991
        %v3993 = vrot.slane %v3992, 2
        %v3994 = vadd.f32 %v3992, %v3993
        %v3995 = vrot.slane %v3994, 1
        %v3996 = vadd.f32 %v3994, %v3995
        %v3997 = vadd.f32 %v3910, %v3911
        %v3998 = vrot.slane %v3997, 4
        %v3999 = vadd.f32 %v3997, %v3998
        %v4000 = vrot.slane %v3999, 2
        %v4001 = vadd.f32 %v3999, %v4000
        %v4002 = vrot.slane %v4001, 1
        %v4003 = vadd.f32 %v4001, %v4002
        %v4004 = vadd.f32 %v3912, %v3913
        %v4005 = vrot.slane %v4004, 4
        %v4006 = vadd.f32 %v4004, %v4005
        %v4007 = vrot.slane %v4006, 2
        %v4008 = vadd.f32 %v4006, %v4007
        %v4009 = vrot.slane %v4008, 1
        %v4010 = vadd.f32 %v4008, %v4009
        %v4011 = vadd.f32 %v3914, %v3915
        %v4012 = vrot.slane %v4011, 4
        %v4013 = vadd.f32 %v4011, %v4012
        %v4014 = vrot.slane %v4013, 2
        %v4015 = vadd.f32 %v4013, %v4014
        %v4016 = vrot.slane %v4015, 1
        %v4017 = vadd.f32 %v4015, %v4016
        %v4018 = vadd.f32 %v3916, %v3917
        %v4019 = vrot.slane %v4018, 4
        %v4020 = vadd.f32 %v4018, %v4019
        %v4021 = vrot.slane %v4020, 2
        %v4022 = vadd.f32 %v4020, %v4021
        %v4023 = vrot.slane %v4022, 1
        %v4024 = vadd.f32 %v4022, %v4023
        %v4025 = vadd.f32 %v3918, %v3919
        %v4026 = vrot.slane %v4025, 4
        %v4027 = vadd.f32 %v4025, %v4026
        %v4028 = vrot.slane %v4027, 2
        %v4029 = vadd.f32 %v4027, %v4028
        %v4030 = vrot.slane %v4029, 1
        %v4031 = vadd.f32 %v4029, %v4030
        %v4032 = vpack.c.bf16 %v3926, %v3926
        %v4033 = vpack.c.bf16 %v3933, %v3933
        %v4034 = vpack.c.bf16 %v3940, %v3940
        %v4035 = vpack.c.bf16 %v3947, %v3947
        %v4036 = vpack.c.bf16 %v3954, %v3954
        %v4037 = vpack.c.bf16 %v3961, %v3961
        %v4038 = vpack.c.bf16 %v3968, %v3968
        %v4039 = vpack.c.bf16 %v3975, %v3975
        %v4040 = vpack.c.bf16 %v3982, %v3982
        %v4041 = vpack.c.bf16 %v3989, %v3989
        %v4042 = vpack.c.bf16 %v3996, %v3996
        %v4043 = vpack.c.bf16 %v4003, %v4003
        %v4044 = vpack.c.bf16 %v4010, %v4010
        %v4045 = vpack.c.bf16 %v4017, %v4017
        %v4046 = vpack.c.bf16 %v4024, %v4024
        %v4047 = vpack.c.bf16 %v4031, %v4031
        %v4064 = vunpack.c.l.b16 %v4032
        %v4065 = vunpack.c.l.b16 %v4033
        %v4066 = vunpack.c.l.b16 %v4034
        %v4067 = vunpack.c.l.b16 %v4035
        %v4068 = vunpack.c.l.b16 %v4036
        %v4069 = vunpack.c.l.b16 %v4037
        %v4070 = vunpack.c.l.b16 %v4038
        %v4071 = vunpack.c.l.b16 %v4039
        %v4072 = vunpack.c.l.b16 %v4040
        %v4073 = vunpack.c.l.b16 %v4041
        %v4074 = vunpack.c.l.b16 %v4042
        %v4075 = vunpack.c.l.b16 %v4043
        %v4076 = vunpack.c.l.b16 %v4044
        %v4077 = vunpack.c.l.b16 %v4045
        %v4078 = vunpack.c.l.b16 %v4046
        %v4079 = vunpack.c.l.b16 %v4047
        %v4080 = vsel %vm849, %v4065, %v4064
        %v4081 = vsel %vm851, %v4066, %v4080
        %v4082 = vsel %vm853, %v4067, %v4081
        %v4083 = vsel %vm855, %v4068, %v4082
        %v4084 = vsel %vm857, %v4069, %v4083
        %v4085 = vsel %vm859, %v4070, %v4084
        %v4086 = vsel %vm861, %v4071, %v4085
        %v4087 = vsel %vm849, %v4073, %v4072
        %v4088 = vsel %vm851, %v4074, %v4087
        %v4089 = vsel %vm853, %v4075, %v4088
        %v4090 = vsel %vm855, %v4076, %v4089
        %v4091 = vsel %vm857, %v4077, %v4090
        %v4092 = vsel %vm859, %v4078, %v4091
        %v4093 = vsel %vm861, %v4079, %v4092
        %v4094 = vpack.c.b16 %v4093, %v4086
        %4096 = vst [vmem:[#allocation2 + $0x40] sm:$0xff] %v4094
        %v4097 = vld [vmem:[%s2] sm:$0xff]
        %v4098 = vld [vmem:[#allocation2] sm:$0xff]
        %v4099 = vld [vmem:[#allocation2 + $0x8] sm:$0xff]
        %v4100 = vld [vmem:[#allocation2 + $0x10] sm:$0xff]
        %v4101 = vld [vmem:[#allocation2 + $0x18] sm:$0xff]
        %v4102 = vld [vmem:[#allocation2 + $0x20] sm:$0xff]
        %v4103 = vld [vmem:[#allocation2 + $0x28] sm:$0xff]
        %v4104 = vld [vmem:[#allocation2 + $0x30] sm:$0xff]
        %v4105 = vld [vmem:[#allocation2 + $0x38] sm:$0xff]
        %v4106 = vld [vmem:[#allocation2 + $0x40] sm:$0xff]
        %v4107 = vld [vmem:[%s3] sm:$0xff]
        %4109 = vset.pattern.permute.xlu0 0
        %4110 = vperm.xlu0 %4109, %v4107
        %v4111 = vpop.permute.xlu0 %4110
        %v4114 = vunpack.c.l.b16 %v4097
        %v4115 = vunpack.c.h.b16 %v4097
        %v4116 = vpack.c.b16 %v4114, %v4114
        %v4117 = vpack.c.b16 %v4115, %v4115
        %v4120 = vsel %vm447, %v4117, 0
        %4122 = vmatprep.subr.bf16.mxu0 0
        %4123 = vmatpush1.bf16.msra.mxu0 %v4098
        %4124 = vmatprep.subr.bf16.mxu0 0
        %4125 = vmatpush1.bf16.msra.mxu0 %v4099
        %4126 = vmatprep.subr.bf16.mxu0 0
        %4127 = vmatpush1.bf16.msra.mxu0 %v4100
        %4128 = vmatprep.subr.bf16.mxu0 0
        %4129 = vmatpush1.bf16.msra.mxu0 %v4101
        %4130 = vmatprep.subr.bf16.mxu0 0
        %4131 = vmatpush1.bf16.msra.mxu0 %v4102
        %4132 = vmatprep.subr.bf16.mxu0 0
        %4133 = vmatpush1.bf16.msra.mxu0 %v4103
        %4134 = vmatprep.subr.bf16.mxu0 0
        %4135 = vmatpush1.bf16.msra.mxu0 %v4104
        %4136 = vmatprep.subr.bf16.mxu0 0
        %4137 = vmatpush1.bf16.msra.mxu0 %v4105
        %4138 = vmatprep.subr.bf16.mxu0 0
        %4139 = vmatpush1.bf16.msra.mxu0 %v4106
        %4140 = vmatprep.subr.bf16.mxu0 0
        %4141 = vmatpush1.bf16.msra.mxu0 0
        %4142 = vmatprep.subr.bf16.mxu0 0
        %4143 = vmatpush1.bf16.msra.mxu0 0
        %4144 = vmatprep.subr.bf16.mxu0 0
        %4145 = vmatpush1.bf16.msra.mxu0 0
        %4146 = vmatprep.subr.bf16.mxu0 0
        %4147 = vmatpush1.bf16.msra.mxu0 0
        %4148 = vmatprep.subr.bf16.mxu0 0
        %4149 = vmatpush1.bf16.msra.mxu0 0
        %4150 = vmatprep.subr.bf16.mxu0 0
        %4151 = vmatpush1.bf16.msra.mxu0 0
        %4152 = vmatprep.subr.bf16.mxu0 0
        %4153 = vmatpush1.bf16.msra.mxu0 0
        %4154 = vmatprep.mubr.bf16.mxu0 %v4120
        %4155 = vmatmul.mubr.bf16.gmra.mrb[0].mxu0 %v4116
        %v4156 = vpop.f32.mrb[0].mxu0
        %v4157 = vadd.f32 %v4111, %v4156
        %v4158 = vpop.f32.mrb[0].mxu0
        %v4159 = vpop.f32.mrb[0].mxu0
        %v4160 = vpop.f32.mrb[0].mxu0
        %4161 = vdwg.mxu0
        %4162 = vst [vmem:[%s276] sm:$0xff] %v4157
        %s4163 = sand.u32 %s138, 1
        %s4164 = scalar_lea.sflag [#allocation5], %s4163
        %s4165 = sand.u32 %s138, 1
        %s4166 = smul.addr %s4165, 8
        %s4167 = scalar_lea.vmem [#allocation4], %s4166
        // Predicated region
        $region75: #{tpu_custom_call.1} parent=69 // pred_check
          %p4168 = pneg %p148
        $region76: #{tpu_custom_call.1} parent=69 // pred_check_branch
          %4170 = sbr.rel (%p4168) target = $region78
        $region77: #{tpu_custom_call.1} parent=69 // pred_region
          %s4172 = ssub.s32 128, 128
          %4173 = vsyncadd %s4164, %s4172
          %s4174 = smul.addr %s22, 2
          %s4175 = sadd.s32 %s23, %s4174
          %s4176 = smul.addr %s4175, 128
          %s4177 = scalar_lea.hbm %s4, %s4176
          %s4179 = sshll.u32 %s4167, 4
          %s4180 = int_to_ptr.vmem [resolvable:$true] %s4179
          %4182 = dma.vmem_to_hbm [thread:$0]  %s4180, 128, %s4177, %s4164
        $region78: #{tpu_custom_call.1} parent=69 // pred_fallthru
          _
      $region70: #{tpu_custom_call.1} parent=5 // pred_fallthru
        _
      %p4183 = scmp.le.s32.totalorder 2, %s13
      // Predicated region
      $region79: #{tpu_custom_call.1} parent=5 // pred_check
        %p4184 = pneg %p4183
      $region80: #{tpu_custom_call.1} parent=5 // pred_check_branch
        %4186 = sbr.rel (%p4184) target = $region82
      $region81: #{tpu_custom_call.1} parent=5 // pred_region
        %s4187 = ssub.s32 %s13, 2
        // Predicated region
        $region83: #{tpu_custom_call.1} parent=81 // pred_check
          %p4188 = pneg %p154
        $region84: #{tpu_custom_call.1} parent=81 // pred_check_branch
          %4190 = sbr.rel (%p4188) target = $region86
        $region85: #{tpu_custom_call.1} parent=81 // pred_region
          %s4191 = sand.u32 %s139, 1
          %s4192 = scalar_lea.sflag [#allocation5], %s4191
          %s4193 = sand.u32 %s139, 1
          %s4194 = smul.addr %s4193, 8
          %s4195 = scalar_lea.vmem [#allocation4], %s4194
          %4196 = dma.done %s4192, 128
        $region86: #{tpu_custom_call.1} parent=81 // pred_fallthru
          _
      $region82: #{tpu_custom_call.1} parent=5 // pred_fallthru
        _
    $region6: #{tpu_custom_call.1} parent=1 // loop_footer
      %s17 = sadd.s32 1, %s13
    $region7: #{tpu_custom_call.1} parent=1 // loop_footer_branch
      %12 = sbr.rel target = $region3
    $region8: #{tpu_custom_call.1} parent=1 // loop_exit
      _
    %4197 = vsyncpa [#allocation5], 1
    %s4198 = scalar_lea.sflag [#allocation5], 1
    %4199 = vsyncpa %s4198, 1

</llo_original>
